<compile_context>
chip_gen: v7x
topology: tpu7x:2x2x1
jax: 0.10.0
libtpu: 0.0.40
codegen_flags: <defaults>
</compile_context>

<pallas_src>
import functools

import jax
import jax.numpy as jnp
import numpy as np
from jax import lax
from jax.experimental import pallas as pl
from jax.experimental.pallas import tpu as pltpu


# ---------------------------------------------------------------------------
# Mask precomputation (verbatim numpy port) -- used only by the plain-JAX
# reference check; the kernel builds the masks from iota on the fly.
# ---------------------------------------------------------------------------
def precompute_pos_neg_mask(orig_batch, num_pos=2, world_size=1, rank=0):
    total_images = world_size * orig_batch * num_pos
    batch_size = total_images // world_size
    orig_images = batch_size // num_pos

    pos_mask = np.zeros((batch_size, total_images), dtype=np.float32)
    neg_mask = np.zeros((batch_size, total_images), dtype=np.float32)

    all_indices = np.arange(total_images)
    pos_members = orig_images * np.arange(num_pos)
    orig_members = np.arange(orig_images)
    for anchor in np.arange(num_pos):
        for img_idx in range(orig_images):
            delete_inds = batch_size * rank + img_idx + pos_members
            neg_inds = np.delete(all_indices, delete_inds)
            neg_mask[anchor * orig_images + img_idx, neg_inds] = 1.0
        for p in np.delete(np.arange(num_pos), anchor):
            pos_inds = batch_size * rank + p * orig_images + orig_members
            rows = np.arange(anchor * orig_images, (anchor + 1) * orig_images)
            pos_mask[rows, pos_inds] = 1.0
    return pos_mask, neg_mask


# ---------------------------------------------------------------------------
# Pallas kernel: pre-normalized bf16 tiles -> similarity tiles -> masked
# negative accumulation (diagonal-gated mask) -> lane-dense per-row outputs.
# ---------------------------------------------------------------------------
def _simclr_kernel(zr_ref, zc_ref,                 # inputs  (tm, 2D), (tn, 2D) bf16
                   pos_ref, neg_ref, lt_ref,       # outputs (2, tm) f32 each
                   pos_s, spos_s, neg0_s, neg1_s,  # scratch (1, tm) f32 each
                   *, tau):
    tm = zr_ref.shape[0]
    tn = zc_ref.shape[0]
    D = zr_ref.shape[1] // 2
    i = pl.program_id(0)          # query row tile ("parallel")
    j = pl.program_id(1)          # key column tile ("arbitrary" reduction axis)
    inv_tau = 1.0 / tau
    dn = (((1,), (1,)), ((), ()))  # contract last dims of both operands (A @ B^T)

    # -------- init: positive logit per image pair + zero the accumulators
    @pl.when(j == 0)
    def _init():
        zr = zr_ref[...]                                     # (tm, 2D) bf16
        z0 = zr[:, :D].astype(jnp.float32)
        z1 = zr[:, D:].astype(jnp.float32)
        ones_row = jnp.ones((1, D), jnp.float32)
        # <z0_m, z1_m> per row, landed lane-major via a ones-row matmul
        s_pos = lax.dot_general(ones_row, z0 * z1, dn,
                                preferred_element_type=jnp.float32) * inv_tau
        spos_s[...] = s_pos                                  # (1, tm)
        pos_s[...] = jnp.exp(s_pos)
        neg0_s[...] = jnp.zeros_like(neg0_s)
        neg1_s[...] = jnp.zeros_like(neg1_s)

    # -------- stream a key/column tile: 4 bf16 sub-matmuls, exp, masked sums
    zr = zr_ref[...]                                         # (tm, 2D) bf16
    zc = zc_ref[...]                                         # (tn, 2D) bf16
    q0 = zr[:, :D]
    q1 = zr[:, D:]
    c0 = zc[:, :D]
    c1 = zc[:, D:]

    e00 = jnp.exp(lax.dot_general(c0, q0, dn,
                                  preferred_element_type=jnp.float32) * inv_tau)
    e01 = jnp.exp(lax.dot_general(c1, q0, dn,
                                  preferred_element_type=jnp.float32) * inv_tau)
    e10 = jnp.exp(lax.dot_general(c0, q1, dn,
                                  preferred_element_type=jnp.float32) * inv_tau)
    e11 = jnp.exp(lax.dot_general(c1, q1, dn,
                                  preferred_element_type=jnp.float32) * inv_tau)
    s0 = e00 + e01                                           # (tn, tm) aug0-query rows
    s1 = e10 + e11                                           # (tn, tm) aug1-query rows

    # Off-diagonal tiles: no key image coincides with any query image -> no mask.
    @pl.when(i != j)
    def _off_diag():
        neg0_s[...] += jnp.sum(s0, axis=0, keepdims=True)
        neg1_s[...] += jnp.sum(s1, axis=0, keepdims=True)

    # Diagonal tile (tm == tn): drop keys whose image index equals the query's
    # (removes the self column and the positive column for every row).
    @pl.when(i == j)
    def _diag():
        keep = (lax.broadcasted_iota(jnp.int32, (tn, tm), 0) !=
                lax.broadcasted_iota(jnp.int32, (tn, tm), 1))
        neg0_s[...] += jnp.sum(jnp.where(keep, s0, 0.0), axis=0, keepdims=True)
        neg1_s[...] += jnp.sum(jnp.where(keep, s1, 0.0), axis=0, keepdims=True)

    # -------- finalize: per-row pos / neg / log-ratio, lane-dense (2, tm) stores
    @pl.when(j == pl.num_programs(1) - 1)
    def _finalize():
        pos = pos_s[...]                                     # (1, tm)
        spos = spos_s[...]                                   # (1, tm), already /tau
        n0 = neg0_s[...]
        n1 = neg1_s[...]
        lt0 = spos - jnp.log(pos + n0)                       # log(pos/(pos+neg)), aug0
        lt1 = spos - jnp.log(pos + n1)                       # aug1
        pos_ref[...] = jnp.concatenate([pos, pos], axis=0)
        neg_ref[...] = jnp.concatenate([n0, n1], axis=0)
        lt_ref[...] = jnp.concatenate([lt0, lt1], axis=0)


def _pick_tile(B, preferred=256, keep_two_row_tiles=True):
    """Largest tile <= preferred dividing B; prefer >= 2 row tiles (v7x megacore)."""
    cands = [t for t in (512, 256, 128) if t <= preferred]
    if keep_two_row_tiles:
        for t in cands:
            if B % t == 0 and B // t >= 2:
                return t
    for t in cands:
        if B % t == 0:
            return t
    return B   # full extent fallback (small B)


def simclr_loss(z, tau, *, tile=None, mxu_dtype=jnp.bfloat16):
    """z: (B, 2, D) float32  ->  (loss, loss_dict, pos_rows, neg_rows)."""
    B, n_aug, D = z.shape
    assert n_aug == 2
    assert D % 128 == 0, "emb_dim must be lane-aligned for the aug0/aug1 lane split"
    # TODO(synk): the distributed=True all-gather path (torch.distributed) is not
    # ported; this is the single-device (world_size=1, rank=0) forward.

    if tile is None:
        tile = _pick_tile(B)
    tm = tn = int(tile)           # tm == tn required by the diagonal-gated mask
    assert B % tm == 0, "batch must be divisible by the tile size"
    assert tm % 128 == 0 or tm == B, "tile must be a multiple of 128 (or the full batch)"

    # Pre-normalize once (plain XLA, one HBM pass); stream bf16 MXU operands.
    eps2 = 1e-24                  # (1e-12)^2, matches F.normalize(eps=1e-12)
    zf = z.astype(jnp.float32)
    zn = zf * lax.rsqrt(jnp.maximum(jnp.sum(zf * zf, axis=-1, keepdims=True), eps2))
    z2d = zn.reshape(B, 2 * D).astype(mxu_dtype)   # free reshape, no concat copy

    grid = (B // tm, B // tn)
    itemsize = jnp.dtype(mxu_dtype).itemsize

    kernel = functools.partial(_simclr_kernel, tau=float(tau))

    # VMEM budget: 2 inputs x double buffer x (tile, 2D) + tiny scratch/outputs.
    stream_bytes = 2 * 2 * tm * (2 * D) * itemsize
    vmem_limit = int(min(64 * 1024 * 1024,
                         max(32 * 1024 * 1024, 3 * stream_bytes)))

    cost = pl.CostEstimate(
        flops=int(2 * (2 * B) * (2 * B) * D + 2 * B * D),
        transcendentals=int((2 * B) * (2 * B) + 4 * B),
        bytes_accessed=int((grid[0] + 1) * B * 2 * D * itemsize + 3 * 2 * B * 4),
    )

    row_out_spec = pl.BlockSpec((2, tm), lambda i, j: (0, i))
    pos, neg, lt = pl.pallas_call(
        kernel,
        out_shape=(
            jax.ShapeDtypeStruct((2, B), jnp.float32),     # pos per row
            jax.ShapeDtypeStruct((2, B), jnp.float32),     # neg per row
            jax.ShapeDtypeStruct((2, B), jnp.float32),     # log(pos/(pos+neg)) per row
        ),
        grid_spec=pltpu.PrefetchScalarGridSpec(
            num_scalar_prefetch=0,
            grid=grid,
            in_specs=[
                pl.BlockSpec((tm, 2 * D), lambda i, j: (i, 0)),   # query rows (resident)
                pl.BlockSpec((tn, 2 * D), lambda i, j: (j, 0)),   # key columns (streamed)
            ],
            out_specs=(row_out_spec, row_out_spec, row_out_spec),
            scratch_shapes=[
                pltpu.VMEM((1, tm), jnp.float32),    # pos = exp(s_pos/tau)
                pltpu.VMEM((1, tm), jnp.float32),    # s_pos/tau
                pltpu.VMEM((1, tm), jnp.float32),    # neg accumulator, aug0 rows
                pltpu.VMEM((1, tm), jnp.float32),    # neg accumulator, aug1 rows
            ],
        ),
        compiler_params=pltpu.CompilerParams(
            dimension_semantics=("parallel", "arbitrary"),
            vmem_limit_bytes=vmem_limit,
        ),
        cost_estimate=cost,
    )(z2d, z2d)

    # (2, B) -> (2B,) matches the reference row ordering [aug0 rows ; aug1 rows]
    pos_rows = pos.reshape(-1)
    neg_rows = neg.reshape(-1)
    loss = -jnp.mean(lt)
    loss_dict = {
        "loss": loss,
        "pos": jnp.mean(jnp.abs(pos_rows)),
        "neg": jnp.mean(jnp.abs(neg_rows)),
    }
    return loss, loss_dict, pos_rows, neg_rows


# ---------------------------------------------------------------------------
# Pure-JAX reference (mirrors the PyTorch math with dense masks, f32)
# ---------------------------------------------------------------------------
def _reference(z, tau, pos_mask, neg_mask):
    z1, z2 = z[:, 0, :], z[:, 1, :]
    e = jnp.concatenate([z1, z2], axis=0)
    e = e / jnp.maximum(jnp.linalg.norm(e, axis=-1, keepdims=True), 1e-12)
    sim = jnp.exp((e @ e.T) / tau)
    pos = jnp.sum(sim * pos_mask, axis=1)
    neg = jnp.sum(sim * neg_mask, axis=1)
    loss = -jnp.mean(jnp.log(pos / (pos + neg)))
    return loss, pos, neg


if __name__ == "__main__":
    # emb_dim == batch on purpose (reference-module quirk, see header note).
    B, D = 512, 512
    TAU = 0.5

    key = jax.random.PRNGKey(0)
    z = jax.random.normal(key, (B, 2, D), dtype=jnp.float32)

    loss, loss_dict, pos_rows, neg_rows = simclr_loss(z, TAU)
    loss = jax.block_until_ready(loss)

    # Cross-check against the plain-JAX dense-mask reference.  bf16 MXU operands
    # -> loosened tolerances (~1e-2 relative) per the review.
    pos_mask_np, neg_mask_np = precompute_pos_neg_mask(B)
    ref_loss, ref_pos, ref_neg = _reference(
        z, TAU, jnp.asarray(pos_mask_np), jnp.asarray(neg_mask_np))

    np.testing.assert_allclose(np.asarray(loss), np.asarray(ref_loss),
                               rtol=1e-2, atol=1e-2)
    np.testing.assert_allclose(np.asarray(pos_rows), np.asarray(ref_pos),
                               rtol=2e-2, atol=1e-2)
    np.testing.assert_allclose(np.asarray(neg_rows), np.asarray(ref_neg),
                               rtol=2e-2, atol=1e-2)
    np.testing.assert_allclose(np.asarray(loss_dict["pos"]),
                               np.asarray(jnp.mean(jnp.abs(ref_pos))),
                               rtol=2e-2, atol=1e-2)
    np.testing.assert_allclose(np.asarray(loss_dict["neg"]),
                               np.asarray(jnp.mean(jnp.abs(ref_neg))),
                               rtol=2e-2, atol=1e-2)

    print("KERNEL_OK")
</pallas_src>

<mosaic_0001>
module attributes {stable_mosaic.version = 11 : i64} {
  func.func @_simclr_kernel(%arg0: i32, %arg1: i32, %arg2: memref<256x1024xbf16, #tpu.memory_space<vmem>>, %arg3: memref<256x1024xbf16, #tpu.memory_space<vmem>>, %arg4: memref<2x256xf32, #tpu.memory_space<vmem>>, %arg5: memref<2x256xf32, #tpu.memory_space<vmem>>, %arg6: memref<2x256xf32, #tpu.memory_space<vmem>>, %arg7: memref<1x256xf32, #tpu.memory_space<vmem>>, %arg8: memref<1x256xf32, #tpu.memory_space<vmem>>, %arg9: memref<1x256xf32, #tpu.memory_space<vmem>>, %arg10: memref<1x256xf32, #tpu.memory_space<vmem>>) attributes {dimension_semantics = [#tpu.dimension_semantics<parallel>, #tpu.dimension_semantics<arbitrary>], iteration_bounds = array<i64: 2, 2>, scalar_prefetch = 0 : i64, scratch_operands = 4 : i64, tpu.core_type = #tpu.core_type<tc>, window_params = [{transform_indices = @transform_0, window_bounds = array<i64: 256, 1024>}, {transform_indices = @transform_1, window_bounds = array<i64: 256, 1024>}, {transform_indices = @transform_2, window_bounds = array<i64: 2, 256>}, {transform_indices = @transform_3, window_bounds = array<i64: 2, 256>}, {transform_indices = @transform_4, window_bounds = array<i64: 2, 256>}]} {
    %c0_i32 = arith.constant 0 : i32
    %0 = arith.cmpi eq, %arg1, %c0_i32 : i32
    %1 = arith.extui %0 : i1 to i32
    %c0_i32_0 = arith.constant 0 : i32
    %2 = arith.cmpi ne, %1, %c0_i32_0 : i32
    scf.if %2 {
      %c0_14 = arith.constant 0 : index
      %c0_15 = arith.constant 0 : index
      %36 = vector.load %arg2[%c0_14, %c0_15] : memref<256x1024xbf16, #tpu.memory_space<vmem>>, vector<256x1024xbf16>
      %37 = vector.extract_strided_slice %36 {offsets = [0, 0], sizes = [256, 512], strides = [1, 1]} : vector<256x1024xbf16> to vector<256x512xbf16>
      %38 = arith.extf %37 : vector<256x512xbf16> to vector<256x512xf32>
      %39 = vector.extract_strided_slice %36 {offsets = [0, 512], sizes = [256, 512], strides = [1, 1]} : vector<256x1024xbf16> to vector<256x512xbf16>
      %40 = arith.extf %39 : vector<256x512xbf16> to vector<256x512xf32>
      %cst_16 = arith.constant 1.000000e+00 : f32
      %41 = vector.broadcast %cst_16 : f32 to vector<1x512xf32>
      %42 = arith.mulf %38, %40 : vector<256x512xf32>
      %cst_17 = arith.constant dense<0.000000e+00> : vector<1x256xf32>
      %43 = tpu.matmul %41, %42, %cst_17 {dimension_numbers = #tpu.dot_dimension_numbers<[1], [1], [0], [0], [0, 0, 1, 0], [], []>} : vector<1x512xf32>, vector<256x512xf32>, vector<1x256xf32> -> vector<1x256xf32>
      %cst_18 = arith.constant 2.000000e+00 : f32
      %44 = vector.broadcast %cst_18 : f32 to vector<1x256xf32>
      %45 = arith.mulf %43, %44 : vector<1x256xf32>
      %c0_19 = arith.constant 0 : index
      %c0_20 = arith.constant 0 : index
      %46 = vector.load %arg8[%c0_19, %c0_20] : memref<1x256xf32, #tpu.memory_space<vmem>>, vector<1x256xf32>
      tpu.vector_store %arg8[%c0_19, %c0_20], %45 {strides = array<i32>} : memref<1x256xf32, #tpu.memory_space<vmem>>, vector<1x256xf32>,
      %47 = math.exp %45 : vector<1x256xf32>
      %c0_21 = arith.constant 0 : index
      %c0_22 = arith.constant 0 : index
      %48 = vector.load %arg7[%c0_21, %c0_22] : memref<1x256xf32, #tpu.memory_space<vmem>>, vector<1x256xf32>
      tpu.vector_store %arg7[%c0_21, %c0_22], %47 {strides = array<i32>} : memref<1x256xf32, #tpu.memory_space<vmem>>, vector<1x256xf32>,
      %cst_23 = arith.constant 0.000000e+00 : f32
      %49 = vector.broadcast %cst_23 : f32 to vector<1x256xf32>
      %c0_24 = arith.constant 0 : index
      %c0_25 = arith.constant 0 : index
      %50 = vector.load %arg9[%c0_24, %c0_25] : memref<1x256xf32, #tpu.memory_space<vmem>>, vector<1x256xf32>
      tpu.vector_store %arg9[%c0_24, %c0_25], %49 {strides = array<i32>} : memref<1x256xf32, #tpu.memory_space<vmem>>, vector<1x256xf32>,
      %cst_26 = arith.constant 0.000000e+00 : f32
      %51 = vector.broadcast %cst_26 : f32 to vector<1x256xf32>
      %c0_27 = arith.constant 0 : index
      %c0_28 = arith.constant 0 : index
      %52 = vector.load %arg10[%c0_27, %c0_28] : memref<1x256xf32, #tpu.memory_space<vmem>>, vector<1x256xf32>
      tpu.vector_store %arg10[%c0_27, %c0_28], %51 {strides = array<i32>} : memref<1x256xf32, #tpu.memory_space<vmem>>, vector<1x256xf32>,
    } else {
    }
    %c0 = arith.constant 0 : index
    %c0_1 = arith.constant 0 : index
    %3 = vector.load %arg2[%c0, %c0_1] : memref<256x1024xbf16, #tpu.memory_space<vmem>>, vector<256x1024xbf16>
    %c0_2 = arith.constant 0 : index
    %c0_3 = arith.constant 0 : index
    %4 = vector.load %arg3[%c0_2, %c0_3] : memref<256x1024xbf16, #tpu.memory_space<vmem>>, vector<256x1024xbf16>
    %5 = vector.extract_strided_slice %3 {offsets = [0, 0], sizes = [256, 512], strides = [1, 1]} : vector<256x1024xbf16> to vector<256x512xbf16>
    %6 = vector.extract_strided_slice %3 {offsets = [0, 512], sizes = [256, 512], strides = [1, 1]} : vector<256x1024xbf16> to vector<256x512xbf16>
    %7 = vector.extract_strided_slice %4 {offsets = [0, 0], sizes = [256, 512], strides = [1, 1]} : vector<256x1024xbf16> to vector<256x512xbf16>
    %8 = vector.extract_strided_slice %4 {offsets = [0, 512], sizes = [256, 512], strides = [1, 1]} : vector<256x1024xbf16> to vector<256x512xbf16>
    %cst = arith.constant dense<0.000000e+00> : vector<256x256xf32>
    %9 = tpu.matmul %7, %5, %cst {dimension_numbers = #tpu.dot_dimension_numbers<[1], [1], [0], [0], [0, 0, 1, 0], [], []>} : vector<256x512xbf16>, vector<256x512xbf16>, vector<256x256xf32> -> vector<256x256xf32>
    %cst_4 = arith.constant 2.000000e+00 : f32
    %10 = vector.broadcast %cst_4 : f32 to vector<256x256xf32>
    %11 = arith.mulf %9, %10 : vector<256x256xf32>
    %12 = math.exp %11 : vector<256x256xf32>
    %cst_5 = arith.constant dense<0.000000e+00> : vector<256x256xf32>
    %13 = tpu.matmul %8, %5, %cst_5 {dimension_numbers = #tpu.dot_dimension_numbers<[1], [1], [0], [0], [0, 0, 1, 0], [], []>} : vector<256x512xbf16>, vector<256x512xbf16>, vector<256x256xf32> -> vector<256x256xf32>
    %cst_6 = arith.constant 2.000000e+00 : f32
    %14 = vector.broadcast %cst_6 : f32 to vector<256x256xf32>
    %15 = arith.mulf %13, %14 : vector<256x256xf32>
    %16 = math.exp %15 : vector<256x256xf32>
    %cst_7 = arith.constant dense<0.000000e+00> : vector<256x256xf32>
    %17 = tpu.matmul %7, %6, %cst_7 {dimension_numbers = #tpu.dot_dimension_numbers<[1], [1], [0], [0], [0, 0, 1, 0], [], []>} : vector<256x512xbf16>, vector<256x512xbf16>, vector<256x256xf32> -> vector<256x256xf32>
    %cst_8 = arith.constant 2.000000e+00 : f32
    %18 = vector.broadcast %cst_8 : f32 to vector<256x256xf32>
    %19 = arith.mulf %17, %18 : vector<256x256xf32>
    %20 = math.exp %19 : vector<256x256xf32>
    %cst_9 = arith.constant dense<0.000000e+00> : vector<256x256xf32>
    %21 = tpu.matmul %8, %6, %cst_9 {dimension_numbers = #tpu.dot_dimension_numbers<[1], [1], [0], [0], [0, 0, 1, 0], [], []>} : vector<256x512xbf16>, vector<256x512xbf16>, vector<256x256xf32> -> vector<256x256xf32>
    %cst_10 = arith.constant 2.000000e+00 : f32
    %22 = vector.broadcast %cst_10 : f32 to vector<256x256xf32>
    %23 = arith.mulf %21, %22 : vector<256x256xf32>
    %24 = math.exp %23 : vector<256x256xf32>
    %25 = arith.addf %12, %16 : vector<256x256xf32>
    %26 = arith.addf %20, %24 : vector<256x256xf32>
    %27 = arith.cmpi ne, %arg0, %arg1 : i32
    %28 = arith.extui %27 : i1 to i32
    %c0_i32_11 = arith.constant 0 : i32
    %29 = arith.cmpi ne, %28, %c0_i32_11 : i32
    scf.if %29 {
      %c0_14 = arith.constant 0 : index
      %c0_15 = arith.constant 0 : index
      %36 = vector.load %arg9[%c0_14, %c0_15] : memref<1x256xf32, #tpu.memory_space<vmem>>, vector<1x256xf32>
      %cst_16 = arith.constant dense<0.000000e+00> : vector<256xf32>
      %37 = vector.multi_reduction <add>, %25, %cst_16 [0] : vector<256x256xf32> to vector<256xf32>
      %38 = vector.shape_cast %37 : vector<256xf32> to vector<1x256xf32>
      %39 = arith.addf %36, %38 : vector<1x256xf32>
      %c0_17 = arith.constant 0 : index
      %c0_18 = arith.constant 0 : index
      %40 = vector.load %arg9[%c0_17, %c0_18] : memref<1x256xf32, #tpu.memory_space<vmem>>, vector<1x256xf32>
      tpu.vector_store %arg9[%c0_17, %c0_18], %39 {strides = array<i32>} : memref<1x256xf32, #tpu.memory_space<vmem>>, vector<1x256xf32>,
      %c0_19 = arith.constant 0 : index
      %c0_20 = arith.constant 0 : index
      %41 = vector.load %arg10[%c0_19, %c0_20] : memref<1x256xf32, #tpu.memory_space<vmem>>, vector<1x256xf32>
      %cst_21 = arith.constant dense<0.000000e+00> : vector<256xf32>
      %42 = vector.multi_reduction <add>, %26, %cst_21 [0] : vector<256x256xf32> to vector<256xf32>
      %43 = vector.shape_cast %42 : vector<256xf32> to vector<1x256xf32>
      %44 = arith.addf %41, %43 : vector<1x256xf32>
      %c0_22 = arith.constant 0 : index
      %c0_23 = arith.constant 0 : index
      %45 = vector.load %arg10[%c0_22, %c0_23] : memref<1x256xf32, #tpu.memory_space<vmem>>, vector<1x256xf32>
      tpu.vector_store %arg10[%c0_22, %c0_23], %44 {strides = array<i32>} : memref<1x256xf32, #tpu.memory_space<vmem>>, vector<1x256xf32>,
    } else {
    }
    %30 = arith.cmpi eq, %arg0, %arg1 : i32
    %31 = arith.extui %30 : i1 to i32
    %c0_i32_12 = arith.constant 0 : i32
    %32 = arith.cmpi ne, %31, %c0_i32_12 : i32
    scf.if %32 {
      %36 = tpu.iota {dimensions = array<i32: 0>} : vector<256x256xi32>
      %37 = tpu.iota {dimensions = array<i32: 1>} : vector<256x256xi32>
      %38 = arith.cmpi ne, %36, %37 : vector<256x256xi32>
      %c0_14 = arith.constant 0 : index
      %c0_15 = arith.constant 0 : index
      %39 = vector.load %arg9[%c0_14, %c0_15] : memref<1x256xf32, #tpu.memory_space<vmem>>, vector<1x256xf32>
      %cst_16 = arith.constant 0.000000e+00 : f32
      %40 = vector.broadcast %cst_16 : f32 to vector<256x256xf32>
      %41 = arith.select %38, %25, %40 : vector<256x256xi1>, vector<256x256xf32>
      %cst_17 = arith.constant dense<0.000000e+00> : vector<256xf32>
      %42 = vector.multi_reduction <add>, %41, %cst_17 [0] : vector<256x256xf32> to vector<256xf32>
      %43 = vector.shape_cast %42 : vector<256xf32> to vector<1x256xf32>
      %44 = arith.addf %39, %43 : vector<1x256xf32>
      %c0_18 = arith.constant 0 : index
      %c0_19 = arith.constant 0 : index
      %45 = vector.load %arg9[%c0_18, %c0_19] : memref<1x256xf32, #tpu.memory_space<vmem>>, vector<1x256xf32>
      tpu.vector_store %arg9[%c0_18, %c0_19], %44 {strides = array<i32>} : memref<1x256xf32, #tpu.memory_space<vmem>>, vector<1x256xf32>,
      %c0_20 = arith.constant 0 : index
      %c0_21 = arith.constant 0 : index
      %46 = vector.load %arg10[%c0_20, %c0_21] : memref<1x256xf32, #tpu.memory_space<vmem>>, vector<1x256xf32>
      %cst_22 = arith.constant 0.000000e+00 : f32
      %47 = vector.broadcast %cst_22 : f32 to vector<256x256xf32>
      %48 = arith.select %38, %26, %47 : vector<256x256xi1>, vector<256x256xf32>
      %cst_23 = arith.constant dense<0.000000e+00> : vector<256xf32>
      %49 = vector.multi_reduction <add>, %48, %cst_23 [0] : vector<256x256xf32> to vector<256xf32>
      %50 = vector.shape_cast %49 : vector<256xf32> to vector<1x256xf32>
      %51 = arith.addf %46, %50 : vector<1x256xf32>
      %c0_24 = arith.constant 0 : index
      %c0_25 = arith.constant 0 : index
      %52 = vector.load %arg10[%c0_24, %c0_25] : memref<1x256xf32, #tpu.memory_space<vmem>>, vector<1x256xf32>
      tpu.vector_store %arg10[%c0_24, %c0_25], %51 {strides = array<i32>} : memref<1x256xf32, #tpu.memory_space<vmem>>, vector<1x256xf32>,
    } else {
    }
    %c1_i32 = arith.constant 1 : i32
    %33 = arith.cmpi eq, %arg1, %c1_i32 : i32
    %34 = arith.extui %33 : i1 to i32
    %c0_i32_13 = arith.constant 0 : i32
    %35 = arith.cmpi ne, %34, %c0_i32_13 : i32
    scf.if %35 {
      %c0_14 = arith.constant 0 : index
      %c0_15 = arith.constant 0 : index
      %36 = vector.load %arg7[%c0_14, %c0_15] : memref<1x256xf32, #tpu.memory_space<vmem>>, vector<1x256xf32>
      %c0_16 = arith.constant 0 : index
      %c0_17 = arith.constant 0 : index
      %37 = vector.load %arg8[%c0_16, %c0_17] : memref<1x256xf32, #tpu.memory_space<vmem>>, vector<1x256xf32>
      %c0_18 = arith.constant 0 : index
      %c0_19 = arith.constant 0 : index
      %38 = vector.load %arg9[%c0_18, %c0_19] : memref<1x256xf32, #tpu.memory_space<vmem>>, vector<1x256xf32>
      %c0_20 = arith.constant 0 : index
      %c0_21 = arith.constant 0 : index
      %39 = vector.load %arg10[%c0_20, %c0_21] : memref<1x256xf32, #tpu.memory_space<vmem>>, vector<1x256xf32>
      %40 = arith.addf %36, %38 : vector<1x256xf32>
      %41 = math.log %40 : vector<1x256xf32>
      %42 = arith.subf %37, %41 : vector<1x256xf32>
      %43 = arith.addf %36, %39 : vector<1x256xf32>
      %44 = math.log %43 : vector<1x256xf32>
      %45 = arith.subf %37, %44 : vector<1x256xf32>
      %46 = tpu.concatenate %36, %36 in 0 : vector<1x256xf32>, vector<1x256xf32> -> vector<2x256xf32>
      %c0_22 = arith.constant 0 : index
      %c0_23 = arith.constant 0 : index
      %47 = vector.load %arg4[%c0_22, %c0_23] : memref<2x256xf32, #tpu.memory_space<vmem>>, vector<2x256xf32>
      tpu.vector_store %arg4[%c0_22, %c0_23], %46 {strides = array<i32>} : memref<2x256xf32, #tpu.memory_space<vmem>>, vector<2x256xf32>,
      %48 = tpu.concatenate %38, %39 in 0 : vector<1x256xf32>, vector<1x256xf32> -> vector<2x256xf32>
      %c0_24 = arith.constant 0 : index
      %c0_25 = arith.constant 0 : index
      %49 = vector.load %arg5[%c0_24, %c0_25] : memref<2x256xf32, #tpu.memory_space<vmem>>, vector<2x256xf32>
      tpu.vector_store %arg5[%c0_24, %c0_25], %48 {strides = array<i32>} : memref<2x256xf32, #tpu.memory_space<vmem>>, vector<2x256xf32>,
      %50 = tpu.concatenate %42, %45 in 0 : vector<1x256xf32>, vector<1x256xf32> -> vector<2x256xf32>
      %c0_26 = arith.constant 0 : index
      %c0_27 = arith.constant 0 : index
      %51 = vector.load %arg6[%c0_26, %c0_27] : memref<2x256xf32, #tpu.memory_space<vmem>>, vector<2x256xf32>
      tpu.vector_store %arg6[%c0_26, %c0_27], %50 {strides = array<i32>} : memref<2x256xf32, #tpu.memory_space<vmem>>, vector<2x256xf32>,
    } else {
    }
    return
  }
  func.func @transform_0(%arg0: i32, %arg1: i32) -> (i32, i32) {
    %c0_i32 = arith.constant 0 : i32
    %c0_i32_0 = arith.constant 0 : i32
    return %arg0, %c0_i32 : i32, i32
  }
  func.func @transform_1(%arg0: i32, %arg1: i32) -> (i32, i32) {
    %c0_i32 = arith.constant 0 : i32
    %c0_i32_0 = arith.constant 0 : i32
    return %arg1, %c0_i32 : i32, i32
  }
  func.func @transform_2(%arg0: i32, %arg1: i32) -> (i32, i32) {
    %c0_i32 = arith.constant 0 : i32
    %c0_i32_0 = arith.constant 0 : i32
    return %c0_i32, %arg0 : i32, i32
  }
  func.func @transform_3(%arg0: i32, %arg1: i32) -> (i32, i32) {
    %c0_i32 = arith.constant 0 : i32
    %c0_i32_0 = arith.constant 0 : i32
    return %c0_i32, %arg0 : i32, i32
  }
  func.func @transform_4(%arg0: i32, %arg1: i32) -> (i32, i32) {
    %c0_i32 = arith.constant 0 : i32
    %c0_i32_0 = arith.constant 0 : i32
    return %c0_i32, %arg0 : i32, i32
  }
}

</mosaic_0001>

<llo_original>
// kernel: tpu_custom_call.1
$region0: #{tpu_custom_call.1}
  #allocation0 [shape = 'u32[]', space=smem, size = 0x4, offset = 0x4, fixed_abs, tag = 'smem constant byte address 0x4 - core index']
  #allocation1 [shape = 'u32[144,128]{1,0:T(1,128)}', space=vmem, size = 0x12000, scoped, tag = 'internal scratch']
  #allocation2 [shape = 'f32[1,256]{1,0:T(1,128)}', space=vmem, size = 0x400, scoped, tag = 'scratch operand']
  #allocation3 [shape = 'f32[1,256]{1,0:T(1,128)}', space=vmem, size = 0x400, scoped, tag = 'scratch operand']
  #allocation4 [shape = 'f32[1,256]{1,0:T(1,128)}', space=vmem, size = 0x400, scoped, tag = 'scratch operand']
  #allocation5 [shape = 'f32[1,256]{1,0:T(1,128)}', space=vmem, size = 0x400, scoped, tag = 'scratch operand']
  %s0 = inlined_call_operand.hbm [shape: bf16[512,1024], index: 0, kind: input, shape index: {}]
  %s1 = inlined_call_operand.hbm [shape: bf16[512,1024], index: 1, kind: input, shape index: {}]
  %s2 = inlined_call_operand.hbm [shape: f32[2,512], index: 2, kind: output, shape index: {0}]
  %s3 = inlined_call_operand.hbm [shape: f32[2,512], index: 3, kind: output, shape index: {1}]
  %s4 = inlined_call_operand.hbm [shape: f32[2,512], index: 4, kind: output, shape index: {2}]
  %5 = xla_tuple %s2, %s3, %s4
  %s6 = sld [smem:[#allocation0]]
  $region81: #{tpu_custom_call.1} parent=0
    _
  %s8 = ssub.s32 1, %s6
  %s9 = scalar_select 0, %s8, %s6
  $region1: #{tpu_custom_call.1} parent=0
    #allocation6 [shape = 'u8[1048576]{0}', space=vmem, size = 0x100000, scoped, tag = 'input window, operand 0']
    #allocation7 [shape = 's32[2]{0}', space=sflag, size = 0x8, scoped, tag = 'scoped memory for tpu_custom_call.1']
    #allocation8 [shape = 's32[2]{0}', space=sflag, size = 0x8, scoped, tag = 'scoped memory for tpu_custom_call.1']
    #allocation9 [shape = 'u8[1048576]{0}', space=vmem, size = 0x100000, scoped, tag = 'input window, operand 1']
    #allocation10 [shape = 's32[2]{0}', space=sflag, size = 0x8, scoped, tag = 'scoped memory for tpu_custom_call.1']
    #allocation11 [shape = 'u8[4096]{0}', space=vmem, size = 0x1000, scoped, tag = 'output window, operand 0']
    #allocation12 [shape = 'u8[4096]{0}', space=vmem, size = 0x1000, scoped, tag = 'output window, operand 1']
    #allocation13 [shape = 's32[2]{0}', space=sflag, size = 0x8, scoped, tag = 'scoped memory for tpu_custom_call.1']
    #allocation14 [shape = 'u8[4096]{0}', space=vmem, size = 0x1000, scoped, tag = 'output window, operand 2']
    %10 = vsyncpa [#allocation7], 0
    %s11 = scalar_lea.sflag [#allocation7], 1
    %12 = vsyncpa %s11, 0
    %13 = vsyncpa [#allocation10], 0
    %s14 = scalar_lea.sflag [#allocation10], 1
    %15 = vsyncpa %s14, 0
    %16 = vsyncpa [#allocation8], 0
    %s17 = scalar_lea.sflag [#allocation8], 1
    %18 = vsyncpa %s17, 0
    %19 = vsyncpa [#allocation13], 0
    %s20 = scalar_lea.sflag [#allocation13], 1
    %21 = vsyncpa %s20, 0
    loop: start=0, step=1, limit=6
    $region2: #{tpu_custom_call.1} parent=1 // loop_pre_header
      _
    $region3: #{tpu_custom_call.1} parent=1 // loop_header
      %s23 = sphi 0, %s27
      %p24 = scmp.ge.s32.totalorder %s23, 6
      %s30 = sphi 0, %s42
      %s31 = sphi 0, %s38
      %s32 = sphi 0, %s30
      %s33 = sphi 0, %s31
      %s34 = sphi 0, %s32
      %s35 = sphi 0, %s33
      %s45 = sphi 0, %s47
      %s48 = sphi 0, %s45
      %s49 = sphi 0, %s48
      %s65 = sphi 0, %s49
      %s71 = sphi 0, %s73
      %s74 = sphi 0, %s71
      %s75 = sphi 0, %s74
      %s91 = sphi 0, %s75
      %s97 = sphi 0, %s99
      %s100 = sphi 0, %s97
      %s101 = sphi 0, %s100
      %s117 = sphi 0, %s101
      %s123 = sphi 0, %s125
      %s126 = sphi 0, %s123
      %s127 = sphi 0, %s126
      %s143 = sphi 0, %s127
      %s149 = sphi 0, %s151
      %s152 = sphi 0, %s149
      %s153 = sphi 0, %s152
      %s169 = sphi 0, %s153
    $region4: #{tpu_custom_call.1} parent=1 // loop_header_branch
      %26 = sbr.rel (%p24) target = $region8
    $region5: #{tpu_custom_call.1} parent=1 // loop_body
      %s28 = ssub.s32 %s23, 1
      %s29 = ssub.s32 %s23, 2
      %s36 = sadd.s32 1, %s31
      %p37 = scmp.ge.s32.totalorder %s36, 2
      %s38 = scalar_select %p37, 0, %s36
      %s39 = sadd.s32 1, %s30
      %s40 = scalar_select %p37, %s39, %s30
      %p41 = scmp.ge.s32.totalorder %s40, 2
      %s42 = scalar_select %p41, 0, %s40
      %s43 = ssub.s32 %s30, %s42
      %p44 = scmp.eq.s32.totalorder %s43, 0
      %s46 = sadd.s32 %s45, 1
      %s47 = scalar_select %p44, %s45, %s46
      %p50 = pneg %p44
      %p51 = scmp.eq.s32.totalorder %s23, 3
      %p52 = por %p50, %p51
      %p53 = scmp.ne.s32.totalorder %s45, %s48
      %p54 = scmp.eq.s32.totalorder %s23, 0
      %p55 = por %p53, %p54
      %p56 = scmp.ne.s32.totalorder %s45, %s48
      %p57 = scmp.eq.s32.totalorder %s28, 3
      %p58 = por %p56, %p57
      %p59 = scmp.ne.s32.totalorder %s48, %s49
      %p60 = scmp.eq.s32.totalorder %s28, 0
      %p61 = por %p59, %p60
      %p62 = scmp.ne.s32.totalorder %s48, %s49
      %p63 = scmp.eq.s32.totalorder %s29, 3
      %p64 = por %p62, %p63
      %p66 = scmp.ne.s32.totalorder %s49, %s65
      %p67 = scmp.eq.s32.totalorder %s29, 0
      %p68 = por %p66, %p67
      %s69 = ssub.s32 %s31, %s38
      %p70 = scmp.eq.s32.totalorder %s69, 0
      %s72 = sadd.s32 %s71, 1
      %s73 = scalar_select %p70, %s71, %s72
      %p76 = pneg %p70
      %p77 = scmp.eq.s32.totalorder %s23, 3
      %p78 = por %p76, %p77
      %p79 = scmp.ne.s32.totalorder %s71, %s74
      %p80 = scmp.eq.s32.totalorder %s23, 0
      %p81 = por %p79, %p80
      %p82 = scmp.ne.s32.totalorder %s71, %s74
      %p83 = scmp.eq.s32.totalorder %s28, 3
      %p84 = por %p82, %p83
      %p85 = scmp.ne.s32.totalorder %s74, %s75
      %p86 = scmp.eq.s32.totalorder %s28, 0
      %p87 = por %p85, %p86
      %p88 = scmp.ne.s32.totalorder %s74, %s75
      %p89 = scmp.eq.s32.totalorder %s29, 3
      %p90 = por %p88, %p89
      %p92 = scmp.ne.s32.totalorder %s75, %s91
      %p93 = scmp.eq.s32.totalorder %s29, 0
      %p94 = por %p92, %p93
      %s95 = ssub.s32 %s30, %s42
      %p96 = scmp.eq.s32.totalorder %s95, 0
      %s98 = sadd.s32 %s97, 1
      %s99 = scalar_select %p96, %s97, %s98
      %p102 = pneg %p96
      %p103 = scmp.eq.s32.totalorder %s23, 3
      %p104 = por %p102, %p103
      %p105 = scmp.ne.s32.totalorder %s97, %s100
      %p106 = scmp.eq.s32.totalorder %s23, 0
      %p107 = por %p105, %p106
      %p108 = scmp.ne.s32.totalorder %s97, %s100
      %p109 = scmp.eq.s32.totalorder %s28, 3
      %p110 = por %p108, %p109
      %p111 = scmp.ne.s32.totalorder %s100, %s101
      %p112 = scmp.eq.s32.totalorder %s28, 0
      %p113 = por %p111, %p112
      %p114 = scmp.ne.s32.totalorder %s100, %s101
      %p115 = scmp.eq.s32.totalorder %s29, 3
      %p116 = por %p114, %p115
      %p118 = scmp.ne.s32.totalorder %s101, %s117
      %p119 = scmp.eq.s32.totalorder %s29, 0
      %p120 = por %p118, %p119
      %s121 = ssub.s32 %s30, %s42
      %p122 = scmp.eq.s32.totalorder %s121, 0
      %s124 = sadd.s32 %s123, 1
      %s125 = scalar_select %p122, %s123, %s124
      %p128 = pneg %p122
      %p129 = scmp.eq.s32.totalorder %s23, 3
      %p130 = por %p128, %p129
      %p131 = scmp.ne.s32.totalorder %s123, %s126
      %p132 = scmp.eq.s32.totalorder %s23, 0
      %p133 = por %p131, %p132
      %p134 = scmp.ne.s32.totalorder %s123, %s126
      %p135 = scmp.eq.s32.totalorder %s28, 3
      %p136 = por %p134, %p135
      %p137 = scmp.ne.s32.totalorder %s126, %s127
      %p138 = scmp.eq.s32.totalorder %s28, 0
      %p139 = por %p137, %p138
      %p140 = scmp.ne.s32.totalorder %s126, %s127
      %p141 = scmp.eq.s32.totalorder %s29, 3
      %p142 = por %p140, %p141
      %p144 = scmp.ne.s32.totalorder %s127, %s143
      %p145 = scmp.eq.s32.totalorder %s29, 0
      %p146 = por %p144, %p145
      %s147 = ssub.s32 %s30, %s42
      %p148 = scmp.eq.s32.totalorder %s147, 0
      %s150 = sadd.s32 %s149, 1
      %s151 = scalar_select %p148, %s149, %s150
      %p154 = pneg %p148
      %p155 = scmp.eq.s32.totalorder %s23, 3
      %p156 = por %p154, %p155
      %p157 = scmp.ne.s32.totalorder %s149, %s152
      %p158 = scmp.eq.s32.totalorder %s23, 0
      %p159 = por %p157, %p158
      %p160 = scmp.ne.s32.totalorder %s149, %s152
      %p161 = scmp.eq.s32.totalorder %s28, 3
      %p162 = por %p160, %p161
      %p163 = scmp.ne.s32.totalorder %s152, %s153
      %p164 = scmp.eq.s32.totalorder %s28, 0
      %p165 = por %p163, %p164
      %p166 = scmp.ne.s32.totalorder %s152, %s153
      %p167 = scmp.eq.s32.totalorder %s29, 3
      %p168 = por %p166, %p167
      %p170 = scmp.ne.s32.totalorder %s153, %s169
      %p171 = scmp.eq.s32.totalorder %s29, 0
      %p172 = por %p170, %p171
      %p173 = scmp.le.s32.totalorder 1, %s23
      %p174 = scmp.lt.s32.totalorder %s23, 5
      %p175 = pnand %p173, %p174
      %p176 = pneg %p175
      // Predicated region
      $region9: #{tpu_custom_call.1} parent=5 // pred_check
        _
      $region10: #{tpu_custom_call.1} parent=5 // pred_check_branch
        %178 = sbr.rel (%p175) target = $region12
      $region11: #{tpu_custom_call.1} parent=5 // pred_region
        %s179 = ssub.s32 %s23, 1
      $region12: #{tpu_custom_call.1} parent=5 // pred_fallthru
        _
      %p180 = scmp.lt.s32.totalorder %s23, 4
      // Predicated region
      $region13: #{tpu_custom_call.1} parent=5 // pred_check
        %p181 = pneg %p180
      $region14: #{tpu_custom_call.1} parent=5 // pred_check_branch
        %183 = sbr.rel (%p181) target = $region16
      $region15: #{tpu_custom_call.1} parent=5 // pred_region
        // Predicated region
        $region17: #{tpu_custom_call.1} parent=15 // pred_check
          %p184 = pneg %p55
        $region18: #{tpu_custom_call.1} parent=15 // pred_check_branch
          %186 = sbr.rel (%p184) target = $region20
        $region19: #{tpu_custom_call.1} parent=15 // pred_region
          %s187 = sand.u32 %s45, 1
          %s188 = scalar_lea.sflag [#allocation7], %s187
          %s189 = sand.u32 %s45, 1
          %s190 = smul.addr %s189, 1024
          %s191 = scalar_lea.vmem [#allocation6], %s190
          %s192 = smul.u32 32, %s30
          %s194 = ssub.s32 16384, 16384
          %195 = vsyncadd %s188, %s194
          %s196 = smul.addr %s192, 8
          %s197 = smul.addr %s196, 64
          %s198 = scalar_lea.hbm %s0, %s197
          %s199 = sshll.u32 %s191, 4
          %s200 = int_to_ptr.vmem [resolvable:$true] %s199
          %205 = dma.hbm_to_vmem [thread:$0]  %s198, 16384, %s200, %s188, 512, 512, 32
        $region20: #{tpu_custom_call.1} parent=15 // pred_fallthru
          _
        // Predicated region
        $region21: #{tpu_custom_call.1} parent=15 // pred_check
          %p206 = pneg %p81
        $region22: #{tpu_custom_call.1} parent=15 // pred_check_branch
          %208 = sbr.rel (%p206) target = $region24
        $region23: #{tpu_custom_call.1} parent=15 // pred_region
          %s209 = sand.u32 %s71, 1
          %s210 = scalar_lea.sflag [#allocation10], %s209
          %s211 = sand.u32 %s71, 1
          %s212 = smul.addr %s211, 1024
          %s213 = scalar_lea.vmem [#allocation9], %s212
          %s214 = smul.u32 32, %s31
          %s216 = ssub.s32 16384, 16384
          %217 = vsyncadd %s210, %s216
          %s218 = smul.addr %s214, 8
          %s219 = smul.addr %s218, 64
          %s220 = scalar_lea.hbm %s1, %s219
          %s221 = sshll.u32 %s213, 4
          %s222 = int_to_ptr.vmem [resolvable:$true] %s221
          %227 = dma.hbm_to_vmem [thread:$0]  %s220, 16384, %s222, %s210, 512, 512, 32
        $region24: #{tpu_custom_call.1} parent=15 // pred_fallthru
          _
      $region16: #{tpu_custom_call.1} parent=5 // pred_fallthru
        _
      %p228 = scmp.le.s32.totalorder 1, %s23
      %p229 = scmp.lt.s32.totalorder %s23, 5
      %p230 = pnand %p228, %p229
      %p231 = pneg %p230
      // Predicated region
      $region25: #{tpu_custom_call.1} parent=5 // pred_check
        _
      $region26: #{tpu_custom_call.1} parent=5 // pred_check_branch
        %233 = sbr.rel (%p230) target = $region28
      $region27: #{tpu_custom_call.1} parent=5 // pred_region
        %s234 = ssub.s32 %s23, 1
        %s235 = sand.u32 %s48, 1
        %s236 = scalar_lea.sflag [#allocation7], %s235
        %s237 = sand.u32 %s48, 1
        %s238 = smul.addr %s237, 1024
        %s239 = scalar_lea.vmem [#allocation6], %s238
        // Predicated region
        $region29: #{tpu_custom_call.1} parent=27 // pred_check
          %p240 = pneg %p61
        $region30: #{tpu_custom_call.1} parent=27 // pred_check_branch
          %242 = sbr.rel (%p240) target = $region32
        $region31: #{tpu_custom_call.1} parent=27 // pred_region
          %243 = dma.done %s236, 16384
        $region32: #{tpu_custom_call.1} parent=27 // pred_fallthru
          _
        %s244 = sand.u32 %s74, 1
        %s245 = scalar_lea.sflag [#allocation10], %s244
        %s246 = sand.u32 %s74, 1
        %s247 = smul.addr %s246, 1024
        %s248 = scalar_lea.vmem [#allocation9], %s247
        // Predicated region
        $region33: #{tpu_custom_call.1} parent=27 // pred_check
          %p249 = pneg %p87
        $region34: #{tpu_custom_call.1} parent=27 // pred_check_branch
          %251 = sbr.rel (%p249) target = $region36
        $region35: #{tpu_custom_call.1} parent=27 // pred_region
          %252 = dma.done %s245, 16384
        $region36: #{tpu_custom_call.1} parent=27 // pred_fallthru
          _
        %s253 = sand.u32 %s48, 1
        %s254 = scalar_lea.sflag [#allocation7], %s253
        %s255 = sand.u32 %s48, 1
        %s256 = smul.addr %s255, 1024
        %s257 = scalar_lea.vmem [#allocation6], %s256
        %p258 = pneg %p61
        %p259 = pneg %p58
        %s260 = sand.u32 %s74, 1
        %s261 = scalar_lea.sflag [#allocation10], %s260
        %s262 = sand.u32 %s74, 1
        %s263 = smul.addr %s262, 1024
        %s264 = scalar_lea.vmem [#allocation9], %s263
        %p265 = pneg %p87
        %p266 = pneg %p84
        %p267 = pneg %p113
        %p268 = pneg %p110
        %s269 = sand.u32 %s100, 1
        %s270 = scalar_lea.sflag [#allocation8], %s269
        %s271 = sand.u32 %s100, 1
        %s272 = smul.addr %s271, 4
        %s273 = scalar_lea.vmem [#allocation11], %s272
        %p274 = pneg %p139
        %p275 = pneg %p136
        %s276 = sand.u32 %s28, 1
        %s277 = scalar_lea.sflag [#allocation13], %s276
        %s278 = sand.u32 %s126, 1
        %s279 = smul.addr %s278, 4
        %s280 = scalar_lea.vmem [#allocation12], %s279
        %p281 = pneg %p165
        %p282 = pneg %p162
        %s283 = sand.u32 %s28, 1
        %s284 = scalar_lea.sflag [#allocation13], %s283
        %s285 = sand.u32 %s152, 1
        %s286 = smul.addr %s285, 4
        %s287 = scalar_lea.vmem [#allocation14], %s286
        %s288 = smul.u32 32, %s32
        %s289 = smul.u32 32, %s33
        %s290 = smul.u32 2, %s32
        %s291 = smul.u32 2, %s32
        %s292 = smul.u32 2, %s32
        %p293 = scmp.eq.s32.totalorder %s33, 0
        // Predicated region
        $region37: #{tpu_custom_call.1} parent=27 // pred_check
          %p294 = pneg %p293
        $region38: #{tpu_custom_call.1} parent=27 // pred_check_branch
          %296 = sbr.rel (%p294) target = $region40
        $region39: #{tpu_custom_call.1} parent=27 // pred_region
          %v297 = vld [vmem:[%s239] sm:$0xff]
          %v298 = vld [vmem:[%s239 + $0x8] sm:$0xff]
          %v299 = vld [vmem:[%s239 + $0x10] sm:$0xff]
          %v300 = vld [vmem:[%s239 + $0x18] sm:$0xff]
          %v301 = vld [vmem:[%s239 + $0x20] sm:$0xff]
          %v302 = vld [vmem:[%s239 + $0x28] sm:$0xff]
          %v303 = vld [vmem:[%s239 + $0x30] sm:$0xff]
          %v304 = vld [vmem:[%s239 + $0x38] sm:$0xff]
          %v305 = vld [vmem:[%s239 + $0x40] sm:$0xff]
          %v306 = vld [vmem:[%s239 + $0x48] sm:$0xff]
          %v307 = vld [vmem:[%s239 + $0x50] sm:$0xff]
          %v308 = vld [vmem:[%s239 + $0x58] sm:$0xff]
          %v309 = vld [vmem:[%s239 + $0x60] sm:$0xff]
          %v310 = vld [vmem:[%s239 + $0x68] sm:$0xff]
          %v311 = vld [vmem:[%s239 + $0x70] sm:$0xff]
          %v312 = vld [vmem:[%s239 + $0x78] sm:$0xff]
          %v313 = vld [vmem:[%s239 + $0x80] sm:$0xff]
          %v314 = vld [vmem:[%s239 + $0x88] sm:$0xff]
          %v315 = vld [vmem:[%s239 + $0x90] sm:$0xff]
          %v316 = vld [vmem:[%s239 + $0x98] sm:$0xff]
          %v317 = vld [vmem:[%s239 + $0xa0] sm:$0xff]
          %v318 = vld [vmem:[%s239 + $0xa8] sm:$0xff]
          %v319 = vld [vmem:[%s239 + $0xb0] sm:$0xff]
          %v320 = vld [vmem:[%s239 + $0xb8] sm:$0xff]
          %v321 = vld [vmem:[%s239 + $0xc0] sm:$0xff]
          %v322 = vld [vmem:[%s239 + $0xc8] sm:$0xff]
          %v323 = vld [vmem:[%s239 + $0xd0] sm:$0xff]
          %v324 = vld [vmem:[%s239 + $0xd8] sm:$0xff]
          %v325 = vld [vmem:[%s239 + $0xe0] sm:$0xff]
          %v326 = vld [vmem:[%s239 + $0xe8] sm:$0xff]
          %v327 = vld [vmem:[%s239 + $0xf0] sm:$0xff]
          %v328 = vld [vmem:[%s239 + $0xf8] sm:$0xff]
          %v329 = vld [vmem:[%s239 + $0x100] sm:$0xff]
          %v330 = vld [vmem:[%s239 + $0x108] sm:$0xff]
          %v331 = vld [vmem:[%s239 + $0x110] sm:$0xff]
          %v332 = vld [vmem:[%s239 + $0x118] sm:$0xff]
          %v333 = vld [vmem:[%s239 + $0x120] sm:$0xff]
          %v334 = vld [vmem:[%s239 + $0x128] sm:$0xff]
          %v335 = vld [vmem:[%s239 + $0x130] sm:$0xff]
          %v336 = vld [vmem:[%s239 + $0x138] sm:$0xff]
          %v337 = vld [vmem:[%s239 + $0x140] sm:$0xff]
          %v338 = vld [vmem:[%s239 + $0x148] sm:$0xff]
          %v339 = vld [vmem:[%s239 + $0x150] sm:$0xff]
          %v340 = vld [vmem:[%s239 + $0x158] sm:$0xff]
          %v341 = vld [vmem:[%s239 + $0x160] sm:$0xff]
          %v342 = vld [vmem:[%s239 + $0x168] sm:$0xff]
          %v343 = vld [vmem:[%s239 + $0x170] sm:$0xff]
          %v344 = vld [vmem:[%s239 + $0x178] sm:$0xff]
          %v345 = vld [vmem:[%s239 + $0x180] sm:$0xff]
          %v346 = vld [vmem:[%s239 + $0x188] sm:$0xff]
          %v347 = vld [vmem:[%s239 + $0x190] sm:$0xff]
          %v348 = vld [vmem:[%s239 + $0x198] sm:$0xff]
          %v349 = vld [vmem:[%s239 + $0x1a0] sm:$0xff]
          %v350 = vld [vmem:[%s239 + $0x1a8] sm:$0xff]
          %v351 = vld [vmem:[%s239 + $0x1b0] sm:$0xff]
          %v352 = vld [vmem:[%s239 + $0x1b8] sm:$0xff]
          %v353 = vld [vmem:[%s239 + $0x1c0] sm:$0xff]
          %v354 = vld [vmem:[%s239 + $0x1c8] sm:$0xff]
          %v355 = vld [vmem:[%s239 + $0x1d0] sm:$0xff]
          %v356 = vld [vmem:[%s239 + $0x1d8] sm:$0xff]
          %v357 = vld [vmem:[%s239 + $0x1e0] sm:$0xff]
          %v358 = vld [vmem:[%s239 + $0x1e8] sm:$0xff]
          %v359 = vld [vmem:[%s239 + $0x1f0] sm:$0xff]
          %v360 = vld [vmem:[%s239 + $0x1f8] sm:$0xff]
          %v361 = vld [vmem:[%s239 + $0x200] sm:$0xff]
          %v362 = vld [vmem:[%s239 + $0x208] sm:$0xff]
          %v363 = vld [vmem:[%s239 + $0x210] sm:$0xff]
          %v364 = vld [vmem:[%s239 + $0x218] sm:$0xff]
          %v365 = vld [vmem:[%s239 + $0x220] sm:$0xff]
          %v366 = vld [vmem:[%s239 + $0x228] sm:$0xff]
          %v367 = vld [vmem:[%s239 + $0x230] sm:$0xff]
          %v368 = vld [vmem:[%s239 + $0x238] sm:$0xff]
          %v369 = vld [vmem:[%s239 + $0x240] sm:$0xff]
          %v370 = vld [vmem:[%s239 + $0x248] sm:$0xff]
          %v371 = vld [vmem:[%s239 + $0x250] sm:$0xff]
          %v372 = vld [vmem:[%s239 + $0x258] sm:$0xff]
          %v373 = vld [vmem:[%s239 + $0x260] sm:$0xff]
          %v374 = vld [vmem:[%s239 + $0x268] sm:$0xff]
          %v375 = vld [vmem:[%s239 + $0x270] sm:$0xff]
          %v376 = vld [vmem:[%s239 + $0x278] sm:$0xff]
          %v377 = vld [vmem:[%s239 + $0x280] sm:$0xff]
          %v378 = vld [vmem:[%s239 + $0x288] sm:$0xff]
          %v379 = vld [vmem:[%s239 + $0x290] sm:$0xff]
          %v380 = vld [vmem:[%s239 + $0x298] sm:$0xff]
          %v381 = vld [vmem:[%s239 + $0x2a0] sm:$0xff]
          %v382 = vld [vmem:[%s239 + $0x2a8] sm:$0xff]
          %v383 = vld [vmem:[%s239 + $0x2b0] sm:$0xff]
          %v384 = vld [vmem:[%s239 + $0x2b8] sm:$0xff]
          %v385 = vld [vmem:[%s239 + $0x2c0] sm:$0xff]
          %v386 = vld [vmem:[%s239 + $0x2c8] sm:$0xff]
          %v387 = vld [vmem:[%s239 + $0x2d0] sm:$0xff]
          %v388 = vld [vmem:[%s239 + $0x2d8] sm:$0xff]
          %v389 = vld [vmem:[%s239 + $0x2e0] sm:$0xff]
          %v390 = vld [vmem:[%s239 + $0x2e8] sm:$0xff]
          %v391 = vld [vmem:[%s239 + $0x2f0] sm:$0xff]
          %v392 = vld [vmem:[%s239 + $0x2f8] sm:$0xff]
          %v393 = vld [vmem:[%s239 + $0x300] sm:$0xff]
          %v394 = vld [vmem:[%s239 + $0x308] sm:$0xff]
          %v395 = vld [vmem:[%s239 + $0x310] sm:$0xff]
          %v396 = vld [vmem:[%s239 + $0x318] sm:$0xff]
          %v397 = vld [vmem:[%s239 + $0x320] sm:$0xff]
          %v398 = vld [vmem:[%s239 + $0x328] sm:$0xff]
          %v399 = vld [vmem:[%s239 + $0x330] sm:$0xff]
          %v400 = vld [vmem:[%s239 + $0x338] sm:$0xff]
          %v401 = vld [vmem:[%s239 + $0x340] sm:$0xff]
          %v402 = vld [vmem:[%s239 + $0x348] sm:$0xff]
          %v403 = vld [vmem:[%s239 + $0x350] sm:$0xff]
          %v404 = vld [vmem:[%s239 + $0x358] sm:$0xff]
          %v405 = vld [vmem:[%s239 + $0x360] sm:$0xff]
          %v406 = vld [vmem:[%s239 + $0x368] sm:$0xff]
          %v407 = vld [vmem:[%s239 + $0x370] sm:$0xff]
          %v408 = vld [vmem:[%s239 + $0x378] sm:$0xff]
          %v409 = vld [vmem:[%s239 + $0x380] sm:$0xff]
          %v410 = vld [vmem:[%s239 + $0x388] sm:$0xff]
          %v411 = vld [vmem:[%s239 + $0x390] sm:$0xff]
          %v412 = vld [vmem:[%s239 + $0x398] sm:$0xff]
          %v413 = vld [vmem:[%s239 + $0x3a0] sm:$0xff]
          %v414 = vld [vmem:[%s239 + $0x3a8] sm:$0xff]
          %v415 = vld [vmem:[%s239 + $0x3b0] sm:$0xff]
          %v416 = vld [vmem:[%s239 + $0x3b8] sm:$0xff]
          %v417 = vld [vmem:[%s239 + $0x3c0] sm:$0xff]
          %v418 = vld [vmem:[%s239 + $0x3c8] sm:$0xff]
          %v419 = vld [vmem:[%s239 + $0x3d0] sm:$0xff]
          %v420 = vld [vmem:[%s239 + $0x3d8] sm:$0xff]
          %v421 = vld [vmem:[%s239 + $0x3e0] sm:$0xff]
          %v422 = vld [vmem:[%s239 + $0x3e8] sm:$0xff]
          %v423 = vld [vmem:[%s239 + $0x3f0] sm:$0xff]
          %v424 = vld [vmem:[%s239 + $0x3f8] sm:$0xff]
          %v425 = vunpack.c.l.bf16 %v297
          %v426 = vunpack.c.h.bf16 %v297
          %v427 = vunpack.c.l.bf16 %v298
          %v428 = vunpack.c.h.bf16 %v298
          %v429 = vunpack.c.l.bf16 %v301
          %v430 = vunpack.c.h.bf16 %v301
          %v431 = vunpack.c.l.bf16 %v302
          %v432 = vunpack.c.h.bf16 %v302
          %v433 = vunpack.c.l.bf16 %v305
          %v434 = vunpack.c.h.bf16 %v305
          %v435 = vunpack.c.l.bf16 %v306
          %v436 = vunpack.c.h.bf16 %v306
          %v437 = vunpack.c.l.bf16 %v309
          %v438 = vunpack.c.h.bf16 %v309
          %v439 = vunpack.c.l.bf16 %v310
          %v440 = vunpack.c.h.bf16 %v310
          %v441 = vunpack.c.l.bf16 %v313
          %v442 = vunpack.c.h.bf16 %v313
          %v443 = vunpack.c.l.bf16 %v314
          %v444 = vunpack.c.h.bf16 %v314
          %v445 = vunpack.c.l.bf16 %v317
          %v446 = vunpack.c.h.bf16 %v317
          %v447 = vunpack.c.l.bf16 %v318
          %v448 = vunpack.c.h.bf16 %v318
          %v449 = vunpack.c.l.bf16 %v321
          %v450 = vunpack.c.h.bf16 %v321
          %v451 = vunpack.c.l.bf16 %v322
          %v452 = vunpack.c.h.bf16 %v322
          %v453 = vunpack.c.l.bf16 %v325
          %v454 = vunpack.c.h.bf16 %v325
          %v455 = vunpack.c.l.bf16 %v326
          %v456 = vunpack.c.h.bf16 %v326
          %v457 = vunpack.c.l.bf16 %v329
          %v458 = vunpack.c.h.bf16 %v329
          %v459 = vunpack.c.l.bf16 %v330
          %v460 = vunpack.c.h.bf16 %v330
          %v461 = vunpack.c.l.bf16 %v333
          %v462 = vunpack.c.h.bf16 %v333
          %v463 = vunpack.c.l.bf16 %v334
          %v464 = vunpack.c.h.bf16 %v334
          %v465 = vunpack.c.l.bf16 %v337
          %v466 = vunpack.c.h.bf16 %v337
          %v467 = vunpack.c.l.bf16 %v338
          %v468 = vunpack.c.h.bf16 %v338
          %v469 = vunpack.c.l.bf16 %v341
          %v470 = vunpack.c.h.bf16 %v341
          %v471 = vunpack.c.l.bf16 %v342
          %v472 = vunpack.c.h.bf16 %v342
          %v473 = vunpack.c.l.bf16 %v345
          %v474 = vunpack.c.h.bf16 %v345
          %v475 = vunpack.c.l.bf16 %v346
          %v476 = vunpack.c.h.bf16 %v346
          %v477 = vunpack.c.l.bf16 %v349
          %v478 = vunpack.c.h.bf16 %v349
          %v479 = vunpack.c.l.bf16 %v350
          %v480 = vunpack.c.h.bf16 %v350
          %v481 = vunpack.c.l.bf16 %v353
          %v482 = vunpack.c.h.bf16 %v353
          %v483 = vunpack.c.l.bf16 %v354
          %v484 = vunpack.c.h.bf16 %v354
          %v485 = vunpack.c.l.bf16 %v357
          %v486 = vunpack.c.h.bf16 %v357
          %v487 = vunpack.c.l.bf16 %v358
          %v488 = vunpack.c.h.bf16 %v358
          %v489 = vunpack.c.l.bf16 %v361
          %v490 = vunpack.c.h.bf16 %v361
          %v491 = vunpack.c.l.bf16 %v362
          %v492 = vunpack.c.h.bf16 %v362
          %v493 = vunpack.c.l.bf16 %v365
          %v494 = vunpack.c.h.bf16 %v365
          %v495 = vunpack.c.l.bf16 %v366
          %v496 = vunpack.c.h.bf16 %v366
          %v497 = vunpack.c.l.bf16 %v369
          %v498 = vunpack.c.h.bf16 %v369
          %v499 = vunpack.c.l.bf16 %v370
          %v500 = vunpack.c.h.bf16 %v370
          %v501 = vunpack.c.l.bf16 %v373
          %v502 = vunpack.c.h.bf16 %v373
          %v503 = vunpack.c.l.bf16 %v374
          %v504 = vunpack.c.h.bf16 %v374
          %v505 = vunpack.c.l.bf16 %v377
          %v506 = vunpack.c.h.bf16 %v377
          %v507 = vunpack.c.l.bf16 %v378
          %v508 = vunpack.c.h.bf16 %v378
          %v509 = vunpack.c.l.bf16 %v381
          %v510 = vunpack.c.h.bf16 %v381
          %v511 = vunpack.c.l.bf16 %v382
          %v512 = vunpack.c.h.bf16 %v382
          %v513 = vunpack.c.l.bf16 %v385
          %v514 = vunpack.c.h.bf16 %v385
          %v515 = vunpack.c.l.bf16 %v386
          %v516 = vunpack.c.h.bf16 %v386
          %v517 = vunpack.c.l.bf16 %v389
          %v518 = vunpack.c.h.bf16 %v389
          %v519 = vunpack.c.l.bf16 %v390
          %v520 = vunpack.c.h.bf16 %v390
          %v521 = vunpack.c.l.bf16 %v393
          %v522 = vunpack.c.h.bf16 %v393
          %v523 = vunpack.c.l.bf16 %v394
          %v524 = vunpack.c.h.bf16 %v394
          %v525 = vunpack.c.l.bf16 %v397
          %v526 = vunpack.c.h.bf16 %v397
          %v527 = vunpack.c.l.bf16 %v398
          %v528 = vunpack.c.h.bf16 %v398
          %v529 = vunpack.c.l.bf16 %v401
          %v530 = vunpack.c.h.bf16 %v401
          %v531 = vunpack.c.l.bf16 %v402
          %v532 = vunpack.c.h.bf16 %v402
          %v533 = vunpack.c.l.bf16 %v405
          %v534 = vunpack.c.h.bf16 %v405
          %v535 = vunpack.c.l.bf16 %v406
          %v536 = vunpack.c.h.bf16 %v406
          %v537 = vunpack.c.l.bf16 %v409
          %v538 = vunpack.c.h.bf16 %v409
          %v539 = vunpack.c.l.bf16 %v410
          %v540 = vunpack.c.h.bf16 %v410
          %v541 = vunpack.c.l.bf16 %v413
          %v542 = vunpack.c.h.bf16 %v413
          %v543 = vunpack.c.l.bf16 %v414
          %v544 = vunpack.c.h.bf16 %v414
          %v545 = vunpack.c.l.bf16 %v417
          %v546 = vunpack.c.h.bf16 %v417
          %v547 = vunpack.c.l.bf16 %v418
          %v548 = vunpack.c.h.bf16 %v418
          %v549 = vunpack.c.l.bf16 %v421
          %v550 = vunpack.c.h.bf16 %v421
          %v551 = vunpack.c.l.bf16 %v422
          %v552 = vunpack.c.h.bf16 %v422
          %v553 = vunpack.c.l.bf16 %v299
          %v554 = vunpack.c.h.bf16 %v299
          %v555 = vunpack.c.l.bf16 %v300
          %v556 = vunpack.c.h.bf16 %v300
          %v557 = vunpack.c.l.bf16 %v303
          %v558 = vunpack.c.h.bf16 %v303
          %v559 = vunpack.c.l.bf16 %v304
          %v560 = vunpack.c.h.bf16 %v304
          %v561 = vunpack.c.l.bf16 %v307
          %v562 = vunpack.c.h.bf16 %v307
          %v563 = vunpack.c.l.bf16 %v308
          %v564 = vunpack.c.h.bf16 %v308
          %v565 = vunpack.c.l.bf16 %v311
          %v566 = vunpack.c.h.bf16 %v311
          %v567 = vunpack.c.l.bf16 %v312
          %v568 = vunpack.c.h.bf16 %v312
          %v569 = vunpack.c.l.bf16 %v315
          %v570 = vunpack.c.h.bf16 %v315
          %v571 = vunpack.c.l.bf16 %v316
          %v572 = vunpack.c.h.bf16 %v316
          %v573 = vunpack.c.l.bf16 %v319
          %v574 = vunpack.c.h.bf16 %v319
          %v575 = vunpack.c.l.bf16 %v320
          %v576 = vunpack.c.h.bf16 %v320
          %v577 = vunpack.c.l.bf16 %v323
          %v578 = vunpack.c.h.bf16 %v323
          %v579 = vunpack.c.l.bf16 %v324
          %v580 = vunpack.c.h.bf16 %v324
          %v581 = vunpack.c.l.bf16 %v327
          %v582 = vunpack.c.h.bf16 %v327
          %v583 = vunpack.c.l.bf16 %v328
          %v584 = vunpack.c.h.bf16 %v328
          %v585 = vunpack.c.l.bf16 %v331
          %v586 = vunpack.c.h.bf16 %v331
          %v587 = vunpack.c.l.bf16 %v332
          %v588 = vunpack.c.h.bf16 %v332
          %v589 = vunpack.c.l.bf16 %v335
          %v590 = vunpack.c.h.bf16 %v335
          %v591 = vunpack.c.l.bf16 %v336
          %v592 = vunpack.c.h.bf16 %v336
          %v593 = vunpack.c.l.bf16 %v339
          %v594 = vunpack.c.h.bf16 %v339
          %v595 = vunpack.c.l.bf16 %v340
          %v596 = vunpack.c.h.bf16 %v340
          %v597 = vunpack.c.l.bf16 %v343
          %v598 = vunpack.c.h.bf16 %v343
          %v599 = vunpack.c.l.bf16 %v344
          %v600 = vunpack.c.h.bf16 %v344
          %v601 = vunpack.c.l.bf16 %v347
          %v602 = vunpack.c.h.bf16 %v347
          %v603 = vunpack.c.l.bf16 %v348
          %v604 = vunpack.c.h.bf16 %v348
          %v605 = vunpack.c.l.bf16 %v351
          %v606 = vunpack.c.h.bf16 %v351
          %v607 = vunpack.c.l.bf16 %v352
          %v608 = vunpack.c.h.bf16 %v352
          %v609 = vunpack.c.l.bf16 %v355
          %v610 = vunpack.c.h.bf16 %v355
          %v611 = vunpack.c.l.bf16 %v356
          %v612 = vunpack.c.h.bf16 %v356
          %v613 = vunpack.c.l.bf16 %v359
          %v614 = vunpack.c.h.bf16 %v359
          %v615 = vunpack.c.l.bf16 %v360
          %v616 = vunpack.c.h.bf16 %v360
          %v617 = vunpack.c.l.bf16 %v363
          %v618 = vunpack.c.h.bf16 %v363
          %v619 = vunpack.c.l.bf16 %v364
          %v620 = vunpack.c.h.bf16 %v364
          %v621 = vunpack.c.l.bf16 %v367
          %v622 = vunpack.c.h.bf16 %v367
          %v623 = vunpack.c.l.bf16 %v368
          %v624 = vunpack.c.h.bf16 %v368
          %v625 = vunpack.c.l.bf16 %v371
          %v626 = vunpack.c.h.bf16 %v371
          %v627 = vunpack.c.l.bf16 %v372
          %v628 = vunpack.c.h.bf16 %v372
          %v629 = vunpack.c.l.bf16 %v375
          %v630 = vunpack.c.h.bf16 %v375
          %v631 = vunpack.c.l.bf16 %v376
          %v632 = vunpack.c.h.bf16 %v376
          %v633 = vunpack.c.l.bf16 %v379
          %v634 = vunpack.c.h.bf16 %v379
          %v635 = vunpack.c.l.bf16 %v380
          %v636 = vunpack.c.h.bf16 %v380
          %v637 = vunpack.c.l.bf16 %v383
          %v638 = vunpack.c.h.bf16 %v383
          %v639 = vunpack.c.l.bf16 %v384
          %v640 = vunpack.c.h.bf16 %v384
          %v641 = vunpack.c.l.bf16 %v387
          %v642 = vunpack.c.h.bf16 %v387
          %v643 = vunpack.c.l.bf16 %v388
          %v644 = vunpack.c.h.bf16 %v388
          %v645 = vunpack.c.l.bf16 %v391
          %v646 = vunpack.c.h.bf16 %v391
          %v647 = vunpack.c.l.bf16 %v392
          %v648 = vunpack.c.h.bf16 %v392
          %v649 = vunpack.c.l.bf16 %v395
          %v650 = vunpack.c.h.bf16 %v395
          %v651 = vunpack.c.l.bf16 %v396
          %v652 = vunpack.c.h.bf16 %v396
          %v653 = vunpack.c.l.bf16 %v399
          %v654 = vunpack.c.h.bf16 %v399
          %v655 = vunpack.c.l.bf16 %v400
          %v656 = vunpack.c.h.bf16 %v400
          %v657 = vunpack.c.l.bf16 %v403
          %v658 = vunpack.c.h.bf16 %v403
          %v659 = vunpack.c.l.bf16 %v404
          %v660 = vunpack.c.h.bf16 %v404
          %v661 = vunpack.c.l.bf16 %v407
          %v662 = vunpack.c.h.bf16 %v407
          %v663 = vunpack.c.l.bf16 %v408
          %v664 = vunpack.c.h.bf16 %v408
          %v665 = vunpack.c.l.bf16 %v411
          %v666 = vunpack.c.h.bf16 %v411
          %v667 = vunpack.c.l.bf16 %v412
          %v668 = vunpack.c.h.bf16 %v412
          %v669 = vunpack.c.l.bf16 %v415
          %v670 = vunpack.c.h.bf16 %v415
          %v671 = vunpack.c.l.bf16 %v416
          %v672 = vunpack.c.h.bf16 %v416
          %v673 = vunpack.c.l.bf16 %v419
          %v674 = vunpack.c.h.bf16 %v419
          %v675 = vunpack.c.l.bf16 %v420
          %v676 = vunpack.c.h.bf16 %v420
          %v677 = vunpack.c.l.bf16 %v423
          %v678 = vunpack.c.h.bf16 %v423
          %v679 = vunpack.c.l.bf16 %v424
          %v680 = vunpack.c.h.bf16 %v424
          %v681 = vmul.f32 %v425, %v553
          %v682 = vmul.f32 %v426, %v554
          %v683 = vmul.f32 %v427, %v555
          %v684 = vmul.f32 %v428, %v556
          %v685 = vmul.f32 %v429, %v557
          %v686 = vmul.f32 %v430, %v558
          %v687 = vmul.f32 %v431, %v559
          %v688 = vmul.f32 %v432, %v560
          %v689 = vmul.f32 %v433, %v561
          %v690 = vmul.f32 %v434, %v562
          %v691 = vmul.f32 %v435, %v563
          %v692 = vmul.f32 %v436, %v564
          %v693 = vmul.f32 %v437, %v565
          %v694 = vmul.f32 %v438, %v566
          %v695 = vmul.f32 %v439, %v567
          %v696 = vmul.f32 %v440, %v568
          %v697 = vmul.f32 %v441, %v569
          %v698 = vmul.f32 %v442, %v570
          %v699 = vmul.f32 %v443, %v571
          %v700 = vmul.f32 %v444, %v572
          %v701 = vmul.f32 %v445, %v573
          %v702 = vmul.f32 %v446, %v574
          %v703 = vmul.f32 %v447, %v575
          %v704 = vmul.f32 %v448, %v576
          %v705 = vmul.f32 %v449, %v577
          %v706 = vmul.f32 %v450, %v578
          %v707 = vmul.f32 %v451, %v579
          %v708 = vmul.f32 %v452, %v580
          %v709 = vmul.f32 %v453, %v581
          %v710 = vmul.f32 %v454, %v582
          %v711 = vmul.f32 %v455, %v583
          %v712 = vmul.f32 %v456, %v584
          %v713 = vmul.f32 %v457, %v585
          %v714 = vmul.f32 %v458, %v586
          %v715 = vmul.f32 %v459, %v587
          %v716 = vmul.f32 %v460, %v588
          %v717 = vmul.f32 %v461, %v589
          %v718 = vmul.f32 %v462, %v590
          %v719 = vmul.f32 %v463, %v591
          %v720 = vmul.f32 %v464, %v592
          %v721 = vmul.f32 %v465, %v593
          %v722 = vmul.f32 %v466, %v594
          %v723 = vmul.f32 %v467, %v595
          %v724 = vmul.f32 %v468, %v596
          %v725 = vmul.f32 %v469, %v597
          %v726 = vmul.f32 %v470, %v598
          %v727 = vmul.f32 %v471, %v599
          %v728 = vmul.f32 %v472, %v600
          %v729 = vmul.f32 %v473, %v601
          %v730 = vmul.f32 %v474, %v602
          %v731 = vmul.f32 %v475, %v603
          %v732 = vmul.f32 %v476, %v604
          %v733 = vmul.f32 %v477, %v605
          %v734 = vmul.f32 %v478, %v606
          %v735 = vmul.f32 %v479, %v607
          %v736 = vmul.f32 %v480, %v608
          %v737 = vmul.f32 %v481, %v609
          %v738 = vmul.f32 %v482, %v610
          %v739 = vmul.f32 %v483, %v611
          %v740 = vmul.f32 %v484, %v612
          %v741 = vmul.f32 %v485, %v613
          %v742 = vmul.f32 %v486, %v614
          %v743 = vmul.f32 %v487, %v615
          %v744 = vmul.f32 %v488, %v616
          %v745 = vmul.f32 %v489, %v617
          %v746 = vmul.f32 %v490, %v618
          %v747 = vmul.f32 %v491, %v619
          %v748 = vmul.f32 %v492, %v620
          %v749 = vmul.f32 %v493, %v621
          %v750 = vmul.f32 %v494, %v622
          %v751 = vmul.f32 %v495, %v623
          %v752 = vmul.f32 %v496, %v624
          %v753 = vmul.f32 %v497, %v625
          %v754 = vmul.f32 %v498, %v626
          %v755 = vmul.f32 %v499, %v627
          %v756 = vmul.f32 %v500, %v628
          %v757 = vmul.f32 %v501, %v629
          %v758 = vmul.f32 %v502, %v630
          %v759 = vmul.f32 %v503, %v631
          %v760 = vmul.f32 %v504, %v632
          %v761 = vmul.f32 %v505, %v633
          %v762 = vmul.f32 %v506, %v634
          %v763 = vmul.f32 %v507, %v635
          %v764 = vmul.f32 %v508, %v636
          %v765 = vmul.f32 %v509, %v637
          %v766 = vmul.f32 %v510, %v638
          %v767 = vmul.f32 %v511, %v639
          %v768 = vmul.f32 %v512, %v640
          %v769 = vmul.f32 %v513, %v641
          %v770 = vmul.f32 %v514, %v642
          %v771 = vmul.f32 %v515, %v643
          %v772 = vmul.f32 %v516, %v644
          %v773 = vmul.f32 %v517, %v645
          %v774 = vmul.f32 %v518, %v646
          %v775 = vmul.f32 %v519, %v647
          %v776 = vmul.f32 %v520, %v648
          %v777 = vmul.f32 %v521, %v649
          %v778 = vmul.f32 %v522, %v650
          %v779 = vmul.f32 %v523, %v651
          %v780 = vmul.f32 %v524, %v652
          %v781 = vmul.f32 %v525, %v653
          %v782 = vmul.f32 %v526, %v654
          %v783 = vmul.f32 %v527, %v655
          %v784 = vmul.f32 %v528, %v656
          %v785 = vmul.f32 %v529, %v657
          %v786 = vmul.f32 %v530, %v658
          %v787 = vmul.f32 %v531, %v659
          %v788 = vmul.f32 %v532, %v660
          %v789 = vmul.f32 %v533, %v661
          %v790 = vmul.f32 %v534, %v662
          %v791 = vmul.f32 %v535, %v663
          %v792 = vmul.f32 %v536, %v664
          %v793 = vmul.f32 %v537, %v665
          %v794 = vmul.f32 %v538, %v666
          %v795 = vmul.f32 %v539, %v667
          %v796 = vmul.f32 %v540, %v668
          %v797 = vmul.f32 %v541, %v669
          %v798 = vmul.f32 %v542, %v670
          %v799 = vmul.f32 %v543, %v671
          %v800 = vmul.f32 %v544, %v672
          %v801 = vmul.f32 %v545, %v673
          %v802 = vmul.f32 %v546, %v674
          %v803 = vmul.f32 %v547, %v675
          %v804 = vmul.f32 %v548, %v676
          %v805 = vmul.f32 %v549, %v677
          %v806 = vmul.f32 %v550, %v678
          %v807 = vmul.f32 %v551, %v679
          %v808 = vmul.f32 %v552, %v680
          %809 = vmatprep.subr.mxu0 %v682
          %810 = vmatpush1.xpose.msra.mxu0 %v681
          %811 = vmatprep.subr.mxu0 %v686
          %812 = vmatpush1.xpose.msra.mxu0 %v685
          %813 = vmatprep.subr.mxu0 %v690
          %814 = vmatpush1.xpose.msra.mxu0 %v689
          %815 = vmatprep.subr.mxu0 %v694
          %816 = vmatpush1.xpose.msra.mxu0 %v693
          %817 = vmatprep.subr.mxu0 %v698
          %818 = vmatpush1.xpose.msra.mxu0 %v697
          %819 = vmatprep.subr.mxu0 %v702
          %820 = vmatpush1.xpose.msra.mxu0 %v701
          %821 = vmatprep.subr.mxu0 %v706
          %822 = vmatpush1.xpose.msra.mxu0 %v705
          %823 = vmatprep.subr.mxu0 %v710
          %824 = vmatpush1.xpose.msra.mxu0 %v709
          %825 = vmatprep.subr.mxu0 %v714
          %826 = vmatpush1.xpose.msra.mxu0 %v713
          %827 = vmatprep.subr.mxu0 %v718
          %828 = vmatpush1.xpose.msra.mxu0 %v717
          %829 = vmatprep.subr.mxu0 %v722
          %830 = vmatpush1.xpose.msra.mxu0 %v721
          %831 = vmatprep.subr.mxu0 %v726
          %832 = vmatpush1.xpose.msra.mxu0 %v725
          %833 = vmatprep.subr.mxu0 %v730
          %834 = vmatpush1.xpose.msra.mxu0 %v729
          %835 = vmatprep.subr.mxu0 %v734
          %836 = vmatpush1.xpose.msra.mxu0 %v733
          %837 = vmatprep.subr.mxu0 %v738
          %838 = vmatpush1.xpose.msra.mxu0 %v737
          %839 = vmatprep.subr.mxu0 %v742
          %840 = vmatpush1.xpose.msra.mxu0 %v741
          %841 = vmatprep.subr.mxu0 %v746
          %842 = vmatpush1.xpose.msra.mxu0 %v745
          %843 = vmatprep.subr.mxu0 %v750
          %844 = vmatpush1.xpose.msra.mxu0 %v749
          %845 = vmatprep.subr.mxu0 %v754
          %846 = vmatpush1.xpose.msra.mxu0 %v753
          %847 = vmatprep.subr.mxu0 %v758
          %848 = vmatpush1.xpose.msra.mxu0 %v757
          %849 = vmatprep.subr.mxu0 %v762
          %850 = vmatpush1.xpose.msra.mxu0 %v761
          %851 = vmatprep.subr.mxu0 %v766
          %852 = vmatpush1.xpose.msra.mxu0 %v765
          %853 = vmatprep.subr.mxu0 %v770
          %854 = vmatpush1.xpose.msra.mxu0 %v769
          %855 = vmatprep.subr.mxu0 %v774
          %856 = vmatpush1.xpose.msra.mxu0 %v773
          %857 = vmatprep.subr.mxu0 %v778
          %858 = vmatpush1.xpose.msra.mxu0 %v777
          %859 = vmatprep.subr.mxu0 %v782
          %860 = vmatpush1.xpose.msra.mxu0 %v781
          %861 = vmatprep.subr.mxu0 %v786
          %862 = vmatpush1.xpose.msra.mxu0 %v785
          %863 = vmatprep.subr.mxu0 %v790
          %864 = vmatpush1.xpose.msra.mxu0 %v789
          %865 = vmatprep.subr.mxu0 %v794
          %866 = vmatpush1.xpose.msra.mxu0 %v793
          %867 = vmatprep.subr.mxu0 %v798
          %868 = vmatpush1.xpose.msra.mxu0 %v797
          %869 = vmatprep.subr.mxu0 %v802
          %870 = vmatpush1.xpose.msra.mxu0 %v801
          %871 = vmatprep.subr.mxu0 %v806
          %872 = vmatpush1.xpose.msra.mxu0 %v805
          %873 = vmatprep.mubr.f32.mxu0 1.0
          %874 = vmatmul.mubr.f32.gmra.mrb[0].mxu0 1.0
          %v875 = vpop.f32.mrb[0].mxu0
          %v876 = vadd.f32 0.0, %v875
          %v877 = vpop.f32.mrb[0].mxu0
          %v878 = vadd.f32 0.0, %v877
          %879 = vdwg.mxu0
          %880 = vmatprep.subr.mxu0 %v684
          %881 = vmatpush1.xpose.msra.mxu0 %v683
          %882 = vmatprep.subr.mxu0 %v688
          %883 = vmatpush1.xpose.msra.mxu0 %v687
          %884 = vmatprep.subr.mxu0 %v692
          %885 = vmatpush1.xpose.msra.mxu0 %v691
          %886 = vmatprep.subr.mxu0 %v696
          %887 = vmatpush1.xpose.msra.mxu0 %v695
          %888 = vmatprep.subr.mxu0 %v700
          %889 = vmatpush1.xpose.msra.mxu0 %v699
          %890 = vmatprep.subr.mxu0 %v704
          %891 = vmatpush1.xpose.msra.mxu0 %v703
          %892 = vmatprep.subr.mxu0 %v708
          %893 = vmatpush1.xpose.msra.mxu0 %v707
          %894 = vmatprep.subr.mxu0 %v712
          %895 = vmatpush1.xpose.msra.mxu0 %v711
          %896 = vmatprep.subr.mxu0 %v716
          %897 = vmatpush1.xpose.msra.mxu0 %v715
          %898 = vmatprep.subr.mxu0 %v720
          %899 = vmatpush1.xpose.msra.mxu0 %v719
          %900 = vmatprep.subr.mxu0 %v724
          %901 = vmatpush1.xpose.msra.mxu0 %v723
          %902 = vmatprep.subr.mxu0 %v728
          %903 = vmatpush1.xpose.msra.mxu0 %v727
          %904 = vmatprep.subr.mxu0 %v732
          %905 = vmatpush1.xpose.msra.mxu0 %v731
          %906 = vmatprep.subr.mxu0 %v736
          %907 = vmatpush1.xpose.msra.mxu0 %v735
          %908 = vmatprep.subr.mxu0 %v740
          %909 = vmatpush1.xpose.msra.mxu0 %v739
          %910 = vmatprep.subr.mxu0 %v744
          %911 = vmatpush1.xpose.msra.mxu0 %v743
          %912 = vmatprep.subr.mxu0 %v748
          %913 = vmatpush1.xpose.msra.mxu0 %v747
          %914 = vmatprep.subr.mxu0 %v752
          %915 = vmatpush1.xpose.msra.mxu0 %v751
          %916 = vmatprep.subr.mxu0 %v756
          %917 = vmatpush1.xpose.msra.mxu0 %v755
          %918 = vmatprep.subr.mxu0 %v760
          %919 = vmatpush1.xpose.msra.mxu0 %v759
          %920 = vmatprep.subr.mxu0 %v764
          %921 = vmatpush1.xpose.msra.mxu0 %v763
          %922 = vmatprep.subr.mxu0 %v768
          %923 = vmatpush1.xpose.msra.mxu0 %v767
          %924 = vmatprep.subr.mxu0 %v772
          %925 = vmatpush1.xpose.msra.mxu0 %v771
          %926 = vmatprep.subr.mxu0 %v776
          %927 = vmatpush1.xpose.msra.mxu0 %v775
          %928 = vmatprep.subr.mxu0 %v780
          %929 = vmatpush1.xpose.msra.mxu0 %v779
          %930 = vmatprep.subr.mxu0 %v784
          %931 = vmatpush1.xpose.msra.mxu0 %v783
          %932 = vmatprep.subr.mxu0 %v788
          %933 = vmatpush1.xpose.msra.mxu0 %v787
          %934 = vmatprep.subr.mxu0 %v792
          %935 = vmatpush1.xpose.msra.mxu0 %v791
          %936 = vmatprep.subr.mxu0 %v796
          %937 = vmatpush1.xpose.msra.mxu0 %v795
          %938 = vmatprep.subr.mxu0 %v800
          %939 = vmatpush1.xpose.msra.mxu0 %v799
          %940 = vmatprep.subr.mxu0 %v804
          %941 = vmatpush1.xpose.msra.mxu0 %v803
          %942 = vmatprep.subr.mxu0 %v808
          %943 = vmatpush1.xpose.msra.mxu0 %v807
          %944 = vmatprep.mubr.f32.mxu0 1.0
          %945 = vmatmul.mubr.f32.gmra.mrb[0].mxu0 1.0
          %v946 = vpop.f32.mrb[0].mxu0
          %v947 = vadd.f32 %v876, %v946
          %v948 = vpop.f32.mrb[0].mxu0
          %v949 = vadd.f32 %v878, %v948
          %950 = vdwg.mxu0
          %v951 = vmul.f32 %v947, 2.0
          %v952 = vmul.f32 %v949, 2.0
          %v955 = vcombine.low %v951, %v952
          %v957 = vunpack.c.l.s4 1966171168
          %v958 = vunpack.c.0.s8 %v957
          %v959 = vlaneseq
          %v960 = vshrl.u32 %v959, 7
          %v961 = vsub.s32 %v958, %v960
          %v962 = vrot.slane %v955, %v961
          %v964 = vunpack.c.l.s4 1966171168
          %v965 = vunpack.c.0.s8 %v964
          %v966 = vlaneseq
          %v967 = vshrl.u32 %v966, 7
          %v968 = vsub.s32 %v965, %v967
          %v969 = vrot.slane %v962, %v968
          %v971 = vlaneseq
          %vm972 = vcmp.ge.s32.totalorder %v971, 0
          %vm973 = vcmp.lt.s32.totalorder %v971, 256
          %vm974 = vmand %vm972, %vm973
          %975 = vst.msk [vmem:[#allocation3] sm:$0x3] %vm974, %v969
          %v976 = vmul.f32 %v951, 1.442695
          %v977 = vpow.pop %v976
          %v978 = vmul.f32 %v952, 1.442695
          %v979 = vpow.pop %v978
          %v982 = vcombine.low %v977, %v979
          %v984 = vunpack.c.l.s4 1966171168
          %v985 = vunpack.c.0.s8 %v984
          %v986 = vlaneseq
          %v987 = vshrl.u32 %v986, 7
          %v988 = vsub.s32 %v985, %v987
          %v989 = vrot.slane %v982, %v988
          %v991 = vunpack.c.l.s4 1966171168
          %v992 = vunpack.c.0.s8 %v991
          %v993 = vlaneseq
          %v994 = vshrl.u32 %v993, 7
          %v995 = vsub.s32 %v992, %v994
          %v996 = vrot.slane %v989, %v995
          %998 = vst.msk [vmem:[#allocation2] sm:$0x3] %vm974, %v996
          %999 = vst.msk [vmem:[#allocation4] sm:$0x3] %vm974, 0.0
          %1000 = vst.msk [vmem:[#allocation5] sm:$0x3] %vm974, 0.0
        $region40: #{tpu_custom_call.1} parent=27 // pred_fallthru
          _
        %v1001 = vld [vmem:[%s239] sm:$0xff]
        %v1002 = vld [vmem:[%s239 + $0x8] sm:$0xff]
        %v1003 = vld [vmem:[%s239 + $0x10] sm:$0xff]
        %v1004 = vld [vmem:[%s239 + $0x18] sm:$0xff]
        %v1005 = vld [vmem:[%s239 + $0x20] sm:$0xff]
        %v1006 = vld [vmem:[%s239 + $0x28] sm:$0xff]
        %v1007 = vld [vmem:[%s239 + $0x30] sm:$0xff]
        %v1008 = vld [vmem:[%s239 + $0x38] sm:$0xff]
        %v1009 = vld [vmem:[%s239 + $0x40] sm:$0xff]
        %v1010 = vld [vmem:[%s239 + $0x48] sm:$0xff]
        %v1011 = vld [vmem:[%s239 + $0x50] sm:$0xff]
        %v1012 = vld [vmem:[%s239 + $0x58] sm:$0xff]
        %v1013 = vld [vmem:[%s239 + $0x60] sm:$0xff]
        %v1014 = vld [vmem:[%s239 + $0x68] sm:$0xff]
        %v1015 = vld [vmem:[%s239 + $0x70] sm:$0xff]
        %v1016 = vld [vmem:[%s239 + $0x78] sm:$0xff]
        %v1017 = vld [vmem:[%s239 + $0x80] sm:$0xff]
        %v1018 = vld [vmem:[%s239 + $0x88] sm:$0xff]
        %v1019 = vld [vmem:[%s239 + $0x90] sm:$0xff]
        %v1020 = vld [vmem:[%s239 + $0x98] sm:$0xff]
        %v1021 = vld [vmem:[%s239 + $0xa0] sm:$0xff]
        %v1022 = vld [vmem:[%s239 + $0xa8] sm:$0xff]
        %v1023 = vld [vmem:[%s239 + $0xb0] sm:$0xff]
        %v1024 = vld [vmem:[%s239 + $0xb8] sm:$0xff]
        %v1025 = vld [vmem:[%s239 + $0xc0] sm:$0xff]
        %v1026 = vld [vmem:[%s239 + $0xc8] sm:$0xff]
        %v1027 = vld [vmem:[%s239 + $0xd0] sm:$0xff]
        %v1028 = vld [vmem:[%s239 + $0xd8] sm:$0xff]
        %v1029 = vld [vmem:[%s239 + $0xe0] sm:$0xff]
        %v1030 = vld [vmem:[%s239 + $0xe8] sm:$0xff]
        %v1031 = vld [vmem:[%s239 + $0xf0] sm:$0xff]
        %v1032 = vld [vmem:[%s239 + $0xf8] sm:$0xff]
        %v1033 = vld [vmem:[%s239 + $0x100] sm:$0xff]
        %v1034 = vld [vmem:[%s239 + $0x108] sm:$0xff]
        %v1035 = vld [vmem:[%s239 + $0x110] sm:$0xff]
        %v1036 = vld [vmem:[%s239 + $0x118] sm:$0xff]
        %v1037 = vld [vmem:[%s239 + $0x120] sm:$0xff]
        %v1038 = vld [vmem:[%s239 + $0x128] sm:$0xff]
        %v1039 = vld [vmem:[%s239 + $0x130] sm:$0xff]
        %v1040 = vld [vmem:[%s239 + $0x138] sm:$0xff]
        %v1041 = vld [vmem:[%s239 + $0x140] sm:$0xff]
        %v1042 = vld [vmem:[%s239 + $0x148] sm:$0xff]
        %v1043 = vld [vmem:[%s239 + $0x150] sm:$0xff]
        %v1044 = vld [vmem:[%s239 + $0x158] sm:$0xff]
        %v1045 = vld [vmem:[%s239 + $0x160] sm:$0xff]
        %v1046 = vld [vmem:[%s239 + $0x168] sm:$0xff]
        %v1047 = vld [vmem:[%s239 + $0x170] sm:$0xff]
        %v1048 = vld [vmem:[%s239 + $0x178] sm:$0xff]
        %v1049 = vld [vmem:[%s239 + $0x180] sm:$0xff]
        %v1050 = vld [vmem:[%s239 + $0x188] sm:$0xff]
        %v1051 = vld [vmem:[%s239 + $0x190] sm:$0xff]
        %v1052 = vld [vmem:[%s239 + $0x198] sm:$0xff]
        %v1053 = vld [vmem:[%s239 + $0x1a0] sm:$0xff]
        %v1054 = vld [vmem:[%s239 + $0x1a8] sm:$0xff]
        %v1055 = vld [vmem:[%s239 + $0x1b0] sm:$0xff]
        %v1056 = vld [vmem:[%s239 + $0x1b8] sm:$0xff]
        %v1057 = vld [vmem:[%s239 + $0x1c0] sm:$0xff]
        %v1058 = vld [vmem:[%s239 + $0x1c8] sm:$0xff]
        %v1059 = vld [vmem:[%s239 + $0x1d0] sm:$0xff]
        %v1060 = vld [vmem:[%s239 + $0x1d8] sm:$0xff]
        %v1061 = vld [vmem:[%s239 + $0x1e0] sm:$0xff]
        %v1062 = vld [vmem:[%s239 + $0x1e8] sm:$0xff]
        %v1063 = vld [vmem:[%s239 + $0x1f0] sm:$0xff]
        %v1064 = vld [vmem:[%s239 + $0x1f8] sm:$0xff]
        %v1065 = vld [vmem:[%s239 + $0x200] sm:$0xff]
        %v1066 = vld [vmem:[%s239 + $0x208] sm:$0xff]
        %v1067 = vld [vmem:[%s239 + $0x210] sm:$0xff]
        %v1068 = vld [vmem:[%s239 + $0x218] sm:$0xff]
        %v1069 = vld [vmem:[%s239 + $0x220] sm:$0xff]
        %v1070 = vld [vmem:[%s239 + $0x228] sm:$0xff]
        %v1071 = vld [vmem:[%s239 + $0x230] sm:$0xff]
        %v1072 = vld [vmem:[%s239 + $0x238] sm:$0xff]
        %v1073 = vld [vmem:[%s239 + $0x240] sm:$0xff]
        %v1074 = vld [vmem:[%s239 + $0x248] sm:$0xff]
        %v1075 = vld [vmem:[%s239 + $0x250] sm:$0xff]
        %v1076 = vld [vmem:[%s239 + $0x258] sm:$0xff]
        %v1077 = vld [vmem:[%s239 + $0x260] sm:$0xff]
        %v1078 = vld [vmem:[%s239 + $0x268] sm:$0xff]
        %v1079 = vld [vmem:[%s239 + $0x270] sm:$0xff]
        %v1080 = vld [vmem:[%s239 + $0x278] sm:$0xff]
        %v1081 = vld [vmem:[%s239 + $0x280] sm:$0xff]
        %v1082 = vld [vmem:[%s239 + $0x288] sm:$0xff]
        %v1083 = vld [vmem:[%s239 + $0x290] sm:$0xff]
        %v1084 = vld [vmem:[%s239 + $0x298] sm:$0xff]
        %v1085 = vld [vmem:[%s239 + $0x2a0] sm:$0xff]
        %v1086 = vld [vmem:[%s239 + $0x2a8] sm:$0xff]
        %v1087 = vld [vmem:[%s239 + $0x2b0] sm:$0xff]
        %v1088 = vld [vmem:[%s239 + $0x2b8] sm:$0xff]
        %v1089 = vld [vmem:[%s239 + $0x2c0] sm:$0xff]
        %v1090 = vld [vmem:[%s239 + $0x2c8] sm:$0xff]
        %v1091 = vld [vmem:[%s239 + $0x2d0] sm:$0xff]
        %v1092 = vld [vmem:[%s239 + $0x2d8] sm:$0xff]
        %v1093 = vld [vmem:[%s239 + $0x2e0] sm:$0xff]
        %v1094 = vld [vmem:[%s239 + $0x2e8] sm:$0xff]
        %v1095 = vld [vmem:[%s239 + $0x2f0] sm:$0xff]
        %v1096 = vld [vmem:[%s239 + $0x2f8] sm:$0xff]
        %v1097 = vld [vmem:[%s239 + $0x300] sm:$0xff]
        %v1098 = vld [vmem:[%s239 + $0x308] sm:$0xff]
        %v1099 = vld [vmem:[%s239 + $0x310] sm:$0xff]
        %v1100 = vld [vmem:[%s239 + $0x318] sm:$0xff]
        %v1101 = vld [vmem:[%s239 + $0x320] sm:$0xff]
        %v1102 = vld [vmem:[%s239 + $0x328] sm:$0xff]
        %v1103 = vld [vmem:[%s239 + $0x330] sm:$0xff]
        %v1104 = vld [vmem:[%s239 + $0x338] sm:$0xff]
        %v1105 = vld [vmem:[%s239 + $0x340] sm:$0xff]
        %v1106 = vld [vmem:[%s239 + $0x348] sm:$0xff]
        %v1107 = vld [vmem:[%s239 + $0x350] sm:$0xff]
        %v1108 = vld [vmem:[%s239 + $0x358] sm:$0xff]
        %v1109 = vld [vmem:[%s239 + $0x360] sm:$0xff]
        %v1110 = vld [vmem:[%s239 + $0x368] sm:$0xff]
        %v1111 = vld [vmem:[%s239 + $0x370] sm:$0xff]
        %v1112 = vld [vmem:[%s239 + $0x378] sm:$0xff]
        %v1113 = vld [vmem:[%s239 + $0x380] sm:$0xff]
        %v1114 = vld [vmem:[%s239 + $0x388] sm:$0xff]
        %v1115 = vld [vmem:[%s239 + $0x390] sm:$0xff]
        %v1116 = vld [vmem:[%s239 + $0x398] sm:$0xff]
        %v1117 = vld [vmem:[%s239 + $0x3a0] sm:$0xff]
        %v1118 = vld [vmem:[%s239 + $0x3a8] sm:$0xff]
        %v1119 = vld [vmem:[%s239 + $0x3b0] sm:$0xff]
        %v1120 = vld [vmem:[%s239 + $0x3b8] sm:$0xff]
        %v1121 = vld [vmem:[%s239 + $0x3c0] sm:$0xff]
        %v1122 = vld [vmem:[%s239 + $0x3c8] sm:$0xff]
        %v1123 = vld [vmem:[%s239 + $0x3d0] sm:$0xff]
        %v1124 = vld [vmem:[%s239 + $0x3d8] sm:$0xff]
        %v1125 = vld [vmem:[%s239 + $0x3e0] sm:$0xff]
        %v1126 = vld [vmem:[%s239 + $0x3e8] sm:$0xff]
        %v1127 = vld [vmem:[%s239 + $0x3f0] sm:$0xff]
        %v1128 = vld [vmem:[%s239 + $0x3f8] sm:$0xff]
        %v1129 = vld [vmem:[%s248] sm:$0xff]
        %v1130 = vld [vmem:[%s248 + $0x8] sm:$0xff]
        %v1131 = vld [vmem:[%s248 + $0x10] sm:$0xff]
        %v1132 = vld [vmem:[%s248 + $0x18] sm:$0xff]
        %v1133 = vld [vmem:[%s248 + $0x20] sm:$0xff]
        %v1134 = vld [vmem:[%s248 + $0x28] sm:$0xff]
        %v1135 = vld [vmem:[%s248 + $0x30] sm:$0xff]
        %v1136 = vld [vmem:[%s248 + $0x38] sm:$0xff]
        %v1137 = vld [vmem:[%s248 + $0x40] sm:$0xff]
        %v1138 = vld [vmem:[%s248 + $0x48] sm:$0xff]
        %v1139 = vld [vmem:[%s248 + $0x50] sm:$0xff]
        %v1140 = vld [vmem:[%s248 + $0x58] sm:$0xff]
        %v1141 = vld [vmem:[%s248 + $0x60] sm:$0xff]
        %v1142 = vld [vmem:[%s248 + $0x68] sm:$0xff]
        %v1143 = vld [vmem:[%s248 + $0x70] sm:$0xff]
        %v1144 = vld [vmem:[%s248 + $0x78] sm:$0xff]
        %v1145 = vld [vmem:[%s248 + $0x80] sm:$0xff]
        %v1146 = vld [vmem:[%s248 + $0x88] sm:$0xff]
        %v1147 = vld [vmem:[%s248 + $0x90] sm:$0xff]
        %v1148 = vld [vmem:[%s248 + $0x98] sm:$0xff]
        %v1149 = vld [vmem:[%s248 + $0xa0] sm:$0xff]
        %v1150 = vld [vmem:[%s248 + $0xa8] sm:$0xff]
        %v1151 = vld [vmem:[%s248 + $0xb0] sm:$0xff]
        %v1152 = vld [vmem:[%s248 + $0xb8] sm:$0xff]
        %v1153 = vld [vmem:[%s248 + $0xc0] sm:$0xff]
        %v1154 = vld [vmem:[%s248 + $0xc8] sm:$0xff]
        %v1155 = vld [vmem:[%s248 + $0xd0] sm:$0xff]
        %v1156 = vld [vmem:[%s248 + $0xd8] sm:$0xff]
        %v1157 = vld [vmem:[%s248 + $0xe0] sm:$0xff]
        %v1158 = vld [vmem:[%s248 + $0xe8] sm:$0xff]
        %v1159 = vld [vmem:[%s248 + $0xf0] sm:$0xff]
        %v1160 = vld [vmem:[%s248 + $0xf8] sm:$0xff]
        %v1161 = vld [vmem:[%s248 + $0x100] sm:$0xff]
        %v1162 = vld [vmem:[%s248 + $0x108] sm:$0xff]
        %v1163 = vld [vmem:[%s248 + $0x110] sm:$0xff]
        %v1164 = vld [vmem:[%s248 + $0x118] sm:$0xff]
        %v1165 = vld [vmem:[%s248 + $0x120] sm:$0xff]
        %v1166 = vld [vmem:[%s248 + $0x128] sm:$0xff]
        %v1167 = vld [vmem:[%s248 + $0x130] sm:$0xff]
        %v1168 = vld [vmem:[%s248 + $0x138] sm:$0xff]
        %v1169 = vld [vmem:[%s248 + $0x140] sm:$0xff]
        %v1170 = vld [vmem:[%s248 + $0x148] sm:$0xff]
        %v1171 = vld [vmem:[%s248 + $0x150] sm:$0xff]
        %v1172 = vld [vmem:[%s248 + $0x158] sm:$0xff]
        %v1173 = vld [vmem:[%s248 + $0x160] sm:$0xff]
        %v1174 = vld [vmem:[%s248 + $0x168] sm:$0xff]
        %v1175 = vld [vmem:[%s248 + $0x170] sm:$0xff]
        %v1176 = vld [vmem:[%s248 + $0x178] sm:$0xff]
        %v1177 = vld [vmem:[%s248 + $0x180] sm:$0xff]
        %v1178 = vld [vmem:[%s248 + $0x188] sm:$0xff]
        %v1179 = vld [vmem:[%s248 + $0x190] sm:$0xff]
        %v1180 = vld [vmem:[%s248 + $0x198] sm:$0xff]
        %v1181 = vld [vmem:[%s248 + $0x1a0] sm:$0xff]
        %v1182 = vld [vmem:[%s248 + $0x1a8] sm:$0xff]
        %v1183 = vld [vmem:[%s248 + $0x1b0] sm:$0xff]
        %v1184 = vld [vmem:[%s248 + $0x1b8] sm:$0xff]
        %v1185 = vld [vmem:[%s248 + $0x1c0] sm:$0xff]
        %v1186 = vld [vmem:[%s248 + $0x1c8] sm:$0xff]
        %v1187 = vld [vmem:[%s248 + $0x1d0] sm:$0xff]
        %v1188 = vld [vmem:[%s248 + $0x1d8] sm:$0xff]
        %v1189 = vld [vmem:[%s248 + $0x1e0] sm:$0xff]
        %v1190 = vld [vmem:[%s248 + $0x1e8] sm:$0xff]
        %v1191 = vld [vmem:[%s248 + $0x1f0] sm:$0xff]
        %v1192 = vld [vmem:[%s248 + $0x1f8] sm:$0xff]
        %v1193 = vld [vmem:[%s248 + $0x200] sm:$0xff]
        %v1194 = vld [vmem:[%s248 + $0x208] sm:$0xff]
        %v1195 = vld [vmem:[%s248 + $0x210] sm:$0xff]
        %v1196 = vld [vmem:[%s248 + $0x218] sm:$0xff]
        %v1197 = vld [vmem:[%s248 + $0x220] sm:$0xff]
        %v1198 = vld [vmem:[%s248 + $0x228] sm:$0xff]
        %v1199 = vld [vmem:[%s248 + $0x230] sm:$0xff]
        %v1200 = vld [vmem:[%s248 + $0x238] sm:$0xff]
        %v1201 = vld [vmem:[%s248 + $0x240] sm:$0xff]
        %v1202 = vld [vmem:[%s248 + $0x248] sm:$0xff]
        %v1203 = vld [vmem:[%s248 + $0x250] sm:$0xff]
        %v1204 = vld [vmem:[%s248 + $0x258] sm:$0xff]
        %v1205 = vld [vmem:[%s248 + $0x260] sm:$0xff]
        %v1206 = vld [vmem:[%s248 + $0x268] sm:$0xff]
        %v1207 = vld [vmem:[%s248 + $0x270] sm:$0xff]
        %v1208 = vld [vmem:[%s248 + $0x278] sm:$0xff]
        %v1209 = vld [vmem:[%s248 + $0x280] sm:$0xff]
        %v1210 = vld [vmem:[%s248 + $0x288] sm:$0xff]
        %v1211 = vld [vmem:[%s248 + $0x290] sm:$0xff]
        %v1212 = vld [vmem:[%s248 + $0x298] sm:$0xff]
        %v1213 = vld [vmem:[%s248 + $0x2a0] sm:$0xff]
        %v1214 = vld [vmem:[%s248 + $0x2a8] sm:$0xff]
        %v1215 = vld [vmem:[%s248 + $0x2b0] sm:$0xff]
        %v1216 = vld [vmem:[%s248 + $0x2b8] sm:$0xff]
        %v1217 = vld [vmem:[%s248 + $0x2c0] sm:$0xff]
        %v1218 = vld [vmem:[%s248 + $0x2c8] sm:$0xff]
        %v1219 = vld [vmem:[%s248 + $0x2d0] sm:$0xff]
        %v1220 = vld [vmem:[%s248 + $0x2d8] sm:$0xff]
        %v1221 = vld [vmem:[%s248 + $0x2e0] sm:$0xff]
        %v1222 = vld [vmem:[%s248 + $0x2e8] sm:$0xff]
        %v1223 = vld [vmem:[%s248 + $0x2f0] sm:$0xff]
        %v1224 = vld [vmem:[%s248 + $0x2f8] sm:$0xff]
        %v1225 = vld [vmem:[%s248 + $0x300] sm:$0xff]
        %v1226 = vld [vmem:[%s248 + $0x308] sm:$0xff]
        %v1227 = vld [vmem:[%s248 + $0x310] sm:$0xff]
        %v1228 = vld [vmem:[%s248 + $0x318] sm:$0xff]
        %v1229 = vld [vmem:[%s248 + $0x320] sm:$0xff]
        %v1230 = vld [vmem:[%s248 + $0x328] sm:$0xff]
        %v1231 = vld [vmem:[%s248 + $0x330] sm:$0xff]
        %v1232 = vld [vmem:[%s248 + $0x338] sm:$0xff]
        %v1233 = vld [vmem:[%s248 + $0x340] sm:$0xff]
        %v1234 = vld [vmem:[%s248 + $0x348] sm:$0xff]
        %v1235 = vld [vmem:[%s248 + $0x350] sm:$0xff]
        %v1236 = vld [vmem:[%s248 + $0x358] sm:$0xff]
        %v1237 = vld [vmem:[%s248 + $0x360] sm:$0xff]
        %v1238 = vld [vmem:[%s248 + $0x368] sm:$0xff]
        %v1239 = vld [vmem:[%s248 + $0x370] sm:$0xff]
        %v1240 = vld [vmem:[%s248 + $0x378] sm:$0xff]
        %v1241 = vld [vmem:[%s248 + $0x380] sm:$0xff]
        %v1242 = vld [vmem:[%s248 + $0x388] sm:$0xff]
        %v1243 = vld [vmem:[%s248 + $0x390] sm:$0xff]
        %v1244 = vld [vmem:[%s248 + $0x398] sm:$0xff]
        %v1245 = vld [vmem:[%s248 + $0x3a0] sm:$0xff]
        %v1246 = vld [vmem:[%s248 + $0x3a8] sm:$0xff]
        %v1247 = vld [vmem:[%s248 + $0x3b0] sm:$0xff]
        %v1248 = vld [vmem:[%s248 + $0x3b8] sm:$0xff]
        %v1249 = vld [vmem:[%s248 + $0x3c0] sm:$0xff]
        %v1250 = vld [vmem:[%s248 + $0x3c8] sm:$0xff]
        %v1251 = vld [vmem:[%s248 + $0x3d0] sm:$0xff]
        %v1252 = vld [vmem:[%s248 + $0x3d8] sm:$0xff]
        %v1253 = vld [vmem:[%s248 + $0x3e0] sm:$0xff]
        %v1254 = vld [vmem:[%s248 + $0x3e8] sm:$0xff]
        %v1255 = vld [vmem:[%s248 + $0x3f0] sm:$0xff]
        %v1256 = vld [vmem:[%s248 + $0x3f8] sm:$0xff]
        %v1321 = vunpack.c.l.b16 %v1129
        %v1322 = vunpack.c.h.b16 %v1129
        %v1323 = vunpack.c.l.b16 %v1130
        %v1324 = vunpack.c.h.b16 %v1130
        %v1325 = vunpack.c.l.b16 %v1133
        %v1326 = vunpack.c.h.b16 %v1133
        %v1327 = vunpack.c.l.b16 %v1134
        %v1328 = vunpack.c.h.b16 %v1134
        %v1329 = vunpack.c.l.b16 %v1137
        %v1330 = vunpack.c.h.b16 %v1137
        %v1331 = vunpack.c.l.b16 %v1138
        %v1332 = vunpack.c.h.b16 %v1138
        %v1333 = vunpack.c.l.b16 %v1141
        %v1334 = vunpack.c.h.b16 %v1141
        %v1335 = vunpack.c.l.b16 %v1142
        %v1336 = vunpack.c.h.b16 %v1142
        %v1337 = vunpack.c.l.b16 %v1145
        %v1338 = vunpack.c.h.b16 %v1145
        %v1339 = vunpack.c.l.b16 %v1146
        %v1340 = vunpack.c.h.b16 %v1146
        %v1341 = vunpack.c.l.b16 %v1149
        %v1342 = vunpack.c.h.b16 %v1149
        %v1343 = vunpack.c.l.b16 %v1150
        %v1344 = vunpack.c.h.b16 %v1150
        %v1345 = vunpack.c.l.b16 %v1153
        %v1346 = vunpack.c.h.b16 %v1153
        %v1347 = vunpack.c.l.b16 %v1154
        %v1348 = vunpack.c.h.b16 %v1154
        %v1349 = vunpack.c.l.b16 %v1157
        %v1350 = vunpack.c.h.b16 %v1157
        %v1351 = vunpack.c.l.b16 %v1158
        %v1352 = vunpack.c.h.b16 %v1158
        %v1353 = vunpack.c.l.b16 %v1161
        %v1354 = vunpack.c.h.b16 %v1161
        %v1355 = vunpack.c.l.b16 %v1162
        %v1356 = vunpack.c.h.b16 %v1162
        %v1357 = vunpack.c.l.b16 %v1165
        %v1358 = vunpack.c.h.b16 %v1165
        %v1359 = vunpack.c.l.b16 %v1166
        %v1360 = vunpack.c.h.b16 %v1166
        %v1361 = vunpack.c.l.b16 %v1169
        %v1362 = vunpack.c.h.b16 %v1169
        %v1363 = vunpack.c.l.b16 %v1170
        %v1364 = vunpack.c.h.b16 %v1170
        %v1365 = vunpack.c.l.b16 %v1173
        %v1366 = vunpack.c.h.b16 %v1173
        %v1367 = vunpack.c.l.b16 %v1174
        %v1368 = vunpack.c.h.b16 %v1174
        %v1369 = vunpack.c.l.b16 %v1177
        %v1370 = vunpack.c.h.b16 %v1177
        %v1371 = vunpack.c.l.b16 %v1178
        %v1372 = vunpack.c.h.b16 %v1178
        %v1373 = vunpack.c.l.b16 %v1181
        %v1374 = vunpack.c.h.b16 %v1181
        %v1375 = vunpack.c.l.b16 %v1182
        %v1376 = vunpack.c.h.b16 %v1182
        %v1377 = vunpack.c.l.b16 %v1185
        %v1378 = vunpack.c.h.b16 %v1185
        %v1379 = vunpack.c.l.b16 %v1186
        %v1380 = vunpack.c.h.b16 %v1186
        %v1381 = vunpack.c.l.b16 %v1189
        %v1382 = vunpack.c.h.b16 %v1189
        %v1383 = vunpack.c.l.b16 %v1190
        %v1384 = vunpack.c.h.b16 %v1190
        %v1385 = vunpack.c.l.b16 %v1193
        %v1386 = vunpack.c.h.b16 %v1193
        %v1387 = vunpack.c.l.b16 %v1194
        %v1388 = vunpack.c.h.b16 %v1194
        %v1389 = vunpack.c.l.b16 %v1197
        %v1390 = vunpack.c.h.b16 %v1197
        %v1391 = vunpack.c.l.b16 %v1198
        %v1392 = vunpack.c.h.b16 %v1198
        %v1393 = vunpack.c.l.b16 %v1201
        %v1394 = vunpack.c.h.b16 %v1201
        %v1395 = vunpack.c.l.b16 %v1202
        %v1396 = vunpack.c.h.b16 %v1202
        %v1397 = vunpack.c.l.b16 %v1205
        %v1398 = vunpack.c.h.b16 %v1205
        %v1399 = vunpack.c.l.b16 %v1206
        %v1400 = vunpack.c.h.b16 %v1206
        %v1401 = vunpack.c.l.b16 %v1209
        %v1402 = vunpack.c.h.b16 %v1209
        %v1403 = vunpack.c.l.b16 %v1210
        %v1404 = vunpack.c.h.b16 %v1210
        %v1405 = vunpack.c.l.b16 %v1213
        %v1406 = vunpack.c.h.b16 %v1213
        %v1407 = vunpack.c.l.b16 %v1214
        %v1408 = vunpack.c.h.b16 %v1214
        %v1409 = vunpack.c.l.b16 %v1217
        %v1410 = vunpack.c.h.b16 %v1217
        %v1411 = vunpack.c.l.b16 %v1218
        %v1412 = vunpack.c.h.b16 %v1218
        %v1413 = vunpack.c.l.b16 %v1221
        %v1414 = vunpack.c.h.b16 %v1221
        %v1415 = vunpack.c.l.b16 %v1222
        %v1416 = vunpack.c.h.b16 %v1222
        %v1417 = vunpack.c.l.b16 %v1225
        %v1418 = vunpack.c.h.b16 %v1225
        %v1419 = vunpack.c.l.b16 %v1226
        %v1420 = vunpack.c.h.b16 %v1226
        %v1421 = vunpack.c.l.b16 %v1229
        %v1422 = vunpack.c.h.b16 %v1229
        %v1423 = vunpack.c.l.b16 %v1230
        %v1424 = vunpack.c.h.b16 %v1230
        %v1425 = vunpack.c.l.b16 %v1233
        %v1426 = vunpack.c.h.b16 %v1233
        %v1427 = vunpack.c.l.b16 %v1234
        %v1428 = vunpack.c.h.b16 %v1234
        %v1429 = vunpack.c.l.b16 %v1237
        %v1430 = vunpack.c.h.b16 %v1237
        %v1431 = vunpack.c.l.b16 %v1238
        %v1432 = vunpack.c.h.b16 %v1238
        %v1433 = vunpack.c.l.b16 %v1241
        %v1434 = vunpack.c.h.b16 %v1241
        %v1435 = vunpack.c.l.b16 %v1242
        %v1436 = vunpack.c.h.b16 %v1242
        %v1437 = vunpack.c.l.b16 %v1245
        %v1438 = vunpack.c.h.b16 %v1245
        %v1439 = vunpack.c.l.b16 %v1246
        %v1440 = vunpack.c.h.b16 %v1246
        %v1441 = vunpack.c.l.b16 %v1249
        %v1442 = vunpack.c.h.b16 %v1249
        %v1443 = vunpack.c.l.b16 %v1250
        %v1444 = vunpack.c.h.b16 %v1250
        %v1445 = vunpack.c.l.b16 %v1253
        %v1446 = vunpack.c.h.b16 %v1253
        %v1447 = vunpack.c.l.b16 %v1254
        %v1448 = vunpack.c.h.b16 %v1254
        %v1449 = vpack.c.b16 %v1325, %v1321
        %v1450 = vpack.c.b16 %v1326, %v1322
        %v1451 = vpack.c.b16 %v1327, %v1323
        %v1452 = vpack.c.b16 %v1328, %v1324
        %v1453 = vpack.c.b16 %v1333, %v1329
        %v1454 = vpack.c.b16 %v1334, %v1330
        %v1455 = vpack.c.b16 %v1335, %v1331
        %v1456 = vpack.c.b16 %v1336, %v1332
        %v1457 = vpack.c.b16 %v1341, %v1337
        %v1458 = vpack.c.b16 %v1342, %v1338
        %v1459 = vpack.c.b16 %v1343, %v1339
        %v1460 = vpack.c.b16 %v1344, %v1340
        %v1461 = vpack.c.b16 %v1349, %v1345
        %v1462 = vpack.c.b16 %v1350, %v1346
        %v1463 = vpack.c.b16 %v1351, %v1347
        %v1464 = vpack.c.b16 %v1352, %v1348
        %v1465 = vpack.c.b16 %v1357, %v1353
        %v1466 = vpack.c.b16 %v1358, %v1354
        %v1467 = vpack.c.b16 %v1359, %v1355
        %v1468 = vpack.c.b16 %v1360, %v1356
        %v1469 = vpack.c.b16 %v1365, %v1361
        %v1470 = vpack.c.b16 %v1366, %v1362
        %v1471 = vpack.c.b16 %v1367, %v1363
        %v1472 = vpack.c.b16 %v1368, %v1364
        %v1473 = vpack.c.b16 %v1373, %v1369
        %v1474 = vpack.c.b16 %v1374, %v1370
        %v1475 = vpack.c.b16 %v1375, %v1371
        %v1476 = vpack.c.b16 %v1376, %v1372
        %v1477 = vpack.c.b16 %v1381, %v1377
        %v1478 = vpack.c.b16 %v1382, %v1378
        %v1479 = vpack.c.b16 %v1383, %v1379
        %v1480 = vpack.c.b16 %v1384, %v1380
        %v1481 = vpack.c.b16 %v1389, %v1385
        %v1482 = vpack.c.b16 %v1390, %v1386
        %v1483 = vpack.c.b16 %v1391, %v1387
        %v1484 = vpack.c.b16 %v1392, %v1388
        %v1485 = vpack.c.b16 %v1397, %v1393
        %v1486 = vpack.c.b16 %v1398, %v1394
        %v1487 = vpack.c.b16 %v1399, %v1395
        %v1488 = vpack.c.b16 %v1400, %v1396
        %v1489 = vpack.c.b16 %v1405, %v1401
        %v1490 = vpack.c.b16 %v1406, %v1402
        %v1491 = vpack.c.b16 %v1407, %v1403
        %v1492 = vpack.c.b16 %v1408, %v1404
        %v1493 = vpack.c.b16 %v1413, %v1409
        %v1494 = vpack.c.b16 %v1414, %v1410
        %v1495 = vpack.c.b16 %v1415, %v1411
        %v1496 = vpack.c.b16 %v1416, %v1412
        %v1497 = vpack.c.b16 %v1421, %v1417
        %v1498 = vpack.c.b16 %v1422, %v1418
        %v1499 = vpack.c.b16 %v1423, %v1419
        %v1500 = vpack.c.b16 %v1424, %v1420
        %v1501 = vpack.c.b16 %v1429, %v1425
        %v1502 = vpack.c.b16 %v1430, %v1426
        %v1503 = vpack.c.b16 %v1431, %v1427
        %v1504 = vpack.c.b16 %v1432, %v1428
        %v1505 = vpack.c.b16 %v1437, %v1433
        %v1506 = vpack.c.b16 %v1438, %v1434
        %v1507 = vpack.c.b16 %v1439, %v1435
        %v1508 = vpack.c.b16 %v1440, %v1436
        %v1509 = vpack.c.b16 %v1445, %v1441
        %v1510 = vpack.c.b16 %v1446, %v1442
        %v1511 = vpack.c.b16 %v1447, %v1443
        %v1512 = vpack.c.b16 %v1448, %v1444
        %v1641 = vunpack.c.l.b16 %v1001
        %v1642 = vunpack.c.h.b16 %v1001
        %v1643 = vunpack.c.l.b16 %v1002
        %v1644 = vunpack.c.h.b16 %v1002
        %v1645 = vunpack.c.l.b16 %v1005
        %v1646 = vunpack.c.h.b16 %v1005
        %v1647 = vunpack.c.l.b16 %v1006
        %v1648 = vunpack.c.h.b16 %v1006
        %v1649 = vunpack.c.l.b16 %v1009
        %v1650 = vunpack.c.h.b16 %v1009
        %v1651 = vunpack.c.l.b16 %v1010
        %v1652 = vunpack.c.h.b16 %v1010
        %v1653 = vunpack.c.l.b16 %v1013
        %v1654 = vunpack.c.h.b16 %v1013
        %v1655 = vunpack.c.l.b16 %v1014
        %v1656 = vunpack.c.h.b16 %v1014
        %v1657 = vunpack.c.l.b16 %v1017
        %v1658 = vunpack.c.h.b16 %v1017
        %v1659 = vunpack.c.l.b16 %v1018
        %v1660 = vunpack.c.h.b16 %v1018
        %v1661 = vunpack.c.l.b16 %v1021
        %v1662 = vunpack.c.h.b16 %v1021
        %v1663 = vunpack.c.l.b16 %v1022
        %v1664 = vunpack.c.h.b16 %v1022
        %v1665 = vunpack.c.l.b16 %v1025
        %v1666 = vunpack.c.h.b16 %v1025
        %v1667 = vunpack.c.l.b16 %v1026
        %v1668 = vunpack.c.h.b16 %v1026
        %v1669 = vunpack.c.l.b16 %v1029
        %v1670 = vunpack.c.h.b16 %v1029
        %v1671 = vunpack.c.l.b16 %v1030
        %v1672 = vunpack.c.h.b16 %v1030
        %v1673 = vunpack.c.l.b16 %v1033
        %v1674 = vunpack.c.h.b16 %v1033
        %v1675 = vunpack.c.l.b16 %v1034
        %v1676 = vunpack.c.h.b16 %v1034
        %v1677 = vunpack.c.l.b16 %v1037
        %v1678 = vunpack.c.h.b16 %v1037
        %v1679 = vunpack.c.l.b16 %v1038
        %v1680 = vunpack.c.h.b16 %v1038
        %v1681 = vunpack.c.l.b16 %v1041
        %v1682 = vunpack.c.h.b16 %v1041
        %v1683 = vunpack.c.l.b16 %v1042
        %v1684 = vunpack.c.h.b16 %v1042
        %v1685 = vunpack.c.l.b16 %v1045
        %v1686 = vunpack.c.h.b16 %v1045
        %v1687 = vunpack.c.l.b16 %v1046
        %v1688 = vunpack.c.h.b16 %v1046
        %v1689 = vunpack.c.l.b16 %v1049
        %v1690 = vunpack.c.h.b16 %v1049
        %v1691 = vunpack.c.l.b16 %v1050
        %v1692 = vunpack.c.h.b16 %v1050
        %v1693 = vunpack.c.l.b16 %v1053
        %v1694 = vunpack.c.h.b16 %v1053
        %v1695 = vunpack.c.l.b16 %v1054
        %v1696 = vunpack.c.h.b16 %v1054
        %v1697 = vunpack.c.l.b16 %v1057
        %v1698 = vunpack.c.h.b16 %v1057
        %v1699 = vunpack.c.l.b16 %v1058
        %v1700 = vunpack.c.h.b16 %v1058
        %v1701 = vunpack.c.l.b16 %v1061
        %v1702 = vunpack.c.h.b16 %v1061
        %v1703 = vunpack.c.l.b16 %v1062
        %v1704 = vunpack.c.h.b16 %v1062
        %v1705 = vunpack.c.l.b16 %v1065
        %v1706 = vunpack.c.h.b16 %v1065
        %v1707 = vunpack.c.l.b16 %v1066
        %v1708 = vunpack.c.h.b16 %v1066
        %v1709 = vunpack.c.l.b16 %v1069
        %v1710 = vunpack.c.h.b16 %v1069
        %v1711 = vunpack.c.l.b16 %v1070
        %v1712 = vunpack.c.h.b16 %v1070
        %v1713 = vunpack.c.l.b16 %v1073
        %v1714 = vunpack.c.h.b16 %v1073
        %v1715 = vunpack.c.l.b16 %v1074
        %v1716 = vunpack.c.h.b16 %v1074
        %v1717 = vunpack.c.l.b16 %v1077
        %v1718 = vunpack.c.h.b16 %v1077
        %v1719 = vunpack.c.l.b16 %v1078
        %v1720 = vunpack.c.h.b16 %v1078
        %v1721 = vunpack.c.l.b16 %v1081
        %v1722 = vunpack.c.h.b16 %v1081
        %v1723 = vunpack.c.l.b16 %v1082
        %v1724 = vunpack.c.h.b16 %v1082
        %v1725 = vunpack.c.l.b16 %v1085
        %v1726 = vunpack.c.h.b16 %v1085
        %v1727 = vunpack.c.l.b16 %v1086
        %v1728 = vunpack.c.h.b16 %v1086
        %v1729 = vunpack.c.l.b16 %v1089
        %v1730 = vunpack.c.h.b16 %v1089
        %v1731 = vunpack.c.l.b16 %v1090
        %v1732 = vunpack.c.h.b16 %v1090
        %v1733 = vunpack.c.l.b16 %v1093
        %v1734 = vunpack.c.h.b16 %v1093
        %v1735 = vunpack.c.l.b16 %v1094
        %v1736 = vunpack.c.h.b16 %v1094
        %v1737 = vunpack.c.l.b16 %v1097
        %v1738 = vunpack.c.h.b16 %v1097
        %v1739 = vunpack.c.l.b16 %v1098
        %v1740 = vunpack.c.h.b16 %v1098
        %v1741 = vunpack.c.l.b16 %v1101
        %v1742 = vunpack.c.h.b16 %v1101
        %v1743 = vunpack.c.l.b16 %v1102
        %v1744 = vunpack.c.h.b16 %v1102
        %v1745 = vunpack.c.l.b16 %v1105
        %v1746 = vunpack.c.h.b16 %v1105
        %v1747 = vunpack.c.l.b16 %v1106
        %v1748 = vunpack.c.h.b16 %v1106
        %v1749 = vunpack.c.l.b16 %v1109
        %v1750 = vunpack.c.h.b16 %v1109
        %v1751 = vunpack.c.l.b16 %v1110
        %v1752 = vunpack.c.h.b16 %v1110
        %v1753 = vunpack.c.l.b16 %v1113
        %v1754 = vunpack.c.h.b16 %v1113
        %v1755 = vunpack.c.l.b16 %v1114
        %v1756 = vunpack.c.h.b16 %v1114
        %v1757 = vunpack.c.l.b16 %v1117
        %v1758 = vunpack.c.h.b16 %v1117
        %v1759 = vunpack.c.l.b16 %v1118
        %v1760 = vunpack.c.h.b16 %v1118
        %v1761 = vunpack.c.l.b16 %v1121
        %v1762 = vunpack.c.h.b16 %v1121
        %v1763 = vunpack.c.l.b16 %v1122
        %v1764 = vunpack.c.h.b16 %v1122
        %v1765 = vunpack.c.l.b16 %v1125
        %v1766 = vunpack.c.h.b16 %v1125
        %v1767 = vunpack.c.l.b16 %v1126
        %v1768 = vunpack.c.h.b16 %v1126
        %v1769 = vpack.c.b16 %v1645, %v1641
        %v1770 = vpack.c.b16 %v1646, %v1642
        %v1771 = vpack.c.b16 %v1647, %v1643
        %v1772 = vpack.c.b16 %v1648, %v1644
        %v1773 = vpack.c.b16 %v1653, %v1649
        %v1774 = vpack.c.b16 %v1654, %v1650
        %v1775 = vpack.c.b16 %v1655, %v1651
        %v1776 = vpack.c.b16 %v1656, %v1652
        %v1777 = vpack.c.b16 %v1661, %v1657
        %v1778 = vpack.c.b16 %v1662, %v1658
        %v1779 = vpack.c.b16 %v1663, %v1659
        %v1780 = vpack.c.b16 %v1664, %v1660
        %v1781 = vpack.c.b16 %v1669, %v1665
        %v1782 = vpack.c.b16 %v1670, %v1666
        %v1783 = vpack.c.b16 %v1671, %v1667
        %v1784 = vpack.c.b16 %v1672, %v1668
        %v1785 = vpack.c.b16 %v1677, %v1673
        %v1786 = vpack.c.b16 %v1678, %v1674
        %v1787 = vpack.c.b16 %v1679, %v1675
        %v1788 = vpack.c.b16 %v1680, %v1676
        %v1789 = vpack.c.b16 %v1685, %v1681
        %v1790 = vpack.c.b16 %v1686, %v1682
        %v1791 = vpack.c.b16 %v1687, %v1683
        %v1792 = vpack.c.b16 %v1688, %v1684
        %v1793 = vpack.c.b16 %v1693, %v1689
        %v1794 = vpack.c.b16 %v1694, %v1690
        %v1795 = vpack.c.b16 %v1695, %v1691
        %v1796 = vpack.c.b16 %v1696, %v1692
        %v1797 = vpack.c.b16 %v1701, %v1697
        %v1798 = vpack.c.b16 %v1702, %v1698
        %v1799 = vpack.c.b16 %v1703, %v1699
        %v1800 = vpack.c.b16 %v1704, %v1700
        %v1801 = vpack.c.b16 %v1709, %v1705
        %v1802 = vpack.c.b16 %v1710, %v1706
        %v1803 = vpack.c.b16 %v1711, %v1707
        %v1804 = vpack.c.b16 %v1712, %v1708
        %v1805 = vpack.c.b16 %v1717, %v1713
        %v1806 = vpack.c.b16 %v1718, %v1714
        %v1807 = vpack.c.b16 %v1719, %v1715
        %v1808 = vpack.c.b16 %v1720, %v1716
        %v1809 = vpack.c.b16 %v1725, %v1721
        %v1810 = vpack.c.b16 %v1726, %v1722
        %v1811 = vpack.c.b16 %v1727, %v1723
        %v1812 = vpack.c.b16 %v1728, %v1724
        %v1813 = vpack.c.b16 %v1733, %v1729
        %v1814 = vpack.c.b16 %v1734, %v1730
        %v1815 = vpack.c.b16 %v1735, %v1731
        %v1816 = vpack.c.b16 %v1736, %v1732
        %v1817 = vpack.c.b16 %v1741, %v1737
        %v1818 = vpack.c.b16 %v1742, %v1738
        %v1819 = vpack.c.b16 %v1743, %v1739
        %v1820 = vpack.c.b16 %v1744, %v1740
        %v1821 = vpack.c.b16 %v1749, %v1745
        %v1822 = vpack.c.b16 %v1750, %v1746
        %v1823 = vpack.c.b16 %v1751, %v1747
        %v1824 = vpack.c.b16 %v1752, %v1748
        %v1825 = vpack.c.b16 %v1757, %v1753
        %v1826 = vpack.c.b16 %v1758, %v1754
        %v1827 = vpack.c.b16 %v1759, %v1755
        %v1828 = vpack.c.b16 %v1760, %v1756
        %v1829 = vpack.c.b16 %v1765, %v1761
        %v1830 = vpack.c.b16 %v1766, %v1762
        %v1831 = vpack.c.b16 %v1767, %v1763
        %v1832 = vpack.c.b16 %v1768, %v1764
        %1897 = vmatprep.subr.bf16.mxu0 %v1770
        %1898 = vmatpush1.bf16.xpose.msra.mxu0 %v1769
        %1899 = vmatprep.subr.bf16.mxu0 %v1774
        %1900 = vmatpush1.bf16.xpose.msra.mxu0 %v1773
        %1901 = vmatprep.subr.bf16.mxu0 %v1778
        %1902 = vmatpush1.bf16.xpose.msra.mxu0 %v1777
        %1903 = vmatprep.subr.bf16.mxu0 %v1782
        %1904 = vmatpush1.bf16.xpose.msra.mxu0 %v1781
        %1905 = vmatprep.subr.bf16.mxu0 %v1786
        %1906 = vmatpush1.bf16.xpose.msra.mxu0 %v1785
        %1907 = vmatprep.subr.bf16.mxu0 %v1790
        %1908 = vmatpush1.bf16.xpose.msra.mxu0 %v1789
        %1909 = vmatprep.subr.bf16.mxu0 %v1794
        %1910 = vmatpush1.bf16.xpose.msra.mxu0 %v1793
        %1911 = vmatprep.subr.bf16.mxu0 %v1798
        %1912 = vmatpush1.bf16.xpose.msra.mxu0 %v1797
        %1913 = vmatprep.subr.bf16.mxu0 %v1802
        %1914 = vmatpush1.bf16.xpose.msra.mxu0 %v1801
        %1915 = vmatprep.subr.bf16.mxu0 %v1806
        %1916 = vmatpush1.bf16.xpose.msra.mxu0 %v1805
        %1917 = vmatprep.subr.bf16.mxu0 %v1810
        %1918 = vmatpush1.bf16.xpose.msra.mxu0 %v1809
        %1919 = vmatprep.subr.bf16.mxu0 %v1814
        %1920 = vmatpush1.bf16.xpose.msra.mxu0 %v1813
        %1921 = vmatprep.subr.bf16.mxu0 %v1818
        %1922 = vmatpush1.bf16.xpose.msra.mxu0 %v1817
        %1923 = vmatprep.subr.bf16.mxu0 %v1822
        %1924 = vmatpush1.bf16.xpose.msra.mxu0 %v1821
        %1925 = vmatprep.subr.bf16.mxu0 %v1826
        %1926 = vmatpush1.bf16.xpose.msra.mxu0 %v1825
        %1927 = vmatprep.subr.bf16.mxu0 %v1830
        %1928 = vmatpush1.bf16.xpose.msra.mxu0 %v1829
        %1929 = vmatprep.mubr.bf16.mxu0 %v1450
        %1930 = vmatmul.mubr.bf16.gmra.mrb[0].mxu0 %v1449
        %v1931 = vpop.f32.mrb[0].mxu0
        %v1932 = vadd.f32 0.0, %v1931
        %v1933 = vpop.f32.mrb[0].mxu0
        %v1934 = vadd.f32 0.0, %v1933
        %v1935 = vpop.f32.mrb[0].mxu0
        %v1936 = vadd.f32 0.0, %v1935
        %v1937 = vpop.f32.mrb[0].mxu0
        %v1938 = vadd.f32 0.0, %v1937
        %1939 = vmatprep.mubr.bf16.mxu0 %v1454
        %1940 = vmatmul.mubr.bf16.gmra.mrb[0].mxu0 %v1453
        %v1941 = vpop.f32.mrb[0].mxu0
        %v1942 = vadd.f32 0.0, %v1941
        %v1943 = vpop.f32.mrb[0].mxu0
        %v1944 = vadd.f32 0.0, %v1943
        %v1945 = vpop.f32.mrb[0].mxu0
        %v1946 = vadd.f32 0.0, %v1945
        %v1947 = vpop.f32.mrb[0].mxu0
        %v1948 = vadd.f32 0.0, %v1947
        %1949 = vmatprep.mubr.bf16.mxu0 %v1458
        %1950 = vmatmul.mubr.bf16.gmra.mrb[0].mxu0 %v1457
        %v1951 = vpop.f32.mrb[0].mxu0
        %v1952 = vadd.f32 0.0, %v1951
        %v1953 = vpop.f32.mrb[0].mxu0
        %v1954 = vadd.f32 0.0, %v1953
        %v1955 = vpop.f32.mrb[0].mxu0
        %v1956 = vadd.f32 0.0, %v1955
        %v1957 = vpop.f32.mrb[0].mxu0
        %v1958 = vadd.f32 0.0, %v1957
        %1959 = vmatprep.mubr.bf16.mxu0 %v1462
        %1960 = vmatmul.mubr.bf16.gmra.mrb[0].mxu0 %v1461
        %v1961 = vpop.f32.mrb[0].mxu0
        %v1962 = vadd.f32 0.0, %v1961
        %v1963 = vpop.f32.mrb[0].mxu0
        %v1964 = vadd.f32 0.0, %v1963
        %v1965 = vpop.f32.mrb[0].mxu0
        %v1966 = vadd.f32 0.0, %v1965
        %v1967 = vpop.f32.mrb[0].mxu0
        %v1968 = vadd.f32 0.0, %v1967
        %1969 = vmatprep.mubr.bf16.mxu0 %v1466
        %1970 = vmatmul.mubr.bf16.gmra.mrb[0].mxu0 %v1465
        %v1971 = vpop.f32.mrb[0].mxu0
        %v1972 = vadd.f32 0.0, %v1971
        %v1973 = vpop.f32.mrb[0].mxu0
        %v1974 = vadd.f32 0.0, %v1973
        %v1975 = vpop.f32.mrb[0].mxu0
        %v1976 = vadd.f32 0.0, %v1975
        %v1977 = vpop.f32.mrb[0].mxu0
        %v1978 = vadd.f32 0.0, %v1977
        %1979 = vmatprep.mubr.bf16.mxu0 %v1470
        %1980 = vmatmul.mubr.bf16.gmra.mrb[0].mxu0 %v1469
        %v1981 = vpop.f32.mrb[0].mxu0
        %v1982 = vadd.f32 0.0, %v1981
        %v1983 = vpop.f32.mrb[0].mxu0
        %v1984 = vadd.f32 0.0, %v1983
        %v1985 = vpop.f32.mrb[0].mxu0
        %v1986 = vadd.f32 0.0, %v1985
        %v1987 = vpop.f32.mrb[0].mxu0
        %v1988 = vadd.f32 0.0, %v1987
        %1989 = vmatprep.mubr.bf16.mxu0 %v1474
        %1990 = vmatmul.mubr.bf16.gmra.mrb[0].mxu0 %v1473
        %v1991 = vpop.f32.mrb[0].mxu0
        %v1992 = vadd.f32 0.0, %v1991
        %v1993 = vpop.f32.mrb[0].mxu0
        %v1994 = vadd.f32 0.0, %v1993
        %v1995 = vpop.f32.mrb[0].mxu0
        %v1996 = vadd.f32 0.0, %v1995
        %v1997 = vpop.f32.mrb[0].mxu0
        %v1998 = vadd.f32 0.0, %v1997
        %1999 = vmatprep.mubr.bf16.mxu0 %v1478
        %2000 = vmatmul.mubr.bf16.gmra.mrb[0].mxu0 %v1477
        %v2001 = vpop.f32.mrb[0].mxu0
        %v2002 = vadd.f32 0.0, %v2001
        %v2003 = vpop.f32.mrb[0].mxu0
        %v2004 = vadd.f32 0.0, %v2003
        %v2005 = vpop.f32.mrb[0].mxu0
        %v2006 = vadd.f32 0.0, %v2005
        %v2007 = vpop.f32.mrb[0].mxu0
        %v2008 = vadd.f32 0.0, %v2007
        %2009 = vmatprep.mubr.bf16.mxu0 %v1482
        %2010 = vmatmul.mubr.bf16.gmra.mrb[0].mxu0 %v1481
        %v2011 = vpop.f32.mrb[0].mxu0
        %v2012 = vadd.f32 0.0, %v2011
        %v2013 = vpop.f32.mrb[0].mxu0
        %v2014 = vadd.f32 0.0, %v2013
        %v2015 = vpop.f32.mrb[0].mxu0
        %v2016 = vadd.f32 0.0, %v2015
        %v2017 = vpop.f32.mrb[0].mxu0
        %v2018 = vadd.f32 0.0, %v2017
        %2019 = vmatprep.mubr.bf16.mxu0 %v1486
        %2020 = vmatmul.mubr.bf16.gmra.mrb[0].mxu0 %v1485
        %v2021 = vpop.f32.mrb[0].mxu0
        %v2022 = vadd.f32 0.0, %v2021
        %v2023 = vpop.f32.mrb[0].mxu0
        %v2024 = vadd.f32 0.0, %v2023
        %v2025 = vpop.f32.mrb[0].mxu0
        %v2026 = vadd.f32 0.0, %v2025
        %v2027 = vpop.f32.mrb[0].mxu0
        %v2028 = vadd.f32 0.0, %v2027
        %2029 = vmatprep.mubr.bf16.mxu0 %v1490
        %2030 = vmatmul.mubr.bf16.gmra.mrb[0].mxu0 %v1489
        %v2031 = vpop.f32.mrb[0].mxu0
        %v2032 = vadd.f32 0.0, %v2031
        %v2033 = vpop.f32.mrb[0].mxu0
        %v2034 = vadd.f32 0.0, %v2033
        %v2035 = vpop.f32.mrb[0].mxu0
        %v2036 = vadd.f32 0.0, %v2035
        %v2037 = vpop.f32.mrb[0].mxu0
        %v2038 = vadd.f32 0.0, %v2037
        %2039 = vmatprep.mubr.bf16.mxu0 %v1494
        %2040 = vmatmul.mubr.bf16.gmra.mrb[0].mxu0 %v1493
        %v2041 = vpop.f32.mrb[0].mxu0
        %v2042 = vadd.f32 0.0, %v2041
        %v2043 = vpop.f32.mrb[0].mxu0
        %v2044 = vadd.f32 0.0, %v2043
        %v2045 = vpop.f32.mrb[0].mxu0
        %v2046 = vadd.f32 0.0, %v2045
        %v2047 = vpop.f32.mrb[0].mxu0
        %v2048 = vadd.f32 0.0, %v2047
        %2049 = vmatprep.mubr.bf16.mxu0 %v1498
        %2050 = vmatmul.mubr.bf16.gmra.mrb[0].mxu0 %v1497
        %v2051 = vpop.f32.mrb[0].mxu0
        %v2052 = vadd.f32 0.0, %v2051
        %v2053 = vpop.f32.mrb[0].mxu0
        %v2054 = vadd.f32 0.0, %v2053
        %v2055 = vpop.f32.mrb[0].mxu0
        %v2056 = vadd.f32 0.0, %v2055
        %v2057 = vpop.f32.mrb[0].mxu0
        %v2058 = vadd.f32 0.0, %v2057
        %2059 = vmatprep.mubr.bf16.mxu0 %v1502
        %2060 = vmatmul.mubr.bf16.gmra.mrb[0].mxu0 %v1501
        %v2061 = vpop.f32.mrb[0].mxu0
        %v2062 = vadd.f32 0.0, %v2061
        %v2063 = vpop.f32.mrb[0].mxu0
        %v2064 = vadd.f32 0.0, %v2063
        %v2065 = vpop.f32.mrb[0].mxu0
        %v2066 = vadd.f32 0.0, %v2065
        %v2067 = vpop.f32.mrb[0].mxu0
        %v2068 = vadd.f32 0.0, %v2067
        %2069 = vmatprep.mubr.bf16.mxu0 %v1506
        %2070 = vmatmul.mubr.bf16.gmra.mrb[0].mxu0 %v1505
        %v2071 = vpop.f32.mrb[0].mxu0
        %v2072 = vadd.f32 0.0, %v2071
        %v2073 = vpop.f32.mrb[0].mxu0
        %v2074 = vadd.f32 0.0, %v2073
        %v2075 = vpop.f32.mrb[0].mxu0
        %v2076 = vadd.f32 0.0, %v2075
        %v2077 = vpop.f32.mrb[0].mxu0
        %v2078 = vadd.f32 0.0, %v2077
        %2079 = vmatprep.mubr.bf16.mxu0 %v1510
        %2080 = vmatmul.mubr.bf16.gmra.mrb[0].mxu0 %v1509
        %v2081 = vpop.f32.mrb[0].mxu0
        %v2082 = vadd.f32 0.0, %v2081
        %v2083 = vpop.f32.mrb[0].mxu0
        %v2084 = vadd.f32 0.0, %v2083
        %v2085 = vpop.f32.mrb[0].mxu0
        %v2086 = vadd.f32 0.0, %v2085
        %v2087 = vpop.f32.mrb[0].mxu0
        %v2088 = vadd.f32 0.0, %v2087
        %2089 = vdwg.mxu0
        %2090 = vmatprep.subr.bf16.mxu0 %v1772
        %2091 = vmatpush1.bf16.xpose.msra.mxu0 %v1771
        %2092 = vmatprep.subr.bf16.mxu0 %v1776
        %2093 = vmatpush1.bf16.xpose.msra.mxu0 %v1775
        %2094 = vmatprep.subr.bf16.mxu0 %v1780
        %2095 = vmatpush1.bf16.xpose.msra.mxu0 %v1779
        %2096 = vmatprep.subr.bf16.mxu0 %v1784
        %2097 = vmatpush1.bf16.xpose.msra.mxu0 %v1783
        %2098 = vmatprep.subr.bf16.mxu0 %v1788
        %2099 = vmatpush1.bf16.xpose.msra.mxu0 %v1787
        %2100 = vmatprep.subr.bf16.mxu0 %v1792
        %2101 = vmatpush1.bf16.xpose.msra.mxu0 %v1791
        %2102 = vmatprep.subr.bf16.mxu0 %v1796
        %2103 = vmatpush1.bf16.xpose.msra.mxu0 %v1795
        %2104 = vmatprep.subr.bf16.mxu0 %v1800
        %2105 = vmatpush1.bf16.xpose.msra.mxu0 %v1799
        %2106 = vmatprep.subr.bf16.mxu0 %v1804
        %2107 = vmatpush1.bf16.xpose.msra.mxu0 %v1803
        %2108 = vmatprep.subr.bf16.mxu0 %v1808
        %2109 = vmatpush1.bf16.xpose.msra.mxu0 %v1807
        %2110 = vmatprep.subr.bf16.mxu0 %v1812
        %2111 = vmatpush1.bf16.xpose.msra.mxu0 %v1811
        %2112 = vmatprep.subr.bf16.mxu0 %v1816
        %2113 = vmatpush1.bf16.xpose.msra.mxu0 %v1815
        %2114 = vmatprep.subr.bf16.mxu0 %v1820
        %2115 = vmatpush1.bf16.xpose.msra.mxu0 %v1819
        %2116 = vmatprep.subr.bf16.mxu0 %v1824
        %2117 = vmatpush1.bf16.xpose.msra.mxu0 %v1823
        %2118 = vmatprep.subr.bf16.mxu0 %v1828
        %2119 = vmatpush1.bf16.xpose.msra.mxu0 %v1827
        %2120 = vmatprep.subr.bf16.mxu0 %v1832
        %2121 = vmatpush1.bf16.xpose.msra.mxu0 %v1831
        %2122 = vmatprep.mubr.bf16.mxu0 %v1452
        %2123 = vmatmul.mubr.bf16.gmra.mrb[0].mxu0 %v1451
        %v2124 = vpop.f32.mrb[0].mxu0
        %v2125 = vadd.f32 %v1932, %v2124
        %v2126 = vpop.f32.mrb[0].mxu0
        %v2127 = vadd.f32 %v1934, %v2126
        %v2128 = vpop.f32.mrb[0].mxu0
        %v2129 = vadd.f32 %v1936, %v2128
        %v2130 = vpop.f32.mrb[0].mxu0
        %v2131 = vadd.f32 %v1938, %v2130
        %2132 = vmatprep.mubr.bf16.mxu0 %v1456
        %2133 = vmatmul.mubr.bf16.gmra.mrb[0].mxu0 %v1455
        %v2134 = vpop.f32.mrb[0].mxu0
        %v2135 = vadd.f32 %v1942, %v2134
        %v2136 = vpop.f32.mrb[0].mxu0
        %v2137 = vadd.f32 %v1944, %v2136
        %v2138 = vpop.f32.mrb[0].mxu0
        %v2139 = vadd.f32 %v1946, %v2138
        %v2140 = vpop.f32.mrb[0].mxu0
        %v2141 = vadd.f32 %v1948, %v2140
        %2142 = vmatprep.mubr.bf16.mxu0 %v1460
        %2143 = vmatmul.mubr.bf16.gmra.mrb[0].mxu0 %v1459
        %v2144 = vpop.f32.mrb[0].mxu0
        %v2145 = vadd.f32 %v1952, %v2144
        %v2146 = vpop.f32.mrb[0].mxu0
        %v2147 = vadd.f32 %v1954, %v2146
        %v2148 = vpop.f32.mrb[0].mxu0
        %v2149 = vadd.f32 %v1956, %v2148
        %v2150 = vpop.f32.mrb[0].mxu0
        %v2151 = vadd.f32 %v1958, %v2150
        %2152 = vmatprep.mubr.bf16.mxu0 %v1464
        %2153 = vmatmul.mubr.bf16.gmra.mrb[0].mxu0 %v1463
        %v2154 = vpop.f32.mrb[0].mxu0
        %v2155 = vadd.f32 %v1962, %v2154
        %v2156 = vpop.f32.mrb[0].mxu0
        %v2157 = vadd.f32 %v1964, %v2156
        %v2158 = vpop.f32.mrb[0].mxu0
        %v2159 = vadd.f32 %v1966, %v2158
        %v2160 = vpop.f32.mrb[0].mxu0
        %v2161 = vadd.f32 %v1968, %v2160
        %2162 = vmatprep.mubr.bf16.mxu0 %v1468
        %2163 = vmatmul.mubr.bf16.gmra.mrb[0].mxu0 %v1467
        %v2164 = vpop.f32.mrb[0].mxu0
        %v2165 = vadd.f32 %v1972, %v2164
        %v2166 = vpop.f32.mrb[0].mxu0
        %v2167 = vadd.f32 %v1974, %v2166
        %v2168 = vpop.f32.mrb[0].mxu0
        %v2169 = vadd.f32 %v1976, %v2168
        %v2170 = vpop.f32.mrb[0].mxu0
        %v2171 = vadd.f32 %v1978, %v2170
        %2172 = vmatprep.mubr.bf16.mxu0 %v1472
        %2173 = vmatmul.mubr.bf16.gmra.mrb[0].mxu0 %v1471
        %v2174 = vpop.f32.mrb[0].mxu0
        %v2175 = vadd.f32 %v1982, %v2174
        %v2176 = vpop.f32.mrb[0].mxu0
        %v2177 = vadd.f32 %v1984, %v2176
        %v2178 = vpop.f32.mrb[0].mxu0
        %v2179 = vadd.f32 %v1986, %v2178
        %v2180 = vpop.f32.mrb[0].mxu0
        %v2181 = vadd.f32 %v1988, %v2180
        %2182 = vmatprep.mubr.bf16.mxu0 %v1476
        %2183 = vmatmul.mubr.bf16.gmra.mrb[0].mxu0 %v1475
        %v2184 = vpop.f32.mrb[0].mxu0
        %v2185 = vadd.f32 %v1992, %v2184
        %v2186 = vpop.f32.mrb[0].mxu0
        %v2187 = vadd.f32 %v1994, %v2186
        %v2188 = vpop.f32.mrb[0].mxu0
        %v2189 = vadd.f32 %v1996, %v2188
        %v2190 = vpop.f32.mrb[0].mxu0
        %v2191 = vadd.f32 %v1998, %v2190
        %2192 = vmatprep.mubr.bf16.mxu0 %v1480
        %2193 = vmatmul.mubr.bf16.gmra.mrb[0].mxu0 %v1479
        %v2194 = vpop.f32.mrb[0].mxu0
        %v2195 = vadd.f32 %v2002, %v2194
        %v2196 = vpop.f32.mrb[0].mxu0
        %v2197 = vadd.f32 %v2004, %v2196
        %v2198 = vpop.f32.mrb[0].mxu0
        %v2199 = vadd.f32 %v2006, %v2198
        %v2200 = vpop.f32.mrb[0].mxu0
        %v2201 = vadd.f32 %v2008, %v2200
        %2202 = vmatprep.mubr.bf16.mxu0 %v1484
        %2203 = vmatmul.mubr.bf16.gmra.mrb[0].mxu0 %v1483
        %v2204 = vpop.f32.mrb[0].mxu0
        %v2205 = vadd.f32 %v2012, %v2204
        %v2206 = vpop.f32.mrb[0].mxu0
        %v2207 = vadd.f32 %v2014, %v2206
        %v2208 = vpop.f32.mrb[0].mxu0
        %v2209 = vadd.f32 %v2016, %v2208
        %v2210 = vpop.f32.mrb[0].mxu0
        %v2211 = vadd.f32 %v2018, %v2210
        %2212 = vmatprep.mubr.bf16.mxu0 %v1488
        %2213 = vmatmul.mubr.bf16.gmra.mrb[0].mxu0 %v1487
        %v2214 = vpop.f32.mrb[0].mxu0
        %v2215 = vadd.f32 %v2022, %v2214
        %v2216 = vpop.f32.mrb[0].mxu0
        %v2217 = vadd.f32 %v2024, %v2216
        %v2218 = vpop.f32.mrb[0].mxu0
        %v2219 = vadd.f32 %v2026, %v2218
        %v2220 = vpop.f32.mrb[0].mxu0
        %v2221 = vadd.f32 %v2028, %v2220
        %2222 = vmatprep.mubr.bf16.mxu0 %v1492
        %2223 = vmatmul.mubr.bf16.gmra.mrb[0].mxu0 %v1491
        %v2224 = vpop.f32.mrb[0].mxu0
        %v2225 = vadd.f32 %v2032, %v2224
        %v2226 = vpop.f32.mrb[0].mxu0
        %v2227 = vadd.f32 %v2034, %v2226
        %v2228 = vpop.f32.mrb[0].mxu0
        %v2229 = vadd.f32 %v2036, %v2228
        %v2230 = vpop.f32.mrb[0].mxu0
        %v2231 = vadd.f32 %v2038, %v2230
        %2232 = vmatprep.mubr.bf16.mxu0 %v1496
        %2233 = vmatmul.mubr.bf16.gmra.mrb[0].mxu0 %v1495
        %v2234 = vpop.f32.mrb[0].mxu0
        %v2235 = vadd.f32 %v2042, %v2234
        %v2236 = vpop.f32.mrb[0].mxu0
        %v2237 = vadd.f32 %v2044, %v2236
        %v2238 = vpop.f32.mrb[0].mxu0
        %v2239 = vadd.f32 %v2046, %v2238
        %v2240 = vpop.f32.mrb[0].mxu0
        %v2241 = vadd.f32 %v2048, %v2240
        %2242 = vmatprep.mubr.bf16.mxu0 %v1500
        %2243 = vmatmul.mubr.bf16.gmra.mrb[0].mxu0 %v1499
        %v2244 = vpop.f32.mrb[0].mxu0
        %v2245 = vadd.f32 %v2052, %v2244
        %v2246 = vpop.f32.mrb[0].mxu0
        %v2247 = vadd.f32 %v2054, %v2246
        %v2248 = vpop.f32.mrb[0].mxu0
        %v2249 = vadd.f32 %v2056, %v2248
        %v2250 = vpop.f32.mrb[0].mxu0
        %v2251 = vadd.f32 %v2058, %v2250
        %2252 = vmatprep.mubr.bf16.mxu0 %v1504
        %2253 = vmatmul.mubr.bf16.gmra.mrb[0].mxu0 %v1503
        %v2254 = vpop.f32.mrb[0].mxu0
        %v2255 = vadd.f32 %v2062, %v2254
        %v2256 = vpop.f32.mrb[0].mxu0
        %v2257 = vadd.f32 %v2064, %v2256
        %v2258 = vpop.f32.mrb[0].mxu0
        %v2259 = vadd.f32 %v2066, %v2258
        %v2260 = vpop.f32.mrb[0].mxu0
        %v2261 = vadd.f32 %v2068, %v2260
        %2262 = vmatprep.mubr.bf16.mxu0 %v1508
        %2263 = vmatmul.mubr.bf16.gmra.mrb[0].mxu0 %v1507
        %v2264 = vpop.f32.mrb[0].mxu0
        %v2265 = vadd.f32 %v2072, %v2264
        %v2266 = vpop.f32.mrb[0].mxu0
        %v2267 = vadd.f32 %v2074, %v2266
        %v2268 = vpop.f32.mrb[0].mxu0
        %v2269 = vadd.f32 %v2076, %v2268
        %v2270 = vpop.f32.mrb[0].mxu0
        %v2271 = vadd.f32 %v2078, %v2270
        %2272 = vmatprep.mubr.bf16.mxu0 %v1512
        %2273 = vmatmul.mubr.bf16.gmra.mrb[0].mxu0 %v1511
        %v2274 = vpop.f32.mrb[0].mxu0
        %v2275 = vadd.f32 %v2082, %v2274
        %v2276 = vpop.f32.mrb[0].mxu0
        %v2277 = vadd.f32 %v2084, %v2276
        %v2278 = vpop.f32.mrb[0].mxu0
        %v2279 = vadd.f32 %v2086, %v2278
        %v2280 = vpop.f32.mrb[0].mxu0
        %v2281 = vadd.f32 %v2088, %v2280
        %2282 = vdwg.mxu0
        %v2283 = vmul.f32 %v2125, 2.0
        %v2284 = vmul.f32 %v2127, 2.0
        %v2285 = vmul.f32 %v2129, 2.0
        %v2286 = vmul.f32 %v2131, 2.0
        %v2287 = vmul.f32 %v2135, 2.0
        %v2288 = vmul.f32 %v2137, 2.0
        %v2289 = vmul.f32 %v2139, 2.0
        %v2290 = vmul.f32 %v2141, 2.0
        %v2291 = vmul.f32 %v2145, 2.0
        %v2292 = vmul.f32 %v2147, 2.0
        %v2293 = vmul.f32 %v2149, 2.0
        %v2294 = vmul.f32 %v2151, 2.0
        %v2295 = vmul.f32 %v2155, 2.0
        %v2296 = vmul.f32 %v2157, 2.0
        %v2297 = vmul.f32 %v2159, 2.0
        %v2298 = vmul.f32 %v2161, 2.0
        %v2299 = vmul.f32 %v2165, 2.0
        %v2300 = vmul.f32 %v2167, 2.0
        %v2301 = vmul.f32 %v2169, 2.0
        %v2302 = vmul.f32 %v2171, 2.0
        %v2303 = vmul.f32 %v2175, 2.0
        %v2304 = vmul.f32 %v2177, 2.0
        %v2305 = vmul.f32 %v2179, 2.0
        %v2306 = vmul.f32 %v2181, 2.0
        %v2307 = vmul.f32 %v2185, 2.0
        %v2308 = vmul.f32 %v2187, 2.0
        %v2309 = vmul.f32 %v2189, 2.0
        %v2310 = vmul.f32 %v2191, 2.0
        %v2311 = vmul.f32 %v2195, 2.0
        %v2312 = vmul.f32 %v2197, 2.0
        %v2313 = vmul.f32 %v2199, 2.0
        %v2314 = vmul.f32 %v2201, 2.0
        %v2315 = vmul.f32 %v2205, 2.0
        %v2316 = vmul.f32 %v2207, 2.0
        %v2317 = vmul.f32 %v2209, 2.0
        %v2318 = vmul.f32 %v2211, 2.0
        %v2319 = vmul.f32 %v2215, 2.0
        %v2320 = vmul.f32 %v2217, 2.0
        %v2321 = vmul.f32 %v2219, 2.0
        %v2322 = vmul.f32 %v2221, 2.0
        %v2323 = vmul.f32 %v2225, 2.0
        %v2324 = vmul.f32 %v2227, 2.0
        %v2325 = vmul.f32 %v2229, 2.0
        %v2326 = vmul.f32 %v2231, 2.0
        %v2327 = vmul.f32 %v2235, 2.0
        %v2328 = vmul.f32 %v2237, 2.0
        %v2329 = vmul.f32 %v2239, 2.0
        %v2330 = vmul.f32 %v2241, 2.0
        %v2331 = vmul.f32 %v2245, 2.0
        %v2332 = vmul.f32 %v2247, 2.0
        %v2333 = vmul.f32 %v2249, 2.0
        %v2334 = vmul.f32 %v2251, 2.0
        %v2335 = vmul.f32 %v2255, 2.0
        %v2336 = vmul.f32 %v2257, 2.0
        %v2337 = vmul.f32 %v2259, 2.0
        %v2338 = vmul.f32 %v2261, 2.0
        %v2339 = vmul.f32 %v2265, 2.0
        %v2340 = vmul.f32 %v2267, 2.0
        %v2341 = vmul.f32 %v2269, 2.0
        %v2342 = vmul.f32 %v2271, 2.0
        %v2343 = vmul.f32 %v2275, 2.0
        %v2344 = vmul.f32 %v2277, 2.0
        %v2345 = vmul.f32 %v2279, 2.0
        %v2346 = vmul.f32 %v2281, 2.0
        %v2347 = vmul.f32 %v2283, 1.442695
        %v2348 = vpow.pop %v2347
        %v2349 = vmul.f32 %v2284, 1.442695
        %v2350 = vpow.pop %v2349
        %v2351 = vmul.f32 %v2285, 1.442695
        %v2352 = vpow.pop %v2351
        %v2353 = vmul.f32 %v2286, 1.442695
        %v2354 = vpow.pop %v2353
        %v2355 = vmul.f32 %v2287, 1.442695
        %v2356 = vpow.pop %v2355
        %v2357 = vmul.f32 %v2288, 1.442695
        %v2358 = vpow.pop %v2357
        %v2359 = vmul.f32 %v2289, 1.442695
        %v2360 = vpow.pop %v2359
        %v2361 = vmul.f32 %v2290, 1.442695
        %v2362 = vpow.pop %v2361
        %v2363 = vmul.f32 %v2291, 1.442695
        %v2364 = vpow.pop %v2363
        %v2365 = vmul.f32 %v2292, 1.442695
        %v2366 = vpow.pop %v2365
        %v2367 = vmul.f32 %v2293, 1.442695
        %v2368 = vpow.pop %v2367
        %v2369 = vmul.f32 %v2294, 1.442695
        %v2370 = vpow.pop %v2369
        %v2371 = vmul.f32 %v2295, 1.442695
        %v2372 = vpow.pop %v2371
        %v2373 = vmul.f32 %v2296, 1.442695
        %v2374 = vpow.pop %v2373
        %v2375 = vmul.f32 %v2297, 1.442695
        %v2376 = vpow.pop %v2375
        %v2377 = vmul.f32 %v2298, 1.442695
        %v2378 = vpow.pop %v2377
        %v2379 = vmul.f32 %v2299, 1.442695
        %v2380 = vpow.pop %v2379
        %v2381 = vmul.f32 %v2300, 1.442695
        %v2382 = vpow.pop %v2381
        %v2383 = vmul.f32 %v2301, 1.442695
        %v2384 = vpow.pop %v2383
        %v2385 = vmul.f32 %v2302, 1.442695
        %v2386 = vpow.pop %v2385
        %v2387 = vmul.f32 %v2303, 1.442695
        %v2388 = vpow.pop %v2387
        %v2389 = vmul.f32 %v2304, 1.442695
        %v2390 = vpow.pop %v2389
        %v2391 = vmul.f32 %v2305, 1.442695
        %v2392 = vpow.pop %v2391
        %v2393 = vmul.f32 %v2306, 1.442695
        %v2394 = vpow.pop %v2393
        %v2395 = vmul.f32 %v2307, 1.442695
        %v2396 = vpow.pop %v2395
        %v2397 = vmul.f32 %v2308, 1.442695
        %v2398 = vpow.pop %v2397
        %v2399 = vmul.f32 %v2309, 1.442695
        %v2400 = vpow.pop %v2399
        %v2401 = vmul.f32 %v2310, 1.442695
        %v2402 = vpow.pop %v2401
        %v2403 = vmul.f32 %v2311, 1.442695
        %v2404 = vpow.pop %v2403
        %v2405 = vmul.f32 %v2312, 1.442695
        %v2406 = vpow.pop %v2405
        %v2407 = vmul.f32 %v2313, 1.442695
        %v2408 = vpow.pop %v2407
        %v2409 = vmul.f32 %v2314, 1.442695
        %v2410 = vpow.pop %v2409
        %v2411 = vmul.f32 %v2315, 1.442695
        %v2412 = vpow.pop %v2411
        %v2413 = vmul.f32 %v2316, 1.442695
        %v2414 = vpow.pop %v2413
        %v2415 = vmul.f32 %v2317, 1.442695
        %v2416 = vpow.pop %v2415
        %v2417 = vmul.f32 %v2318, 1.442695
        %v2418 = vpow.pop %v2417
        %v2419 = vmul.f32 %v2319, 1.442695
        %v2420 = vpow.pop %v2419
        %v2421 = vmul.f32 %v2320, 1.442695
        %v2422 = vpow.pop %v2421
        %v2423 = vmul.f32 %v2321, 1.442695
        %v2424 = vpow.pop %v2423
        %v2425 = vmul.f32 %v2322, 1.442695
        %v2426 = vpow.pop %v2425
        %v2427 = vmul.f32 %v2323, 1.442695
        %v2428 = vpow.pop %v2427
        %v2429 = vmul.f32 %v2324, 1.442695
        %v2430 = vpow.pop %v2429
        %v2431 = vmul.f32 %v2325, 1.442695
        %v2432 = vpow.pop %v2431
        %v2433 = vmul.f32 %v2326, 1.442695
        %v2434 = vpow.pop %v2433
        %v2435 = vmul.f32 %v2327, 1.442695
        %v2436 = vpow.pop %v2435
        %v2437 = vmul.f32 %v2328, 1.442695
        %v2438 = vpow.pop %v2437
        %v2439 = vmul.f32 %v2329, 1.442695
        %v2440 = vpow.pop %v2439
        %v2441 = vmul.f32 %v2330, 1.442695
        %v2442 = vpow.pop %v2441
        %v2443 = vmul.f32 %v2331, 1.442695
        %v2444 = vpow.pop %v2443
        %v2445 = vmul.f32 %v2332, 1.442695
        %v2446 = vpow.pop %v2445
        %v2447 = vmul.f32 %v2333, 1.442695
        %v2448 = vpow.pop %v2447
        %v2449 = vmul.f32 %v2334, 1.442695
        %v2450 = vpow.pop %v2449
        %v2451 = vmul.f32 %v2335, 1.442695
        %v2452 = vpow.pop %v2451
        %v2453 = vmul.f32 %v2336, 1.442695
        %v2454 = vpow.pop %v2453
        %v2455 = vmul.f32 %v2337, 1.442695
        %v2456 = vpow.pop %v2455
        %v2457 = vmul.f32 %v2338, 1.442695
        %v2458 = vpow.pop %v2457
        %v2459 = vmul.f32 %v2339, 1.442695
        %v2460 = vpow.pop %v2459
        %v2461 = vmul.f32 %v2340, 1.442695
        %v2462 = vpow.pop %v2461
        %v2463 = vmul.f32 %v2341, 1.442695
        %v2464 = vpow.pop %v2463
        %v2465 = vmul.f32 %v2342, 1.442695
        %v2466 = vpow.pop %v2465
        %v2467 = vmul.f32 %v2343, 1.442695
        %v2468 = vpow.pop %v2467
        %v2469 = vmul.f32 %v2344, 1.442695
        %v2470 = vpow.pop %v2469
        %v2471 = vmul.f32 %v2345, 1.442695
        %v2472 = vpow.pop %v2471
        %v2473 = vmul.f32 %v2346, 1.442695
        %v2474 = vpow.pop %v2473
        %v2539 = vunpack.c.l.b16 %v1131
        %v2540 = vunpack.c.h.b16 %v1131
        %v2541 = vunpack.c.l.b16 %v1132
        %v2542 = vunpack.c.h.b16 %v1132
        %v2543 = vunpack.c.l.b16 %v1135
        %v2544 = vunpack.c.h.b16 %v1135
        %v2545 = vunpack.c.l.b16 %v1136
        %v2546 = vunpack.c.h.b16 %v1136
        %v2547 = vunpack.c.l.b16 %v1139
        %v2548 = vunpack.c.h.b16 %v1139
        %v2549 = vunpack.c.l.b16 %v1140
        %v2550 = vunpack.c.h.b16 %v1140
        %v2551 = vunpack.c.l.b16 %v1143
        %v2552 = vunpack.c.h.b16 %v1143
        %v2553 = vunpack.c.l.b16 %v1144
        %v2554 = vunpack.c.h.b16 %v1144
        %v2555 = vunpack.c.l.b16 %v1147
        %v2556 = vunpack.c.h.b16 %v1147
        %v2557 = vunpack.c.l.b16 %v1148
        %v2558 = vunpack.c.h.b16 %v1148
        %v2559 = vunpack.c.l.b16 %v1151
        %v2560 = vunpack.c.h.b16 %v1151
        %v2561 = vunpack.c.l.b16 %v1152
        %v2562 = vunpack.c.h.b16 %v1152
        %v2563 = vunpack.c.l.b16 %v1155
        %v2564 = vunpack.c.h.b16 %v1155
        %v2565 = vunpack.c.l.b16 %v1156
        %v2566 = vunpack.c.h.b16 %v1156
        %v2567 = vunpack.c.l.b16 %v1159
        %v2568 = vunpack.c.h.b16 %v1159
        %v2569 = vunpack.c.l.b16 %v1160
        %v2570 = vunpack.c.h.b16 %v1160
        %v2571 = vunpack.c.l.b16 %v1163
        %v2572 = vunpack.c.h.b16 %v1163
        %v2573 = vunpack.c.l.b16 %v1164
        %v2574 = vunpack.c.h.b16 %v1164
        %v2575 = vunpack.c.l.b16 %v1167
        %v2576 = vunpack.c.h.b16 %v1167
        %v2577 = vunpack.c.l.b16 %v1168
        %v2578 = vunpack.c.h.b16 %v1168
        %v2579 = vunpack.c.l.b16 %v1171
        %v2580 = vunpack.c.h.b16 %v1171
        %v2581 = vunpack.c.l.b16 %v1172
        %v2582 = vunpack.c.h.b16 %v1172
        %v2583 = vunpack.c.l.b16 %v1175
        %v2584 = vunpack.c.h.b16 %v1175
        %v2585 = vunpack.c.l.b16 %v1176
        %v2586 = vunpack.c.h.b16 %v1176
        %v2587 = vunpack.c.l.b16 %v1179
        %v2588 = vunpack.c.h.b16 %v1179
        %v2589 = vunpack.c.l.b16 %v1180
        %v2590 = vunpack.c.h.b16 %v1180
        %v2591 = vunpack.c.l.b16 %v1183
        %v2592 = vunpack.c.h.b16 %v1183
        %v2593 = vunpack.c.l.b16 %v1184
        %v2594 = vunpack.c.h.b16 %v1184
        %v2595 = vunpack.c.l.b16 %v1187
        %v2596 = vunpack.c.h.b16 %v1187
        %v2597 = vunpack.c.l.b16 %v1188
        %v2598 = vunpack.c.h.b16 %v1188
        %v2599 = vunpack.c.l.b16 %v1191
        %v2600 = vunpack.c.h.b16 %v1191
        %v2601 = vunpack.c.l.b16 %v1192
        %v2602 = vunpack.c.h.b16 %v1192
        %v2603 = vunpack.c.l.b16 %v1195
        %v2604 = vunpack.c.h.b16 %v1195
        %v2605 = vunpack.c.l.b16 %v1196
        %v2606 = vunpack.c.h.b16 %v1196
        %v2607 = vunpack.c.l.b16 %v1199
        %v2608 = vunpack.c.h.b16 %v1199
        %v2609 = vunpack.c.l.b16 %v1200
        %v2610 = vunpack.c.h.b16 %v1200
        %v2611 = vunpack.c.l.b16 %v1203
        %v2612 = vunpack.c.h.b16 %v1203
        %v2613 = vunpack.c.l.b16 %v1204
        %v2614 = vunpack.c.h.b16 %v1204
        %v2615 = vunpack.c.l.b16 %v1207
        %v2616 = vunpack.c.h.b16 %v1207
        %v2617 = vunpack.c.l.b16 %v1208
        %v2618 = vunpack.c.h.b16 %v1208
        %v2619 = vunpack.c.l.b16 %v1211
        %v2620 = vunpack.c.h.b16 %v1211
        %v2621 = vunpack.c.l.b16 %v1212
        %v2622 = vunpack.c.h.b16 %v1212
        %v2623 = vunpack.c.l.b16 %v1215
        %v2624 = vunpack.c.h.b16 %v1215
        %v2625 = vunpack.c.l.b16 %v1216
        %v2626 = vunpack.c.h.b16 %v1216
        %v2627 = vunpack.c.l.b16 %v1219
        %v2628 = vunpack.c.h.b16 %v1219
        %v2629 = vunpack.c.l.b16 %v1220
        %v2630 = vunpack.c.h.b16 %v1220
        %v2631 = vunpack.c.l.b16 %v1223
        %v2632 = vunpack.c.h.b16 %v1223
        %v2633 = vunpack.c.l.b16 %v1224
        %v2634 = vunpack.c.h.b16 %v1224
        %v2635 = vunpack.c.l.b16 %v1227
        %v2636 = vunpack.c.h.b16 %v1227
        %v2637 = vunpack.c.l.b16 %v1228
        %v2638 = vunpack.c.h.b16 %v1228
        %v2639 = vunpack.c.l.b16 %v1231
        %v2640 = vunpack.c.h.b16 %v1231
        %v2641 = vunpack.c.l.b16 %v1232
        %v2642 = vunpack.c.h.b16 %v1232
        %v2643 = vunpack.c.l.b16 %v1235
        %v2644 = vunpack.c.h.b16 %v1235
        %v2645 = vunpack.c.l.b16 %v1236
        %v2646 = vunpack.c.h.b16 %v1236
        %v2647 = vunpack.c.l.b16 %v1239
        %v2648 = vunpack.c.h.b16 %v1239
        %v2649 = vunpack.c.l.b16 %v1240
        %v2650 = vunpack.c.h.b16 %v1240
        %v2651 = vunpack.c.l.b16 %v1243
        %v2652 = vunpack.c.h.b16 %v1243
        %v2653 = vunpack.c.l.b16 %v1244
        %v2654 = vunpack.c.h.b16 %v1244
        %v2655 = vunpack.c.l.b16 %v1247
        %v2656 = vunpack.c.h.b16 %v1247
        %v2657 = vunpack.c.l.b16 %v1248
        %v2658 = vunpack.c.h.b16 %v1248
        %v2659 = vunpack.c.l.b16 %v1251
        %v2660 = vunpack.c.h.b16 %v1251
        %v2661 = vunpack.c.l.b16 %v1252
        %v2662 = vunpack.c.h.b16 %v1252
        %v2663 = vunpack.c.l.b16 %v1255
        %v2664 = vunpack.c.h.b16 %v1255
        %v2665 = vunpack.c.l.b16 %v1256
        %v2666 = vunpack.c.h.b16 %v1256
        %v2667 = vpack.c.b16 %v2543, %v2539
        %v2668 = vpack.c.b16 %v2544, %v2540
        %v2669 = vpack.c.b16 %v2545, %v2541
        %v2670 = vpack.c.b16 %v2546, %v2542
        %v2671 = vpack.c.b16 %v2551, %v2547
        %v2672 = vpack.c.b16 %v2552, %v2548
        %v2673 = vpack.c.b16 %v2553, %v2549
        %v2674 = vpack.c.b16 %v2554, %v2550
        %v2675 = vpack.c.b16 %v2559, %v2555
        %v2676 = vpack.c.b16 %v2560, %v2556
        %v2677 = vpack.c.b16 %v2561, %v2557
        %v2678 = vpack.c.b16 %v2562, %v2558
        %v2679 = vpack.c.b16 %v2567, %v2563
        %v2680 = vpack.c.b16 %v2568, %v2564
        %v2681 = vpack.c.b16 %v2569, %v2565
        %v2682 = vpack.c.b16 %v2570, %v2566
        %v2683 = vpack.c.b16 %v2575, %v2571
        %v2684 = vpack.c.b16 %v2576, %v2572
        %v2685 = vpack.c.b16 %v2577, %v2573
        %v2686 = vpack.c.b16 %v2578, %v2574
        %v2687 = vpack.c.b16 %v2583, %v2579
        %v2688 = vpack.c.b16 %v2584, %v2580
        %v2689 = vpack.c.b16 %v2585, %v2581
        %v2690 = vpack.c.b16 %v2586, %v2582
        %v2691 = vpack.c.b16 %v2591, %v2587
        %v2692 = vpack.c.b16 %v2592, %v2588
        %v2693 = vpack.c.b16 %v2593, %v2589
        %v2694 = vpack.c.b16 %v2594, %v2590
        %v2695 = vpack.c.b16 %v2599, %v2595
        %v2696 = vpack.c.b16 %v2600, %v2596
        %v2697 = vpack.c.b16 %v2601, %v2597
        %v2698 = vpack.c.b16 %v2602, %v2598
        %v2699 = vpack.c.b16 %v2607, %v2603
        %v2700 = vpack.c.b16 %v2608, %v2604
        %v2701 = vpack.c.b16 %v2609, %v2605
        %v2702 = vpack.c.b16 %v2610, %v2606
        %v2703 = vpack.c.b16 %v2615, %v2611
        %v2704 = vpack.c.b16 %v2616, %v2612
        %v2705 = vpack.c.b16 %v2617, %v2613
        %v2706 = vpack.c.b16 %v2618, %v2614
        %v2707 = vpack.c.b16 %v2623, %v2619
        %v2708 = vpack.c.b16 %v2624, %v2620
        %v2709 = vpack.c.b16 %v2625, %v2621
        %v2710 = vpack.c.b16 %v2626, %v2622
        %v2711 = vpack.c.b16 %v2631, %v2627
        %v2712 = vpack.c.b16 %v2632, %v2628
        %v2713 = vpack.c.b16 %v2633, %v2629
        %v2714 = vpack.c.b16 %v2634, %v2630
        %v2715 = vpack.c.b16 %v2639, %v2635
        %v2716 = vpack.c.b16 %v2640, %v2636
        %v2717 = vpack.c.b16 %v2641, %v2637
        %v2718 = vpack.c.b16 %v2642, %v2638
        %v2719 = vpack.c.b16 %v2647, %v2643
        %v2720 = vpack.c.b16 %v2648, %v2644
        %v2721 = vpack.c.b16 %v2649, %v2645
        %v2722 = vpack.c.b16 %v2650, %v2646
        %v2723 = vpack.c.b16 %v2655, %v2651
        %v2724 = vpack.c.b16 %v2656, %v2652
        %v2725 = vpack.c.b16 %v2657, %v2653
        %v2726 = vpack.c.b16 %v2658, %v2654
        %v2727 = vpack.c.b16 %v2663, %v2659
        %v2728 = vpack.c.b16 %v2664, %v2660
        %v2729 = vpack.c.b16 %v2665, %v2661
        %v2730 = vpack.c.b16 %v2666, %v2662
        %2795 = vmatprep.subr.bf16.mxu0 %v1770
        %2796 = vmatpush1.bf16.xpose.msra.mxu0 %v1769
        %2797 = vmatprep.subr.bf16.mxu0 %v1774
        %2798 = vmatpush1.bf16.xpose.msra.mxu0 %v1773
        %2799 = vmatprep.subr.bf16.mxu0 %v1778
        %2800 = vmatpush1.bf16.xpose.msra.mxu0 %v1777
        %2801 = vmatprep.subr.bf16.mxu0 %v1782
        %2802 = vmatpush1.bf16.xpose.msra.mxu0 %v1781
        %2803 = vmatprep.subr.bf16.mxu0 %v1786
        %2804 = vmatpush1.bf16.xpose.msra.mxu0 %v1785
        %2805 = vmatprep.subr.bf16.mxu0 %v1790
        %2806 = vmatpush1.bf16.xpose.msra.mxu0 %v1789
        %2807 = vmatprep.subr.bf16.mxu0 %v1794
        %2808 = vmatpush1.bf16.xpose.msra.mxu0 %v1793
        %2809 = vmatprep.subr.bf16.mxu0 %v1798
        %2810 = vmatpush1.bf16.xpose.msra.mxu0 %v1797
        %2811 = vmatprep.subr.bf16.mxu0 %v1802
        %2812 = vmatpush1.bf16.xpose.msra.mxu0 %v1801
        %2813 = vmatprep.subr.bf16.mxu0 %v1806
        %2814 = vmatpush1.bf16.xpose.msra.mxu0 %v1805
        %2815 = vmatprep.subr.bf16.mxu0 %v1810
        %2816 = vmatpush1.bf16.xpose.msra.mxu0 %v1809
        %2817 = vmatprep.subr.bf16.mxu0 %v1814
        %2818 = vmatpush1.bf16.xpose.msra.mxu0 %v1813
        %2819 = vmatprep.subr.bf16.mxu0 %v1818
        %2820 = vmatpush1.bf16.xpose.msra.mxu0 %v1817
        %2821 = vmatprep.subr.bf16.mxu0 %v1822
        %2822 = vmatpush1.bf16.xpose.msra.mxu0 %v1821
        %2823 = vmatprep.subr.bf16.mxu0 %v1826
        %2824 = vmatpush1.bf16.xpose.msra.mxu0 %v1825
        %2825 = vmatprep.subr.bf16.mxu0 %v1830
        %2826 = vmatpush1.bf16.xpose.msra.mxu0 %v1829
        %2827 = vmatprep.mubr.bf16.mxu0 %v2668
        %2828 = vmatmul.mubr.bf16.gmra.mrb[0].mxu0 %v2667
        %v2829 = vpop.f32.mrb[0].mxu0
        %v2830 = vadd.f32 0.0, %v2829
        %v2831 = vpop.f32.mrb[0].mxu0
        %v2832 = vadd.f32 0.0, %v2831
        %v2833 = vpop.f32.mrb[0].mxu0
        %v2834 = vadd.f32 0.0, %v2833
        %v2835 = vpop.f32.mrb[0].mxu0
        %v2836 = vadd.f32 0.0, %v2835
        %2837 = vmatprep.mubr.bf16.mxu0 %v2672
        %2838 = vmatmul.mubr.bf16.gmra.mrb[0].mxu0 %v2671
        %v2839 = vpop.f32.mrb[0].mxu0
        %v2840 = vadd.f32 0.0, %v2839
        %v2841 = vpop.f32.mrb[0].mxu0
        %v2842 = vadd.f32 0.0, %v2841
        %v2843 = vpop.f32.mrb[0].mxu0
        %v2844 = vadd.f32 0.0, %v2843
        %v2845 = vpop.f32.mrb[0].mxu0
        %v2846 = vadd.f32 0.0, %v2845
        %2847 = vmatprep.mubr.bf16.mxu0 %v2676
        %2848 = vmatmul.mubr.bf16.gmra.mrb[0].mxu0 %v2675
        %v2849 = vpop.f32.mrb[0].mxu0
        %v2850 = vadd.f32 0.0, %v2849
        %v2851 = vpop.f32.mrb[0].mxu0
        %v2852 = vadd.f32 0.0, %v2851
        %v2853 = vpop.f32.mrb[0].mxu0
        %v2854 = vadd.f32 0.0, %v2853
        %v2855 = vpop.f32.mrb[0].mxu0
        %v2856 = vadd.f32 0.0, %v2855
        %2857 = vmatprep.mubr.bf16.mxu0 %v2680
        %2858 = vmatmul.mubr.bf16.gmra.mrb[0].mxu0 %v2679
        %v2859 = vpop.f32.mrb[0].mxu0
        %v2860 = vadd.f32 0.0, %v2859
        %v2861 = vpop.f32.mrb[0].mxu0
        %v2862 = vadd.f32 0.0, %v2861
        %v2863 = vpop.f32.mrb[0].mxu0
        %v2864 = vadd.f32 0.0, %v2863
        %v2865 = vpop.f32.mrb[0].mxu0
        %v2866 = vadd.f32 0.0, %v2865
        %2867 = vmatprep.mubr.bf16.mxu0 %v2684
        %2868 = vmatmul.mubr.bf16.gmra.mrb[0].mxu0 %v2683
        %v2869 = vpop.f32.mrb[0].mxu0
        %v2870 = vadd.f32 0.0, %v2869
        %v2871 = vpop.f32.mrb[0].mxu0
        %v2872 = vadd.f32 0.0, %v2871
        %v2873 = vpop.f32.mrb[0].mxu0
        %v2874 = vadd.f32 0.0, %v2873
        %v2875 = vpop.f32.mrb[0].mxu0
        %v2876 = vadd.f32 0.0, %v2875
        %2877 = vmatprep.mubr.bf16.mxu0 %v2688
        %2878 = vmatmul.mubr.bf16.gmra.mrb[0].mxu0 %v2687
        %v2879 = vpop.f32.mrb[0].mxu0
        %v2880 = vadd.f32 0.0, %v2879
        %v2881 = vpop.f32.mrb[0].mxu0
        %v2882 = vadd.f32 0.0, %v2881
        %v2883 = vpop.f32.mrb[0].mxu0
        %v2884 = vadd.f32 0.0, %v2883
        %v2885 = vpop.f32.mrb[0].mxu0
        %v2886 = vadd.f32 0.0, %v2885
        %2887 = vmatprep.mubr.bf16.mxu0 %v2692
        %2888 = vmatmul.mubr.bf16.gmra.mrb[0].mxu0 %v2691
        %v2889 = vpop.f32.mrb[0].mxu0
        %v2890 = vadd.f32 0.0, %v2889
        %v2891 = vpop.f32.mrb[0].mxu0
        %v2892 = vadd.f32 0.0, %v2891
        %v2893 = vpop.f32.mrb[0].mxu0
        %v2894 = vadd.f32 0.0, %v2893
        %v2895 = vpop.f32.mrb[0].mxu0
        %v2896 = vadd.f32 0.0, %v2895
        %2897 = vmatprep.mubr.bf16.mxu0 %v2696
        %2898 = vmatmul.mubr.bf16.gmra.mrb[0].mxu0 %v2695
        %v2899 = vpop.f32.mrb[0].mxu0
        %v2900 = vadd.f32 0.0, %v2899
        %v2901 = vpop.f32.mrb[0].mxu0
        %v2902 = vadd.f32 0.0, %v2901
        %v2903 = vpop.f32.mrb[0].mxu0
        %v2904 = vadd.f32 0.0, %v2903
        %v2905 = vpop.f32.mrb[0].mxu0
        %v2906 = vadd.f32 0.0, %v2905
        %2907 = vmatprep.mubr.bf16.mxu0 %v2700
        %2908 = vmatmul.mubr.bf16.gmra.mrb[0].mxu0 %v2699
        %v2909 = vpop.f32.mrb[0].mxu0
        %v2910 = vadd.f32 0.0, %v2909
        %v2911 = vpop.f32.mrb[0].mxu0
        %v2912 = vadd.f32 0.0, %v2911
        %v2913 = vpop.f32.mrb[0].mxu0
        %v2914 = vadd.f32 0.0, %v2913
        %v2915 = vpop.f32.mrb[0].mxu0
        %v2916 = vadd.f32 0.0, %v2915
        %2917 = vmatprep.mubr.bf16.mxu0 %v2704
        %2918 = vmatmul.mubr.bf16.gmra.mrb[0].mxu0 %v2703
        %v2919 = vpop.f32.mrb[0].mxu0
        %v2920 = vadd.f32 0.0, %v2919
        %v2921 = vpop.f32.mrb[0].mxu0
        %v2922 = vadd.f32 0.0, %v2921
        %v2923 = vpop.f32.mrb[0].mxu0
        %v2924 = vadd.f32 0.0, %v2923
        %v2925 = vpop.f32.mrb[0].mxu0
        %v2926 = vadd.f32 0.0, %v2925
        %2927 = vmatprep.mubr.bf16.mxu0 %v2708
        %2928 = vmatmul.mubr.bf16.gmra.mrb[0].mxu0 %v2707
        %v2929 = vpop.f32.mrb[0].mxu0
        %v2930 = vadd.f32 0.0, %v2929
        %v2931 = vpop.f32.mrb[0].mxu0
        %v2932 = vadd.f32 0.0, %v2931
        %v2933 = vpop.f32.mrb[0].mxu0
        %v2934 = vadd.f32 0.0, %v2933
        %v2935 = vpop.f32.mrb[0].mxu0
        %v2936 = vadd.f32 0.0, %v2935
        %2937 = vmatprep.mubr.bf16.mxu0 %v2712
        %2938 = vmatmul.mubr.bf16.gmra.mrb[0].mxu0 %v2711
        %v2939 = vpop.f32.mrb[0].mxu0
        %v2940 = vadd.f32 0.0, %v2939
        %v2941 = vpop.f32.mrb[0].mxu0
        %v2942 = vadd.f32 0.0, %v2941
        %v2943 = vpop.f32.mrb[0].mxu0
        %v2944 = vadd.f32 0.0, %v2943
        %v2945 = vpop.f32.mrb[0].mxu0
        %v2946 = vadd.f32 0.0, %v2945
        %2947 = vmatprep.mubr.bf16.mxu0 %v2716
        %2948 = vmatmul.mubr.bf16.gmra.mrb[0].mxu0 %v2715
        %v2949 = vpop.f32.mrb[0].mxu0
        %v2950 = vadd.f32 0.0, %v2949
        %v2951 = vpop.f32.mrb[0].mxu0
        %v2952 = vadd.f32 0.0, %v2951
        %v2953 = vpop.f32.mrb[0].mxu0
        %v2954 = vadd.f32 0.0, %v2953
        %v2955 = vpop.f32.mrb[0].mxu0
        %v2956 = vadd.f32 0.0, %v2955
        %2957 = vmatprep.mubr.bf16.mxu0 %v2720
        %2958 = vmatmul.mubr.bf16.gmra.mrb[0].mxu0 %v2719
        %v2959 = vpop.f32.mrb[0].mxu0
        %v2960 = vadd.f32 0.0, %v2959
        %v2961 = vpop.f32.mrb[0].mxu0
        %v2962 = vadd.f32 0.0, %v2961
        %v2963 = vpop.f32.mrb[0].mxu0
        %v2964 = vadd.f32 0.0, %v2963
        %v2965 = vpop.f32.mrb[0].mxu0
        %v2966 = vadd.f32 0.0, %v2965
        %2967 = vmatprep.mubr.bf16.mxu0 %v2724
        %2968 = vmatmul.mubr.bf16.gmra.mrb[0].mxu0 %v2723
        %v2969 = vpop.f32.mrb[0].mxu0
        %v2970 = vadd.f32 0.0, %v2969
        %v2971 = vpop.f32.mrb[0].mxu0
        %v2972 = vadd.f32 0.0, %v2971
        %v2973 = vpop.f32.mrb[0].mxu0
        %v2974 = vadd.f32 0.0, %v2973
        %v2975 = vpop.f32.mrb[0].mxu0
        %v2976 = vadd.f32 0.0, %v2975
        %2977 = vmatprep.mubr.bf16.mxu0 %v2728
        %2978 = vmatmul.mubr.bf16.gmra.mrb[0].mxu0 %v2727
        %v2979 = vpop.f32.mrb[0].mxu0
        %v2980 = vadd.f32 0.0, %v2979
        %v2981 = vpop.f32.mrb[0].mxu0
        %v2982 = vadd.f32 0.0, %v2981
        %v2983 = vpop.f32.mrb[0].mxu0
        %v2984 = vadd.f32 0.0, %v2983
        %v2985 = vpop.f32.mrb[0].mxu0
        %v2986 = vadd.f32 0.0, %v2985
        %2987 = vdwg.mxu0
        %2988 = vmatprep.subr.bf16.mxu0 %v1772
        %2989 = vmatpush1.bf16.xpose.msra.mxu0 %v1771
        %2990 = vmatprep.subr.bf16.mxu0 %v1776
        %2991 = vmatpush1.bf16.xpose.msra.mxu0 %v1775
        %2992 = vmatprep.subr.bf16.mxu0 %v1780
        %2993 = vmatpush1.bf16.xpose.msra.mxu0 %v1779
        %2994 = vmatprep.subr.bf16.mxu0 %v1784
        %2995 = vmatpush1.bf16.xpose.msra.mxu0 %v1783
        %2996 = vmatprep.subr.bf16.mxu0 %v1788
        %2997 = vmatpush1.bf16.xpose.msra.mxu0 %v1787
        %2998 = vmatprep.subr.bf16.mxu0 %v1792
        %2999 = vmatpush1.bf16.xpose.msra.mxu0 %v1791
        %3000 = vmatprep.subr.bf16.mxu0 %v1796
        %3001 = vmatpush1.bf16.xpose.msra.mxu0 %v1795
        %3002 = vmatprep.subr.bf16.mxu0 %v1800
        %3003 = vmatpush1.bf16.xpose.msra.mxu0 %v1799
        %3004 = vmatprep.subr.bf16.mxu0 %v1804
        %3005 = vmatpush1.bf16.xpose.msra.mxu0 %v1803
        %3006 = vmatprep.subr.bf16.mxu0 %v1808
        %3007 = vmatpush1.bf16.xpose.msra.mxu0 %v1807
        %3008 = vmatprep.subr.bf16.mxu0 %v1812
        %3009 = vmatpush1.bf16.xpose.msra.mxu0 %v1811
        %3010 = vmatprep.subr.bf16.mxu0 %v1816
        %3011 = vmatpush1.bf16.xpose.msra.mxu0 %v1815
        %3012 = vmatprep.subr.bf16.mxu0 %v1820
        %3013 = vmatpush1.bf16.xpose.msra.mxu0 %v1819
        %3014 = vmatprep.subr.bf16.mxu0 %v1824
        %3015 = vmatpush1.bf16.xpose.msra.mxu0 %v1823
        %3016 = vmatprep.subr.bf16.mxu0 %v1828
        %3017 = vmatpush1.bf16.xpose.msra.mxu0 %v1827
        %3018 = vmatprep.subr.bf16.mxu0 %v1832
        %3019 = vmatpush1.bf16.xpose.msra.mxu0 %v1831
        %3020 = vmatprep.mubr.bf16.mxu0 %v2670
        %3021 = vmatmul.mubr.bf16.gmra.mrb[0].mxu0 %v2669
        %v3022 = vpop.f32.mrb[0].mxu0
        %v3023 = vadd.f32 %v2830, %v3022
        %v3024 = vpop.f32.mrb[0].mxu0
        %v3025 = vadd.f32 %v2832, %v3024
        %v3026 = vpop.f32.mrb[0].mxu0
        %v3027 = vadd.f32 %v2834, %v3026
        %v3028 = vpop.f32.mrb[0].mxu0
        %v3029 = vadd.f32 %v2836, %v3028
        %3030 = vmatprep.mubr.bf16.mxu0 %v2674
        %3031 = vmatmul.mubr.bf16.gmra.mrb[0].mxu0 %v2673
        %v3032 = vpop.f32.mrb[0].mxu0
        %v3033 = vadd.f32 %v2840, %v3032
        %v3034 = vpop.f32.mrb[0].mxu0
        %v3035 = vadd.f32 %v2842, %v3034
        %v3036 = vpop.f32.mrb[0].mxu0
        %v3037 = vadd.f32 %v2844, %v3036
        %v3038 = vpop.f32.mrb[0].mxu0
        %v3039 = vadd.f32 %v2846, %v3038
        %3040 = vmatprep.mubr.bf16.mxu0 %v2678
        %3041 = vmatmul.mubr.bf16.gmra.mrb[0].mxu0 %v2677
        %v3042 = vpop.f32.mrb[0].mxu0
        %v3043 = vadd.f32 %v2850, %v3042
        %v3044 = vpop.f32.mrb[0].mxu0
        %v3045 = vadd.f32 %v2852, %v3044
        %v3046 = vpop.f32.mrb[0].mxu0
        %v3047 = vadd.f32 %v2854, %v3046
        %v3048 = vpop.f32.mrb[0].mxu0
        %v3049 = vadd.f32 %v2856, %v3048
        %3050 = vmatprep.mubr.bf16.mxu0 %v2682
        %3051 = vmatmul.mubr.bf16.gmra.mrb[0].mxu0 %v2681
        %v3052 = vpop.f32.mrb[0].mxu0
        %v3053 = vadd.f32 %v2860, %v3052
        %v3054 = vpop.f32.mrb[0].mxu0
        %v3055 = vadd.f32 %v2862, %v3054
        %v3056 = vpop.f32.mrb[0].mxu0
        %v3057 = vadd.f32 %v2864, %v3056
        %v3058 = vpop.f32.mrb[0].mxu0
        %v3059 = vadd.f32 %v2866, %v3058
        %3060 = vmatprep.mubr.bf16.mxu0 %v2686
        %3061 = vmatmul.mubr.bf16.gmra.mrb[0].mxu0 %v2685
        %v3062 = vpop.f32.mrb[0].mxu0
        %v3063 = vadd.f32 %v2870, %v3062
        %v3064 = vpop.f32.mrb[0].mxu0
        %v3065 = vadd.f32 %v2872, %v3064
        %v3066 = vpop.f32.mrb[0].mxu0
        %v3067 = vadd.f32 %v2874, %v3066
        %v3068 = vpop.f32.mrb[0].mxu0
        %v3069 = vadd.f32 %v2876, %v3068
        %3070 = vmatprep.mubr.bf16.mxu0 %v2690
        %3071 = vmatmul.mubr.bf16.gmra.mrb[0].mxu0 %v2689
        %v3072 = vpop.f32.mrb[0].mxu0
        %v3073 = vadd.f32 %v2880, %v3072
        %v3074 = vpop.f32.mrb[0].mxu0
        %v3075 = vadd.f32 %v2882, %v3074
        %v3076 = vpop.f32.mrb[0].mxu0
        %v3077 = vadd.f32 %v2884, %v3076
        %v3078 = vpop.f32.mrb[0].mxu0
        %v3079 = vadd.f32 %v2886, %v3078
        %3080 = vmatprep.mubr.bf16.mxu0 %v2694
        %3081 = vmatmul.mubr.bf16.gmra.mrb[0].mxu0 %v2693
        %v3082 = vpop.f32.mrb[0].mxu0
        %v3083 = vadd.f32 %v2890, %v3082
        %v3084 = vpop.f32.mrb[0].mxu0
        %v3085 = vadd.f32 %v2892, %v3084
        %v3086 = vpop.f32.mrb[0].mxu0
        %v3087 = vadd.f32 %v2894, %v3086
        %v3088 = vpop.f32.mrb[0].mxu0
        %v3089 = vadd.f32 %v2896, %v3088
        %3090 = vmatprep.mubr.bf16.mxu0 %v2698
        %3091 = vmatmul.mubr.bf16.gmra.mrb[0].mxu0 %v2697
        %v3092 = vpop.f32.mrb[0].mxu0
        %v3093 = vadd.f32 %v2900, %v3092
        %v3094 = vpop.f32.mrb[0].mxu0
        %v3095 = vadd.f32 %v2902, %v3094
        %v3096 = vpop.f32.mrb[0].mxu0
        %v3097 = vadd.f32 %v2904, %v3096
        %v3098 = vpop.f32.mrb[0].mxu0
        %v3099 = vadd.f32 %v2906, %v3098
        %3100 = vmatprep.mubr.bf16.mxu0 %v2702
        %3101 = vmatmul.mubr.bf16.gmra.mrb[0].mxu0 %v2701
        %v3102 = vpop.f32.mrb[0].mxu0
        %v3103 = vadd.f32 %v2910, %v3102
        %v3104 = vpop.f32.mrb[0].mxu0
        %v3105 = vadd.f32 %v2912, %v3104
        %v3106 = vpop.f32.mrb[0].mxu0
        %v3107 = vadd.f32 %v2914, %v3106
        %v3108 = vpop.f32.mrb[0].mxu0
        %v3109 = vadd.f32 %v2916, %v3108
        %3110 = vmatprep.mubr.bf16.mxu0 %v2706
        %3111 = vmatmul.mubr.bf16.gmra.mrb[0].mxu0 %v2705
        %v3112 = vpop.f32.mrb[0].mxu0
        %v3113 = vadd.f32 %v2920, %v3112
        %v3114 = vpop.f32.mrb[0].mxu0
        %v3115 = vadd.f32 %v2922, %v3114
        %v3116 = vpop.f32.mrb[0].mxu0
        %v3117 = vadd.f32 %v2924, %v3116
        %v3118 = vpop.f32.mrb[0].mxu0
        %v3119 = vadd.f32 %v2926, %v3118
        %3120 = vmatprep.mubr.bf16.mxu0 %v2710
        %3121 = vmatmul.mubr.bf16.gmra.mrb[0].mxu0 %v2709
        %v3122 = vpop.f32.mrb[0].mxu0
        %v3123 = vadd.f32 %v2930, %v3122
        %v3124 = vpop.f32.mrb[0].mxu0
        %v3125 = vadd.f32 %v2932, %v3124
        %v3126 = vpop.f32.mrb[0].mxu0
        %v3127 = vadd.f32 %v2934, %v3126
        %v3128 = vpop.f32.mrb[0].mxu0
        %v3129 = vadd.f32 %v2936, %v3128
        %3130 = vmatprep.mubr.bf16.mxu0 %v2714
        %3131 = vmatmul.mubr.bf16.gmra.mrb[0].mxu0 %v2713
        %v3132 = vpop.f32.mrb[0].mxu0
        %v3133 = vadd.f32 %v2940, %v3132
        %v3134 = vpop.f32.mrb[0].mxu0
        %v3135 = vadd.f32 %v2942, %v3134
        %v3136 = vpop.f32.mrb[0].mxu0
        %v3137 = vadd.f32 %v2944, %v3136
        %v3138 = vpop.f32.mrb[0].mxu0
        %v3139 = vadd.f32 %v2946, %v3138
        %3140 = vmatprep.mubr.bf16.mxu0 %v2718
        %3141 = vmatmul.mubr.bf16.gmra.mrb[0].mxu0 %v2717
        %v3142 = vpop.f32.mrb[0].mxu0
        %v3143 = vadd.f32 %v2950, %v3142
        %v3144 = vpop.f32.mrb[0].mxu0
        %v3145 = vadd.f32 %v2952, %v3144
        %v3146 = vpop.f32.mrb[0].mxu0
        %v3147 = vadd.f32 %v2954, %v3146
        %v3148 = vpop.f32.mrb[0].mxu0
        %v3149 = vadd.f32 %v2956, %v3148
        %3150 = vmatprep.mubr.bf16.mxu0 %v2722
        %3151 = vmatmul.mubr.bf16.gmra.mrb[0].mxu0 %v2721
        %v3152 = vpop.f32.mrb[0].mxu0
        %v3153 = vadd.f32 %v2960, %v3152
        %v3154 = vpop.f32.mrb[0].mxu0
        %v3155 = vadd.f32 %v2962, %v3154
        %v3156 = vpop.f32.mrb[0].mxu0
        %v3157 = vadd.f32 %v2964, %v3156
        %v3158 = vpop.f32.mrb[0].mxu0
        %v3159 = vadd.f32 %v2966, %v3158
        %3160 = vmatprep.mubr.bf16.mxu0 %v2726
        %3161 = vmatmul.mubr.bf16.gmra.mrb[0].mxu0 %v2725
        %v3162 = vpop.f32.mrb[0].mxu0
        %v3163 = vadd.f32 %v2970, %v3162
        %v3164 = vpop.f32.mrb[0].mxu0
        %v3165 = vadd.f32 %v2972, %v3164
        %v3166 = vpop.f32.mrb[0].mxu0
        %v3167 = vadd.f32 %v2974, %v3166
        %v3168 = vpop.f32.mrb[0].mxu0
        %v3169 = vadd.f32 %v2976, %v3168
        %3170 = vmatprep.mubr.bf16.mxu0 %v2730
        %3171 = vmatmul.mubr.bf16.gmra.mrb[0].mxu0 %v2729
        %v3172 = vpop.f32.mrb[0].mxu0
        %v3173 = vadd.f32 %v2980, %v3172
        %v3174 = vpop.f32.mrb[0].mxu0
        %v3175 = vadd.f32 %v2982, %v3174
        %v3176 = vpop.f32.mrb[0].mxu0
        %v3177 = vadd.f32 %v2984, %v3176
        %v3178 = vpop.f32.mrb[0].mxu0
        %v3179 = vadd.f32 %v2986, %v3178
        %3180 = vdwg.mxu0
        %v3181 = vmul.f32 %v3023, 2.0
        %v3182 = vmul.f32 %v3025, 2.0
        %v3183 = vmul.f32 %v3027, 2.0
        %v3184 = vmul.f32 %v3029, 2.0
        %v3185 = vmul.f32 %v3033, 2.0
        %v3186 = vmul.f32 %v3035, 2.0
        %v3187 = vmul.f32 %v3037, 2.0
        %v3188 = vmul.f32 %v3039, 2.0
        %v3189 = vmul.f32 %v3043, 2.0
        %v3190 = vmul.f32 %v3045, 2.0
        %v3191 = vmul.f32 %v3047, 2.0
        %v3192 = vmul.f32 %v3049, 2.0
        %v3193 = vmul.f32 %v3053, 2.0
        %v3194 = vmul.f32 %v3055, 2.0
        %v3195 = vmul.f32 %v3057, 2.0
        %v3196 = vmul.f32 %v3059, 2.0
        %v3197 = vmul.f32 %v3063, 2.0
        %v3198 = vmul.f32 %v3065, 2.0
        %v3199 = vmul.f32 %v3067, 2.0
        %v3200 = vmul.f32 %v3069, 2.0
        %v3201 = vmul.f32 %v3073, 2.0
        %v3202 = vmul.f32 %v3075, 2.0
        %v3203 = vmul.f32 %v3077, 2.0
        %v3204 = vmul.f32 %v3079, 2.0
        %v3205 = vmul.f32 %v3083, 2.0
        %v3206 = vmul.f32 %v3085, 2.0
        %v3207 = vmul.f32 %v3087, 2.0
        %v3208 = vmul.f32 %v3089, 2.0
        %v3209 = vmul.f32 %v3093, 2.0
        %v3210 = vmul.f32 %v3095, 2.0
        %v3211 = vmul.f32 %v3097, 2.0
        %v3212 = vmul.f32 %v3099, 2.0
        %v3213 = vmul.f32 %v3103, 2.0
        %v3214 = vmul.f32 %v3105, 2.0
        %v3215 = vmul.f32 %v3107, 2.0
        %v3216 = vmul.f32 %v3109, 2.0
        %v3217 = vmul.f32 %v3113, 2.0
        %v3218 = vmul.f32 %v3115, 2.0
        %v3219 = vmul.f32 %v3117, 2.0
        %v3220 = vmul.f32 %v3119, 2.0
        %v3221 = vmul.f32 %v3123, 2.0
        %v3222 = vmul.f32 %v3125, 2.0
        %v3223 = vmul.f32 %v3127, 2.0
        %v3224 = vmul.f32 %v3129, 2.0
        %v3225 = vmul.f32 %v3133, 2.0
        %v3226 = vmul.f32 %v3135, 2.0
        %v3227 = vmul.f32 %v3137, 2.0
        %v3228 = vmul.f32 %v3139, 2.0
        %v3229 = vmul.f32 %v3143, 2.0
        %v3230 = vmul.f32 %v3145, 2.0
        %v3231 = vmul.f32 %v3147, 2.0
        %v3232 = vmul.f32 %v3149, 2.0
        %v3233 = vmul.f32 %v3153, 2.0
        %v3234 = vmul.f32 %v3155, 2.0
        %v3235 = vmul.f32 %v3157, 2.0
        %v3236 = vmul.f32 %v3159, 2.0
        %v3237 = vmul.f32 %v3163, 2.0
        %v3238 = vmul.f32 %v3165, 2.0
        %v3239 = vmul.f32 %v3167, 2.0
        %v3240 = vmul.f32 %v3169, 2.0
        %v3241 = vmul.f32 %v3173, 2.0
        %v3242 = vmul.f32 %v3175, 2.0
        %v3243 = vmul.f32 %v3177, 2.0
        %v3244 = vmul.f32 %v3179, 2.0
        %v3245 = vmul.f32 %v3181, 1.442695
        %v3246 = vpow.pop %v3245
        %v3247 = vmul.f32 %v3182, 1.442695
        %v3248 = vpow.pop %v3247
        %v3249 = vmul.f32 %v3183, 1.442695
        %v3250 = vpow.pop %v3249
        %v3251 = vmul.f32 %v3184, 1.442695
        %v3252 = vpow.pop %v3251
        %v3253 = vmul.f32 %v3185, 1.442695
        %v3254 = vpow.pop %v3253
        %v3255 = vmul.f32 %v3186, 1.442695
        %v3256 = vpow.pop %v3255
        %v3257 = vmul.f32 %v3187, 1.442695
        %v3258 = vpow.pop %v3257
        %v3259 = vmul.f32 %v3188, 1.442695
        %v3260 = vpow.pop %v3259
        %v3261 = vmul.f32 %v3189, 1.442695
        %v3262 = vpow.pop %v3261
        %v3263 = vmul.f32 %v3190, 1.442695
        %v3264 = vpow.pop %v3263
        %v3265 = vmul.f32 %v3191, 1.442695
        %v3266 = vpow.pop %v3265
        %v3267 = vmul.f32 %v3192, 1.442695
        %v3268 = vpow.pop %v3267
        %v3269 = vmul.f32 %v3193, 1.442695
        %v3270 = vpow.pop %v3269
        %v3271 = vmul.f32 %v3194, 1.442695
        %v3272 = vpow.pop %v3271
        %v3273 = vmul.f32 %v3195, 1.442695
        %v3274 = vpow.pop %v3273
        %v3275 = vmul.f32 %v3196, 1.442695
        %v3276 = vpow.pop %v3275
        %v3277 = vmul.f32 %v3197, 1.442695
        %v3278 = vpow.pop %v3277
        %v3279 = vmul.f32 %v3198, 1.442695
        %v3280 = vpow.pop %v3279
        %v3281 = vmul.f32 %v3199, 1.442695
        %v3282 = vpow.pop %v3281
        %v3283 = vmul.f32 %v3200, 1.442695
        %v3284 = vpow.pop %v3283
        %v3285 = vmul.f32 %v3201, 1.442695
        %v3286 = vpow.pop %v3285
        %v3287 = vmul.f32 %v3202, 1.442695
        %v3288 = vpow.pop %v3287
        %v3289 = vmul.f32 %v3203, 1.442695
        %v3290 = vpow.pop %v3289
        %v3291 = vmul.f32 %v3204, 1.442695
        %v3292 = vpow.pop %v3291
        %v3293 = vmul.f32 %v3205, 1.442695
        %v3294 = vpow.pop %v3293
        %v3295 = vmul.f32 %v3206, 1.442695
        %v3296 = vpow.pop %v3295
        %v3297 = vmul.f32 %v3207, 1.442695
        %v3298 = vpow.pop %v3297
        %v3299 = vmul.f32 %v3208, 1.442695
        %v3300 = vpow.pop %v3299
        %v3301 = vmul.f32 %v3209, 1.442695
        %v3302 = vpow.pop %v3301
        %v3303 = vmul.f32 %v3210, 1.442695
        %v3304 = vpow.pop %v3303
        %v3305 = vmul.f32 %v3211, 1.442695
        %v3306 = vpow.pop %v3305
        %v3307 = vmul.f32 %v3212, 1.442695
        %v3308 = vpow.pop %v3307
        %v3309 = vmul.f32 %v3213, 1.442695
        %v3310 = vpow.pop %v3309
        %v3311 = vmul.f32 %v3214, 1.442695
        %v3312 = vpow.pop %v3311
        %v3313 = vmul.f32 %v3215, 1.442695
        %v3314 = vpow.pop %v3313
        %v3315 = vmul.f32 %v3216, 1.442695
        %v3316 = vpow.pop %v3315
        %v3317 = vmul.f32 %v3217, 1.442695
        %v3318 = vpow.pop %v3317
        %v3319 = vmul.f32 %v3218, 1.442695
        %v3320 = vpow.pop %v3319
        %v3321 = vmul.f32 %v3219, 1.442695
        %v3322 = vpow.pop %v3321
        %v3323 = vmul.f32 %v3220, 1.442695
        %v3324 = vpow.pop %v3323
        %v3325 = vmul.f32 %v3221, 1.442695
        %v3326 = vpow.pop %v3325
        %v3327 = vmul.f32 %v3222, 1.442695
        %v3328 = vpow.pop %v3327
        %v3329 = vmul.f32 %v3223, 1.442695
        %v3330 = vpow.pop %v3329
        %v3331 = vmul.f32 %v3224, 1.442695
        %v3332 = vpow.pop %v3331
        %v3333 = vmul.f32 %v3225, 1.442695
        %v3334 = vpow.pop %v3333
        %v3335 = vmul.f32 %v3226, 1.442695
        %v3336 = vpow.pop %v3335
        %v3337 = vmul.f32 %v3227, 1.442695
        %v3338 = vpow.pop %v3337
        %v3339 = vmul.f32 %v3228, 1.442695
        %v3340 = vpow.pop %v3339
        %v3341 = vmul.f32 %v3229, 1.442695
        %v3342 = vpow.pop %v3341
        %v3343 = vmul.f32 %v3230, 1.442695
        %v3344 = vpow.pop %v3343
        %v3345 = vmul.f32 %v3231, 1.442695
        %v3346 = vpow.pop %v3345
        %v3347 = vmul.f32 %v3232, 1.442695
        %v3348 = vpow.pop %v3347
        %v3349 = vmul.f32 %v3233, 1.442695
        %v3350 = vpow.pop %v3349
        %v3351 = vmul.f32 %v3234, 1.442695
        %v3352 = vpow.pop %v3351
        %v3353 = vmul.f32 %v3235, 1.442695
        %v3354 = vpow.pop %v3353
        %v3355 = vmul.f32 %v3236, 1.442695
        %v3356 = vpow.pop %v3355
        %v3357 = vmul.f32 %v3237, 1.442695
        %v3358 = vpow.pop %v3357
        %v3359 = vmul.f32 %v3238, 1.442695
        %v3360 = vpow.pop %v3359
        %v3361 = vmul.f32 %v3239, 1.442695
        %v3362 = vpow.pop %v3361
        %v3363 = vmul.f32 %v3240, 1.442695
        %v3364 = vpow.pop %v3363
        %v3365 = vmul.f32 %v3241, 1.442695
        %v3366 = vpow.pop %v3365
        %v3367 = vmul.f32 %v3242, 1.442695
        %v3368 = vpow.pop %v3367
        %v3369 = vmul.f32 %v3243, 1.442695
        %v3370 = vpow.pop %v3369
        %v3371 = vmul.f32 %v3244, 1.442695
        %v3372 = vpow.pop %v3371
        %v3437 = vunpack.c.l.b16 %v1003
        %v3438 = vunpack.c.h.b16 %v1003
        %v3439 = vunpack.c.l.b16 %v1004
        %v3440 = vunpack.c.h.b16 %v1004
        %v3441 = vunpack.c.l.b16 %v1007
        %v3442 = vunpack.c.h.b16 %v1007
        %v3443 = vunpack.c.l.b16 %v1008
        %v3444 = vunpack.c.h.b16 %v1008
        %v3445 = vunpack.c.l.b16 %v1011
        %v3446 = vunpack.c.h.b16 %v1011
        %v3447 = vunpack.c.l.b16 %v1012
        %v3448 = vunpack.c.h.b16 %v1012
        %v3449 = vunpack.c.l.b16 %v1015
        %v3450 = vunpack.c.h.b16 %v1015
        %v3451 = vunpack.c.l.b16 %v1016
        %v3452 = vunpack.c.h.b16 %v1016
        %v3453 = vunpack.c.l.b16 %v1019
        %v3454 = vunpack.c.h.b16 %v1019
        %v3455 = vunpack.c.l.b16 %v1020
        %v3456 = vunpack.c.h.b16 %v1020
        %v3457 = vunpack.c.l.b16 %v1023
        %v3458 = vunpack.c.h.b16 %v1023
        %v3459 = vunpack.c.l.b16 %v1024
        %v3460 = vunpack.c.h.b16 %v1024
        %v3461 = vunpack.c.l.b16 %v1027
        %v3462 = vunpack.c.h.b16 %v1027
        %v3463 = vunpack.c.l.b16 %v1028
        %v3464 = vunpack.c.h.b16 %v1028
        %v3465 = vunpack.c.l.b16 %v1031
        %v3466 = vunpack.c.h.b16 %v1031
        %v3467 = vunpack.c.l.b16 %v1032
        %v3468 = vunpack.c.h.b16 %v1032
        %v3469 = vunpack.c.l.b16 %v1035
        %v3470 = vunpack.c.h.b16 %v1035
        %v3471 = vunpack.c.l.b16 %v1036
        %v3472 = vunpack.c.h.b16 %v1036
        %v3473 = vunpack.c.l.b16 %v1039
        %v3474 = vunpack.c.h.b16 %v1039
        %v3475 = vunpack.c.l.b16 %v1040
        %v3476 = vunpack.c.h.b16 %v1040
        %v3477 = vunpack.c.l.b16 %v1043
        %v3478 = vunpack.c.h.b16 %v1043
        %v3479 = vunpack.c.l.b16 %v1044
        %v3480 = vunpack.c.h.b16 %v1044
        %v3481 = vunpack.c.l.b16 %v1047
        %v3482 = vunpack.c.h.b16 %v1047
        %v3483 = vunpack.c.l.b16 %v1048
        %v3484 = vunpack.c.h.b16 %v1048
        %v3485 = vunpack.c.l.b16 %v1051
        %v3486 = vunpack.c.h.b16 %v1051
        %v3487 = vunpack.c.l.b16 %v1052
        %v3488 = vunpack.c.h.b16 %v1052
        %v3489 = vunpack.c.l.b16 %v1055
        %v3490 = vunpack.c.h.b16 %v1055
        %v3491 = vunpack.c.l.b16 %v1056
        %v3492 = vunpack.c.h.b16 %v1056
        %v3493 = vunpack.c.l.b16 %v1059
        %v3494 = vunpack.c.h.b16 %v1059
        %v3495 = vunpack.c.l.b16 %v1060
        %v3496 = vunpack.c.h.b16 %v1060
        %v3497 = vunpack.c.l.b16 %v1063
        %v3498 = vunpack.c.h.b16 %v1063
        %v3499 = vunpack.c.l.b16 %v1064
        %v3500 = vunpack.c.h.b16 %v1064
        %v3501 = vunpack.c.l.b16 %v1067
        %v3502 = vunpack.c.h.b16 %v1067
        %v3503 = vunpack.c.l.b16 %v1068
        %v3504 = vunpack.c.h.b16 %v1068
        %v3505 = vunpack.c.l.b16 %v1071
        %v3506 = vunpack.c.h.b16 %v1071
        %v3507 = vunpack.c.l.b16 %v1072
        %v3508 = vunpack.c.h.b16 %v1072
        %v3509 = vunpack.c.l.b16 %v1075
        %v3510 = vunpack.c.h.b16 %v1075
        %v3511 = vunpack.c.l.b16 %v1076
        %v3512 = vunpack.c.h.b16 %v1076
        %v3513 = vunpack.c.l.b16 %v1079
        %v3514 = vunpack.c.h.b16 %v1079
        %v3515 = vunpack.c.l.b16 %v1080
        %v3516 = vunpack.c.h.b16 %v1080
        %v3517 = vunpack.c.l.b16 %v1083
        %v3518 = vunpack.c.h.b16 %v1083
        %v3519 = vunpack.c.l.b16 %v1084
        %v3520 = vunpack.c.h.b16 %v1084
        %v3521 = vunpack.c.l.b16 %v1087
        %v3522 = vunpack.c.h.b16 %v1087
        %v3523 = vunpack.c.l.b16 %v1088
        %v3524 = vunpack.c.h.b16 %v1088
        %v3525 = vunpack.c.l.b16 %v1091
        %v3526 = vunpack.c.h.b16 %v1091
        %v3527 = vunpack.c.l.b16 %v1092
        %v3528 = vunpack.c.h.b16 %v1092
        %v3529 = vunpack.c.l.b16 %v1095
        %v3530 = vunpack.c.h.b16 %v1095
        %v3531 = vunpack.c.l.b16 %v1096
        %v3532 = vunpack.c.h.b16 %v1096
        %v3533 = vunpack.c.l.b16 %v1099
        %v3534 = vunpack.c.h.b16 %v1099
        %v3535 = vunpack.c.l.b16 %v1100
        %v3536 = vunpack.c.h.b16 %v1100
        %v3537 = vunpack.c.l.b16 %v1103
        %v3538 = vunpack.c.h.b16 %v1103
        %v3539 = vunpack.c.l.b16 %v1104
        %v3540 = vunpack.c.h.b16 %v1104
        %v3541 = vunpack.c.l.b16 %v1107
        %v3542 = vunpack.c.h.b16 %v1107
        %v3543 = vunpack.c.l.b16 %v1108
        %v3544 = vunpack.c.h.b16 %v1108
        %v3545 = vunpack.c.l.b16 %v1111
        %v3546 = vunpack.c.h.b16 %v1111
        %v3547 = vunpack.c.l.b16 %v1112
        %v3548 = vunpack.c.h.b16 %v1112
        %v3549 = vunpack.c.l.b16 %v1115
        %v3550 = vunpack.c.h.b16 %v1115
        %v3551 = vunpack.c.l.b16 %v1116
        %v3552 = vunpack.c.h.b16 %v1116
        %v3553 = vunpack.c.l.b16 %v1119
        %v3554 = vunpack.c.h.b16 %v1119
        %v3555 = vunpack.c.l.b16 %v1120
        %v3556 = vunpack.c.h.b16 %v1120
        %v3557 = vunpack.c.l.b16 %v1123
        %v3558 = vunpack.c.h.b16 %v1123
        %v3559 = vunpack.c.l.b16 %v1124
        %v3560 = vunpack.c.h.b16 %v1124
        %v3561 = vunpack.c.l.b16 %v1127
        %v3562 = vunpack.c.h.b16 %v1127
        %v3563 = vunpack.c.l.b16 %v1128
        %v3564 = vunpack.c.h.b16 %v1128
        %v3565 = vpack.c.b16 %v3441, %v3437
        %v3566 = vpack.c.b16 %v3442, %v3438
        %v3567 = vpack.c.b16 %v3443, %v3439
        %v3568 = vpack.c.b16 %v3444, %v3440
        %v3569 = vpack.c.b16 %v3449, %v3445
        %v3570 = vpack.c.b16 %v3450, %v3446
        %v3571 = vpack.c.b16 %v3451, %v3447
        %v3572 = vpack.c.b16 %v3452, %v3448
        %v3573 = vpack.c.b16 %v3457, %v3453
        %v3574 = vpack.c.b16 %v3458, %v3454
        %v3575 = vpack.c.b16 %v3459, %v3455
        %v3576 = vpack.c.b16 %v3460, %v3456
        %v3577 = vpack.c.b16 %v3465, %v3461
        %v3578 = vpack.c.b16 %v3466, %v3462
        %v3579 = vpack.c.b16 %v3467, %v3463
        %v3580 = vpack.c.b16 %v3468, %v3464
        %v3581 = vpack.c.b16 %v3473, %v3469
        %v3582 = vpack.c.b16 %v3474, %v3470
        %v3583 = vpack.c.b16 %v3475, %v3471
        %v3584 = vpack.c.b16 %v3476, %v3472
        %v3585 = vpack.c.b16 %v3481, %v3477
        %v3586 = vpack.c.b16 %v3482, %v3478
        %v3587 = vpack.c.b16 %v3483, %v3479
        %v3588 = vpack.c.b16 %v3484, %v3480
        %v3589 = vpack.c.b16 %v3489, %v3485
        %v3590 = vpack.c.b16 %v3490, %v3486
        %v3591 = vpack.c.b16 %v3491, %v3487
        %v3592 = vpack.c.b16 %v3492, %v3488
        %v3593 = vpack.c.b16 %v3497, %v3493
        %v3594 = vpack.c.b16 %v3498, %v3494
        %v3595 = vpack.c.b16 %v3499, %v3495
        %v3596 = vpack.c.b16 %v3500, %v3496
        %v3597 = vpack.c.b16 %v3505, %v3501
        %v3598 = vpack.c.b16 %v3506, %v3502
        %v3599 = vpack.c.b16 %v3507, %v3503
        %v3600 = vpack.c.b16 %v3508, %v3504
        %v3601 = vpack.c.b16 %v3513, %v3509
        %v3602 = vpack.c.b16 %v3514, %v3510
        %v3603 = vpack.c.b16 %v3515, %v3511
        %v3604 = vpack.c.b16 %v3516, %v3512
        %v3605 = vpack.c.b16 %v3521, %v3517
        %v3606 = vpack.c.b16 %v3522, %v3518
        %v3607 = vpack.c.b16 %v3523, %v3519
        %v3608 = vpack.c.b16 %v3524, %v3520
        %v3609 = vpack.c.b16 %v3529, %v3525
        %v3610 = vpack.c.b16 %v3530, %v3526
        %v3611 = vpack.c.b16 %v3531, %v3527
        %v3612 = vpack.c.b16 %v3532, %v3528
        %v3613 = vpack.c.b16 %v3537, %v3533
        %v3614 = vpack.c.b16 %v3538, %v3534
        %v3615 = vpack.c.b16 %v3539, %v3535
        %v3616 = vpack.c.b16 %v3540, %v3536
        %v3617 = vpack.c.b16 %v3545, %v3541
        %v3618 = vpack.c.b16 %v3546, %v3542
        %v3619 = vpack.c.b16 %v3547, %v3543
        %v3620 = vpack.c.b16 %v3548, %v3544
        %v3621 = vpack.c.b16 %v3553, %v3549
        %v3622 = vpack.c.b16 %v3554, %v3550
        %v3623 = vpack.c.b16 %v3555, %v3551
        %v3624 = vpack.c.b16 %v3556, %v3552
        %v3625 = vpack.c.b16 %v3561, %v3557
        %v3626 = vpack.c.b16 %v3562, %v3558
        %v3627 = vpack.c.b16 %v3563, %v3559
        %v3628 = vpack.c.b16 %v3564, %v3560
        %3693 = vmatprep.subr.bf16.mxu0 %v3566
        %3694 = vmatpush1.bf16.xpose.msra.mxu0 %v3565
        %3695 = vmatprep.subr.bf16.mxu0 %v3570
        %3696 = vmatpush1.bf16.xpose.msra.mxu0 %v3569
        %3697 = vmatprep.subr.bf16.mxu0 %v3574
        %3698 = vmatpush1.bf16.xpose.msra.mxu0 %v3573
        %3699 = vmatprep.subr.bf16.mxu0 %v3578
        %3700 = vmatpush1.bf16.xpose.msra.mxu0 %v3577
        %3701 = vmatprep.subr.bf16.mxu0 %v3582
        %3702 = vmatpush1.bf16.xpose.msra.mxu0 %v3581
        %3703 = vmatprep.subr.bf16.mxu0 %v3586
        %3704 = vmatpush1.bf16.xpose.msra.mxu0 %v3585
        %3705 = vmatprep.subr.bf16.mxu0 %v3590
        %3706 = vmatpush1.bf16.xpose.msra.mxu0 %v3589
        %3707 = vmatprep.subr.bf16.mxu0 %v3594
        %3708 = vmatpush1.bf16.xpose.msra.mxu0 %v3593
        %3709 = vmatprep.subr.bf16.mxu0 %v3598
        %3710 = vmatpush1.bf16.xpose.msra.mxu0 %v3597
        %3711 = vmatprep.subr.bf16.mxu0 %v3602
        %3712 = vmatpush1.bf16.xpose.msra.mxu0 %v3601
        %3713 = vmatprep.subr.bf16.mxu0 %v3606
        %3714 = vmatpush1.bf16.xpose.msra.mxu0 %v3605
        %3715 = vmatprep.subr.bf16.mxu0 %v3610
        %3716 = vmatpush1.bf16.xpose.msra.mxu0 %v3609
        %3717 = vmatprep.subr.bf16.mxu0 %v3614
        %3718 = vmatpush1.bf16.xpose.msra.mxu0 %v3613
        %3719 = vmatprep.subr.bf16.mxu0 %v3618
        %3720 = vmatpush1.bf16.xpose.msra.mxu0 %v3617
        %3721 = vmatprep.subr.bf16.mxu0 %v3622
        %3722 = vmatpush1.bf16.xpose.msra.mxu0 %v3621
        %3723 = vmatprep.subr.bf16.mxu0 %v3626
        %3724 = vmatpush1.bf16.xpose.msra.mxu0 %v3625
        %3725 = vmatprep.mubr.bf16.mxu0 %v1450
        %3726 = vmatmul.mubr.bf16.gmra.mrb[0].mxu0 %v1449
        %v3727 = vpop.f32.mrb[0].mxu0
        %v3728 = vadd.f32 0.0, %v3727
        %v3729 = vpop.f32.mrb[0].mxu0
        %v3730 = vadd.f32 0.0, %v3729
        %v3731 = vpop.f32.mrb[0].mxu0
        %v3732 = vadd.f32 0.0, %v3731
        %v3733 = vpop.f32.mrb[0].mxu0
        %v3734 = vadd.f32 0.0, %v3733
        %3735 = vmatprep.mubr.bf16.mxu0 %v1454
        %3736 = vmatmul.mubr.bf16.gmra.mrb[0].mxu0 %v1453
        %v3737 = vpop.f32.mrb[0].mxu0
        %v3738 = vadd.f32 0.0, %v3737
        %v3739 = vpop.f32.mrb[0].mxu0
        %v3740 = vadd.f32 0.0, %v3739
        %v3741 = vpop.f32.mrb[0].mxu0
        %v3742 = vadd.f32 0.0, %v3741
        %v3743 = vpop.f32.mrb[0].mxu0
        %v3744 = vadd.f32 0.0, %v3743
        %3745 = vmatprep.mubr.bf16.mxu0 %v1458
        %3746 = vmatmul.mubr.bf16.gmra.mrb[0].mxu0 %v1457
        %v3747 = vpop.f32.mrb[0].mxu0
        %v3748 = vadd.f32 0.0, %v3747
        %v3749 = vpop.f32.mrb[0].mxu0
        %v3750 = vadd.f32 0.0, %v3749
        %v3751 = vpop.f32.mrb[0].mxu0
        %v3752 = vadd.f32 0.0, %v3751
        %v3753 = vpop.f32.mrb[0].mxu0
        %v3754 = vadd.f32 0.0, %v3753
        %3755 = vmatprep.mubr.bf16.mxu0 %v1462
        %3756 = vmatmul.mubr.bf16.gmra.mrb[0].mxu0 %v1461
        %v3757 = vpop.f32.mrb[0].mxu0
        %v3758 = vadd.f32 0.0, %v3757
        %v3759 = vpop.f32.mrb[0].mxu0
        %v3760 = vadd.f32 0.0, %v3759
        %v3761 = vpop.f32.mrb[0].mxu0
        %v3762 = vadd.f32 0.0, %v3761
        %v3763 = vpop.f32.mrb[0].mxu0
        %v3764 = vadd.f32 0.0, %v3763
        %3765 = vmatprep.mubr.bf16.mxu0 %v1466
        %3766 = vmatmul.mubr.bf16.gmra.mrb[0].mxu0 %v1465
        %v3767 = vpop.f32.mrb[0].mxu0
        %v3768 = vadd.f32 0.0, %v3767
        %v3769 = vpop.f32.mrb[0].mxu0
        %v3770 = vadd.f32 0.0, %v3769
        %v3771 = vpop.f32.mrb[0].mxu0
        %v3772 = vadd.f32 0.0, %v3771
        %v3773 = vpop.f32.mrb[0].mxu0
        %v3774 = vadd.f32 0.0, %v3773
        %3775 = vmatprep.mubr.bf16.mxu0 %v1470
        %3776 = vmatmul.mubr.bf16.gmra.mrb[0].mxu0 %v1469
        %v3777 = vpop.f32.mrb[0].mxu0
        %v3778 = vadd.f32 0.0, %v3777
        %v3779 = vpop.f32.mrb[0].mxu0
        %v3780 = vadd.f32 0.0, %v3779
        %v3781 = vpop.f32.mrb[0].mxu0
        %v3782 = vadd.f32 0.0, %v3781
        %v3783 = vpop.f32.mrb[0].mxu0
        %v3784 = vadd.f32 0.0, %v3783
        %3785 = vmatprep.mubr.bf16.mxu0 %v1474
        %3786 = vmatmul.mubr.bf16.gmra.mrb[0].mxu0 %v1473
        %v3787 = vpop.f32.mrb[0].mxu0
        %v3788 = vadd.f32 0.0, %v3787
        %v3789 = vpop.f32.mrb[0].mxu0
        %v3790 = vadd.f32 0.0, %v3789
        %v3791 = vpop.f32.mrb[0].mxu0
        %v3792 = vadd.f32 0.0, %v3791
        %v3793 = vpop.f32.mrb[0].mxu0
        %v3794 = vadd.f32 0.0, %v3793
        %3795 = vmatprep.mubr.bf16.mxu0 %v1478
        %3796 = vmatmul.mubr.bf16.gmra.mrb[0].mxu0 %v1477
        %v3797 = vpop.f32.mrb[0].mxu0
        %v3798 = vadd.f32 0.0, %v3797
        %v3799 = vpop.f32.mrb[0].mxu0
        %v3800 = vadd.f32 0.0, %v3799
        %v3801 = vpop.f32.mrb[0].mxu0
        %v3802 = vadd.f32 0.0, %v3801
        %v3803 = vpop.f32.mrb[0].mxu0
        %v3804 = vadd.f32 0.0, %v3803
        %3805 = vmatprep.mubr.bf16.mxu0 %v1482
        %3806 = vmatmul.mubr.bf16.gmra.mrb[0].mxu0 %v1481
        %v3807 = vpop.f32.mrb[0].mxu0
        %v3808 = vadd.f32 0.0, %v3807
        %v3809 = vpop.f32.mrb[0].mxu0
        %v3810 = vadd.f32 0.0, %v3809
        %v3811 = vpop.f32.mrb[0].mxu0
        %v3812 = vadd.f32 0.0, %v3811
        %v3813 = vpop.f32.mrb[0].mxu0
        %v3814 = vadd.f32 0.0, %v3813
        %3815 = vmatprep.mubr.bf16.mxu0 %v1486
        %3816 = vmatmul.mubr.bf16.gmra.mrb[0].mxu0 %v1485
        %v3817 = vpop.f32.mrb[0].mxu0
        %v3818 = vadd.f32 0.0, %v3817
        %v3819 = vpop.f32.mrb[0].mxu0
        %v3820 = vadd.f32 0.0, %v3819
        %v3821 = vpop.f32.mrb[0].mxu0
        %v3822 = vadd.f32 0.0, %v3821
        %v3823 = vpop.f32.mrb[0].mxu0
        %v3824 = vadd.f32 0.0, %v3823
        %3825 = vmatprep.mubr.bf16.mxu0 %v1490
        %3826 = vmatmul.mubr.bf16.gmra.mrb[0].mxu0 %v1489
        %v3827 = vpop.f32.mrb[0].mxu0
        %v3828 = vadd.f32 0.0, %v3827
        %v3829 = vpop.f32.mrb[0].mxu0
        %v3830 = vadd.f32 0.0, %v3829
        %v3831 = vpop.f32.mrb[0].mxu0
        %v3832 = vadd.f32 0.0, %v3831
        %v3833 = vpop.f32.mrb[0].mxu0
        %v3834 = vadd.f32 0.0, %v3833
        %3835 = vmatprep.mubr.bf16.mxu0 %v1494
        %3836 = vmatmul.mubr.bf16.gmra.mrb[0].mxu0 %v1493
        %v3837 = vpop.f32.mrb[0].mxu0
        %v3838 = vadd.f32 0.0, %v3837
        %v3839 = vpop.f32.mrb[0].mxu0
        %v3840 = vadd.f32 0.0, %v3839
        %v3841 = vpop.f32.mrb[0].mxu0
        %v3842 = vadd.f32 0.0, %v3841
        %v3843 = vpop.f32.mrb[0].mxu0
        %v3844 = vadd.f32 0.0, %v3843
        %3845 = vmatprep.mubr.bf16.mxu0 %v1498
        %3846 = vmatmul.mubr.bf16.gmra.mrb[0].mxu0 %v1497
        %v3847 = vpop.f32.mrb[0].mxu0
        %v3848 = vadd.f32 0.0, %v3847
        %v3849 = vpop.f32.mrb[0].mxu0
        %v3850 = vadd.f32 0.0, %v3849
        %v3851 = vpop.f32.mrb[0].mxu0
        %v3852 = vadd.f32 0.0, %v3851
        %v3853 = vpop.f32.mrb[0].mxu0
        %v3854 = vadd.f32 0.0, %v3853
        %3855 = vmatprep.mubr.bf16.mxu0 %v1502
        %3856 = vmatmul.mubr.bf16.gmra.mrb[0].mxu0 %v1501
        %v3857 = vpop.f32.mrb[0].mxu0
        %v3858 = vadd.f32 0.0, %v3857
        %v3859 = vpop.f32.mrb[0].mxu0
        %v3860 = vadd.f32 0.0, %v3859
        %v3861 = vpop.f32.mrb[0].mxu0
        %v3862 = vadd.f32 0.0, %v3861
        %v3863 = vpop.f32.mrb[0].mxu0
        %v3864 = vadd.f32 0.0, %v3863
        %3865 = vmatprep.mubr.bf16.mxu0 %v1506
        %3866 = vmatmul.mubr.bf16.gmra.mrb[0].mxu0 %v1505
        %v3867 = vpop.f32.mrb[0].mxu0
        %v3868 = vadd.f32 0.0, %v3867
        %v3869 = vpop.f32.mrb[0].mxu0
        %v3870 = vadd.f32 0.0, %v3869
        %v3871 = vpop.f32.mrb[0].mxu0
        %v3872 = vadd.f32 0.0, %v3871
        %v3873 = vpop.f32.mrb[0].mxu0
        %v3874 = vadd.f32 0.0, %v3873
        %3875 = vmatprep.mubr.bf16.mxu0 %v1510
        %3876 = vmatmul.mubr.bf16.gmra.mrb[0].mxu0 %v1509
        %v3877 = vpop.f32.mrb[0].mxu0
        %v3878 = vadd.f32 0.0, %v3877
        %v3879 = vpop.f32.mrb[0].mxu0
        %v3880 = vadd.f32 0.0, %v3879
        %v3881 = vpop.f32.mrb[0].mxu0
        %v3882 = vadd.f32 0.0, %v3881
        %v3883 = vpop.f32.mrb[0].mxu0
        %v3884 = vadd.f32 0.0, %v3883
        %3885 = vdwg.mxu0
        %3886 = vmatprep.subr.bf16.mxu0 %v3568
        %3887 = vmatpush1.bf16.xpose.msra.mxu0 %v3567
        %3888 = vmatprep.subr.bf16.mxu0 %v3572
        %3889 = vmatpush1.bf16.xpose.msra.mxu0 %v3571
        %3890 = vmatprep.subr.bf16.mxu0 %v3576
        %3891 = vmatpush1.bf16.xpose.msra.mxu0 %v3575
        %3892 = vmatprep.subr.bf16.mxu0 %v3580
        %3893 = vmatpush1.bf16.xpose.msra.mxu0 %v3579
        %3894 = vmatprep.subr.bf16.mxu0 %v3584
        %3895 = vmatpush1.bf16.xpose.msra.mxu0 %v3583
        %3896 = vmatprep.subr.bf16.mxu0 %v3588
        %3897 = vmatpush1.bf16.xpose.msra.mxu0 %v3587
        %3898 = vmatprep.subr.bf16.mxu0 %v3592
        %3899 = vmatpush1.bf16.xpose.msra.mxu0 %v3591
        %3900 = vmatprep.subr.bf16.mxu0 %v3596
        %3901 = vmatpush1.bf16.xpose.msra.mxu0 %v3595
        %3902 = vmatprep.subr.bf16.mxu0 %v3600
        %3903 = vmatpush1.bf16.xpose.msra.mxu0 %v3599
        %3904 = vmatprep.subr.bf16.mxu0 %v3604
        %3905 = vmatpush1.bf16.xpose.msra.mxu0 %v3603
        %3906 = vmatprep.subr.bf16.mxu0 %v3608
        %3907 = vmatpush1.bf16.xpose.msra.mxu0 %v3607
        %3908 = vmatprep.subr.bf16.mxu0 %v3612
        %3909 = vmatpush1.bf16.xpose.msra.mxu0 %v3611
        %3910 = vmatprep.subr.bf16.mxu0 %v3616
        %3911 = vmatpush1.bf16.xpose.msra.mxu0 %v3615
        %3912 = vmatprep.subr.bf16.mxu0 %v3620
        %3913 = vmatpush1.bf16.xpose.msra.mxu0 %v3619
        %3914 = vmatprep.subr.bf16.mxu0 %v3624
        %3915 = vmatpush1.bf16.xpose.msra.mxu0 %v3623
        %3916 = vmatprep.subr.bf16.mxu0 %v3628
        %3917 = vmatpush1.bf16.xpose.msra.mxu0 %v3627
        %3918 = vmatprep.mubr.bf16.mxu0 %v1452
        %3919 = vmatmul.mubr.bf16.gmra.mrb[0].mxu0 %v1451
        %v3920 = vpop.f32.mrb[0].mxu0
        %v3921 = vadd.f32 %v3728, %v3920
        %v3922 = vpop.f32.mrb[0].mxu0
        %v3923 = vadd.f32 %v3730, %v3922
        %v3924 = vpop.f32.mrb[0].mxu0
        %v3925 = vadd.f32 %v3732, %v3924
        %v3926 = vpop.f32.mrb[0].mxu0
        %v3927 = vadd.f32 %v3734, %v3926
        %3928 = vmatprep.mubr.bf16.mxu0 %v1456
        %3929 = vmatmul.mubr.bf16.gmra.mrb[0].mxu0 %v1455
        %v3930 = vpop.f32.mrb[0].mxu0
        %v3931 = vadd.f32 %v3738, %v3930
        %v3932 = vpop.f32.mrb[0].mxu0
        %v3933 = vadd.f32 %v3740, %v3932
        %v3934 = vpop.f32.mrb[0].mxu0
        %v3935 = vadd.f32 %v3742, %v3934
        %v3936 = vpop.f32.mrb[0].mxu0
        %v3937 = vadd.f32 %v3744, %v3936
        %3938 = vmatprep.mubr.bf16.mxu0 %v1460
        %3939 = vmatmul.mubr.bf16.gmra.mrb[0].mxu0 %v1459
        %v3940 = vpop.f32.mrb[0].mxu0
        %v3941 = vadd.f32 %v3748, %v3940
        %v3942 = vpop.f32.mrb[0].mxu0
        %v3943 = vadd.f32 %v3750, %v3942
        %v3944 = vpop.f32.mrb[0].mxu0
        %v3945 = vadd.f32 %v3752, %v3944
        %v3946 = vpop.f32.mrb[0].mxu0
        %v3947 = vadd.f32 %v3754, %v3946
        %3948 = vmatprep.mubr.bf16.mxu0 %v1464
        %3949 = vmatmul.mubr.bf16.gmra.mrb[0].mxu0 %v1463
        %v3950 = vpop.f32.mrb[0].mxu0
        %v3951 = vadd.f32 %v3758, %v3950
        %v3952 = vpop.f32.mrb[0].mxu0
        %v3953 = vadd.f32 %v3760, %v3952
        %v3954 = vpop.f32.mrb[0].mxu0
        %v3955 = vadd.f32 %v3762, %v3954
        %v3956 = vpop.f32.mrb[0].mxu0
        %v3957 = vadd.f32 %v3764, %v3956
        %3958 = vmatprep.mubr.bf16.mxu0 %v1468
        %3959 = vmatmul.mubr.bf16.gmra.mrb[0].mxu0 %v1467
        %v3960 = vpop.f32.mrb[0].mxu0
        %v3961 = vadd.f32 %v3768, %v3960
        %v3962 = vpop.f32.mrb[0].mxu0
        %v3963 = vadd.f32 %v3770, %v3962
        %v3964 = vpop.f32.mrb[0].mxu0
        %v3965 = vadd.f32 %v3772, %v3964
        %v3966 = vpop.f32.mrb[0].mxu0
        %v3967 = vadd.f32 %v3774, %v3966
        %3968 = vmatprep.mubr.bf16.mxu0 %v1472
        %3969 = vmatmul.mubr.bf16.gmra.mrb[0].mxu0 %v1471
        %v3970 = vpop.f32.mrb[0].mxu0
        %v3971 = vadd.f32 %v3778, %v3970
        %v3972 = vpop.f32.mrb[0].mxu0
        %v3973 = vadd.f32 %v3780, %v3972
        %v3974 = vpop.f32.mrb[0].mxu0
        %v3975 = vadd.f32 %v3782, %v3974
        %v3976 = vpop.f32.mrb[0].mxu0
        %v3977 = vadd.f32 %v3784, %v3976
        %3978 = vmatprep.mubr.bf16.mxu0 %v1476
        %3979 = vmatmul.mubr.bf16.gmra.mrb[0].mxu0 %v1475
        %v3980 = vpop.f32.mrb[0].mxu0
        %v3981 = vadd.f32 %v3788, %v3980
        %v3982 = vpop.f32.mrb[0].mxu0
        %v3983 = vadd.f32 %v3790, %v3982
        %v3984 = vpop.f32.mrb[0].mxu0
        %v3985 = vadd.f32 %v3792, %v3984
        %v3986 = vpop.f32.mrb[0].mxu0
        %v3987 = vadd.f32 %v3794, %v3986
        %3988 = vmatprep.mubr.bf16.mxu0 %v1480
        %3989 = vmatmul.mubr.bf16.gmra.mrb[0].mxu0 %v1479
        %v3990 = vpop.f32.mrb[0].mxu0
        %v3991 = vadd.f32 %v3798, %v3990
        %v3992 = vpop.f32.mrb[0].mxu0
        %v3993 = vadd.f32 %v3800, %v3992
        %v3994 = vpop.f32.mrb[0].mxu0
        %v3995 = vadd.f32 %v3802, %v3994
        %v3996 = vpop.f32.mrb[0].mxu0
        %v3997 = vadd.f32 %v3804, %v3996
        %3998 = vmatprep.mubr.bf16.mxu0 %v1484
        %3999 = vmatmul.mubr.bf16.gmra.mrb[0].mxu0 %v1483
        %v4000 = vpop.f32.mrb[0].mxu0
        %v4001 = vadd.f32 %v3808, %v4000
        %v4002 = vpop.f32.mrb[0].mxu0
        %v4003 = vadd.f32 %v3810, %v4002
        %v4004 = vpop.f32.mrb[0].mxu0
        %v4005 = vadd.f32 %v3812, %v4004
        %v4006 = vpop.f32.mrb[0].mxu0
        %v4007 = vadd.f32 %v3814, %v4006
        %4008 = vmatprep.mubr.bf16.mxu0 %v1488
        %4009 = vmatmul.mubr.bf16.gmra.mrb[0].mxu0 %v1487
        %v4010 = vpop.f32.mrb[0].mxu0
        %v4011 = vadd.f32 %v3818, %v4010
        %v4012 = vpop.f32.mrb[0].mxu0
        %v4013 = vadd.f32 %v3820, %v4012
        %v4014 = vpop.f32.mrb[0].mxu0
        %v4015 = vadd.f32 %v3822, %v4014
        %v4016 = vpop.f32.mrb[0].mxu0
        %v4017 = vadd.f32 %v3824, %v4016
        %4018 = vmatprep.mubr.bf16.mxu0 %v1492
        %4019 = vmatmul.mubr.bf16.gmra.mrb[0].mxu0 %v1491
        %v4020 = vpop.f32.mrb[0].mxu0
        %v4021 = vadd.f32 %v3828, %v4020
        %v4022 = vpop.f32.mrb[0].mxu0
        %v4023 = vadd.f32 %v3830, %v4022
        %v4024 = vpop.f32.mrb[0].mxu0
        %v4025 = vadd.f32 %v3832, %v4024
        %v4026 = vpop.f32.mrb[0].mxu0
        %v4027 = vadd.f32 %v3834, %v4026
        %4028 = vmatprep.mubr.bf16.mxu0 %v1496
        %4029 = vmatmul.mubr.bf16.gmra.mrb[0].mxu0 %v1495
        %v4030 = vpop.f32.mrb[0].mxu0
        %v4031 = vadd.f32 %v3838, %v4030
        %v4032 = vpop.f32.mrb[0].mxu0
        %v4033 = vadd.f32 %v3840, %v4032
        %v4034 = vpop.f32.mrb[0].mxu0
        %v4035 = vadd.f32 %v3842, %v4034
        %v4036 = vpop.f32.mrb[0].mxu0
        %v4037 = vadd.f32 %v3844, %v4036
        %4038 = vmatprep.mubr.bf16.mxu0 %v1500
        %4039 = vmatmul.mubr.bf16.gmra.mrb[0].mxu0 %v1499
        %v4040 = vpop.f32.mrb[0].mxu0
        %v4041 = vadd.f32 %v3848, %v4040
        %v4042 = vpop.f32.mrb[0].mxu0
        %v4043 = vadd.f32 %v3850, %v4042
        %v4044 = vpop.f32.mrb[0].mxu0
        %v4045 = vadd.f32 %v3852, %v4044
        %v4046 = vpop.f32.mrb[0].mxu0
        %v4047 = vadd.f32 %v3854, %v4046
        %4048 = vmatprep.mubr.bf16.mxu0 %v1504
        %4049 = vmatmul.mubr.bf16.gmra.mrb[0].mxu0 %v1503
        %v4050 = vpop.f32.mrb[0].mxu0
        %v4051 = vadd.f32 %v3858, %v4050
        %v4052 = vpop.f32.mrb[0].mxu0
        %v4053 = vadd.f32 %v3860, %v4052
        %v4054 = vpop.f32.mrb[0].mxu0
        %v4055 = vadd.f32 %v3862, %v4054
        %v4056 = vpop.f32.mrb[0].mxu0
        %v4057 = vadd.f32 %v3864, %v4056
        %4058 = vmatprep.mubr.bf16.mxu0 %v1508
        %4059 = vmatmul.mubr.bf16.gmra.mrb[0].mxu0 %v1507
        %v4060 = vpop.f32.mrb[0].mxu0
        %v4061 = vadd.f32 %v3868, %v4060
        %v4062 = vpop.f32.mrb[0].mxu0
        %v4063 = vadd.f32 %v3870, %v4062
        %v4064 = vpop.f32.mrb[0].mxu0
        %v4065 = vadd.f32 %v3872, %v4064
        %v4066 = vpop.f32.mrb[0].mxu0
        %v4067 = vadd.f32 %v3874, %v4066
        %4068 = vmatprep.mubr.bf16.mxu0 %v1512
        %4069 = vmatmul.mubr.bf16.gmra.mrb[0].mxu0 %v1511
        %v4070 = vpop.f32.mrb[0].mxu0
        %v4071 = vadd.f32 %v3878, %v4070
        %v4072 = vpop.f32.mrb[0].mxu0
        %v4073 = vadd.f32 %v3880, %v4072
        %v4074 = vpop.f32.mrb[0].mxu0
        %v4075 = vadd.f32 %v3882, %v4074
        %v4076 = vpop.f32.mrb[0].mxu0
        %v4077 = vadd.f32 %v3884, %v4076
        %4078 = vdwg.mxu0
        %v4079 = vmul.f32 %v3921, 2.0
        %v4080 = vmul.f32 %v3923, 2.0
        %v4081 = vmul.f32 %v3925, 2.0
        %v4082 = vmul.f32 %v3927, 2.0
        %v4083 = vmul.f32 %v3931, 2.0
        %v4084 = vmul.f32 %v3933, 2.0
        %v4085 = vmul.f32 %v3935, 2.0
        %v4086 = vmul.f32 %v3937, 2.0
        %v4087 = vmul.f32 %v3941, 2.0
        %v4088 = vmul.f32 %v3943, 2.0
        %v4089 = vmul.f32 %v3945, 2.0
        %v4090 = vmul.f32 %v3947, 2.0
        %v4091 = vmul.f32 %v3951, 2.0
        %v4092 = vmul.f32 %v3953, 2.0
        %v4093 = vmul.f32 %v3955, 2.0
        %v4094 = vmul.f32 %v3957, 2.0
        %v4095 = vmul.f32 %v3961, 2.0
        %v4096 = vmul.f32 %v3963, 2.0
        %v4097 = vmul.f32 %v3965, 2.0
        %v4098 = vmul.f32 %v3967, 2.0
        %v4099 = vmul.f32 %v3971, 2.0
        %v4100 = vmul.f32 %v3973, 2.0
        %v4101 = vmul.f32 %v3975, 2.0
        %v4102 = vmul.f32 %v3977, 2.0
        %v4103 = vmul.f32 %v3981, 2.0
        %v4104 = vmul.f32 %v3983, 2.0
        %v4105 = vmul.f32 %v3985, 2.0
        %v4106 = vmul.f32 %v3987, 2.0
        %v4107 = vmul.f32 %v3991, 2.0
        %v4108 = vmul.f32 %v3993, 2.0
        %v4109 = vmul.f32 %v3995, 2.0
        %v4110 = vmul.f32 %v3997, 2.0
        %v4111 = vmul.f32 %v4001, 2.0
        %v4112 = vmul.f32 %v4003, 2.0
        %v4113 = vmul.f32 %v4005, 2.0
        %v4114 = vmul.f32 %v4007, 2.0
        %v4115 = vmul.f32 %v4011, 2.0
        %v4116 = vmul.f32 %v4013, 2.0
        %v4117 = vmul.f32 %v4015, 2.0
        %v4118 = vmul.f32 %v4017, 2.0
        %v4119 = vmul.f32 %v4021, 2.0
        %v4120 = vmul.f32 %v4023, 2.0
        %v4121 = vmul.f32 %v4025, 2.0
        %v4122 = vmul.f32 %v4027, 2.0
        %v4123 = vmul.f32 %v4031, 2.0
        %v4124 = vmul.f32 %v4033, 2.0
        %v4125 = vmul.f32 %v4035, 2.0
        %v4126 = vmul.f32 %v4037, 2.0
        %v4127 = vmul.f32 %v4041, 2.0
        %v4128 = vmul.f32 %v4043, 2.0
        %v4129 = vmul.f32 %v4045, 2.0
        %v4130 = vmul.f32 %v4047, 2.0
        %v4131 = vmul.f32 %v4051, 2.0
        %v4132 = vmul.f32 %v4053, 2.0
        %v4133 = vmul.f32 %v4055, 2.0
        %v4134 = vmul.f32 %v4057, 2.0
        %v4135 = vmul.f32 %v4061, 2.0
        %v4136 = vmul.f32 %v4063, 2.0
        %v4137 = vmul.f32 %v4065, 2.0
        %v4138 = vmul.f32 %v4067, 2.0
        %v4139 = vmul.f32 %v4071, 2.0
        %v4140 = vmul.f32 %v4073, 2.0
        %v4141 = vmul.f32 %v4075, 2.0
        %v4142 = vmul.f32 %v4077, 2.0
        %v4143 = vmul.f32 %v4079, 1.442695
        %v4144 = vpow.pop %v4143
        %v4145 = vmul.f32 %v4080, 1.442695
        %v4146 = vpow.pop %v4145
        %v4147 = vmul.f32 %v4081, 1.442695
        %v4148 = vpow.pop %v4147
        %v4149 = vmul.f32 %v4082, 1.442695
        %v4150 = vpow.pop %v4149
        %v4151 = vmul.f32 %v4083, 1.442695
        %v4152 = vpow.pop %v4151
        %v4153 = vmul.f32 %v4084, 1.442695
        %v4154 = vpow.pop %v4153
        %v4155 = vmul.f32 %v4085, 1.442695
        %v4156 = vpow.pop %v4155
        %v4157 = vmul.f32 %v4086, 1.442695
        %v4158 = vpow.pop %v4157
        %v4159 = vmul.f32 %v4087, 1.442695
        %v4160 = vpow.pop %v4159
        %v4161 = vmul.f32 %v4088, 1.442695
        %v4162 = vpow.pop %v4161
        %v4163 = vmul.f32 %v4089, 1.442695
        %v4164 = vpow.pop %v4163
        %v4165 = vmul.f32 %v4090, 1.442695
        %v4166 = vpow.pop %v4165
        %v4167 = vmul.f32 %v4091, 1.442695
        %v4168 = vpow.pop %v4167
        %v4169 = vmul.f32 %v4092, 1.442695
        %v4170 = vpow.pop %v4169
        %v4171 = vmul.f32 %v4093, 1.442695
        %v4172 = vpow.pop %v4171
        %v4173 = vmul.f32 %v4094, 1.442695
        %v4174 = vpow.pop %v4173
        %v4175 = vmul.f32 %v4095, 1.442695
        %v4176 = vpow.pop %v4175
        %v4177 = vmul.f32 %v4096, 1.442695
        %v4178 = vpow.pop %v4177
        %v4179 = vmul.f32 %v4097, 1.442695
        %v4180 = vpow.pop %v4179
        %v4181 = vmul.f32 %v4098, 1.442695
        %v4182 = vpow.pop %v4181
        %v4183 = vmul.f32 %v4099, 1.442695
        %v4184 = vpow.pop %v4183
        %v4185 = vmul.f32 %v4100, 1.442695
        %v4186 = vpow.pop %v4185
        %v4187 = vmul.f32 %v4101, 1.442695
        %v4188 = vpow.pop %v4187
        %v4189 = vmul.f32 %v4102, 1.442695
        %v4190 = vpow.pop %v4189
        %v4191 = vmul.f32 %v4103, 1.442695
        %v4192 = vpow.pop %v4191
        %v4193 = vmul.f32 %v4104, 1.442695
        %v4194 = vpow.pop %v4193
        %v4195 = vmul.f32 %v4105, 1.442695
        %v4196 = vpow.pop %v4195
        %v4197 = vmul.f32 %v4106, 1.442695
        %v4198 = vpow.pop %v4197
        %v4199 = vmul.f32 %v4107, 1.442695
        %v4200 = vpow.pop %v4199
        %v4201 = vmul.f32 %v4108, 1.442695
        %v4202 = vpow.pop %v4201
        %v4203 = vmul.f32 %v4109, 1.442695
        %v4204 = vpow.pop %v4203
        %v4205 = vmul.f32 %v4110, 1.442695
        %v4206 = vpow.pop %v4205
        %v4207 = vmul.f32 %v4111, 1.442695
        %v4208 = vpow.pop %v4207
        %v4209 = vmul.f32 %v4112, 1.442695
        %v4210 = vpow.pop %v4209
        %v4211 = vmul.f32 %v4113, 1.442695
        %v4212 = vpow.pop %v4211
        %v4213 = vmul.f32 %v4114, 1.442695
        %v4214 = vpow.pop %v4213
        %v4215 = vmul.f32 %v4115, 1.442695
        %v4216 = vpow.pop %v4215
        %v4217 = vmul.f32 %v4116, 1.442695
        %v4218 = vpow.pop %v4217
        %v4219 = vmul.f32 %v4117, 1.442695
        %v4220 = vpow.pop %v4219
        %v4221 = vmul.f32 %v4118, 1.442695
        %v4222 = vpow.pop %v4221
        %v4223 = vmul.f32 %v4119, 1.442695
        %v4224 = vpow.pop %v4223
        %v4225 = vmul.f32 %v4120, 1.442695
        %v4226 = vpow.pop %v4225
        %v4227 = vmul.f32 %v4121, 1.442695
        %v4228 = vpow.pop %v4227
        %v4229 = vmul.f32 %v4122, 1.442695
        %v4230 = vpow.pop %v4229
        %v4231 = vmul.f32 %v4123, 1.442695
        %v4232 = vpow.pop %v4231
        %v4233 = vmul.f32 %v4124, 1.442695
        %v4234 = vpow.pop %v4233
        %v4235 = vmul.f32 %v4125, 1.442695
        %v4236 = vpow.pop %v4235
        %v4237 = vmul.f32 %v4126, 1.442695
        %v4238 = vpow.pop %v4237
        %v4239 = vmul.f32 %v4127, 1.442695
        %v4240 = vpow.pop %v4239
        %v4241 = vmul.f32 %v4128, 1.442695
        %v4242 = vpow.pop %v4241
        %v4243 = vmul.f32 %v4129, 1.442695
        %v4244 = vpow.pop %v4243
        %v4245 = vmul.f32 %v4130, 1.442695
        %v4246 = vpow.pop %v4245
        %v4247 = vmul.f32 %v4131, 1.442695
        %v4248 = vpow.pop %v4247
        %v4249 = vmul.f32 %v4132, 1.442695
        %v4250 = vpow.pop %v4249
        %v4251 = vmul.f32 %v4133, 1.442695
        %v4252 = vpow.pop %v4251
        %v4253 = vmul.f32 %v4134, 1.442695
        %v4254 = vpow.pop %v4253
        %v4255 = vmul.f32 %v4135, 1.442695
        %v4256 = vpow.pop %v4255
        %v4257 = vmul.f32 %v4136, 1.442695
        %v4258 = vpow.pop %v4257
        %v4259 = vmul.f32 %v4137, 1.442695
        %v4260 = vpow.pop %v4259
        %v4261 = vmul.f32 %v4138, 1.442695
        %v4262 = vpow.pop %v4261
        %v4263 = vmul.f32 %v4139, 1.442695
        %v4264 = vpow.pop %v4263
        %v4265 = vmul.f32 %v4140, 1.442695
        %v4266 = vpow.pop %v4265
        %v4267 = vmul.f32 %v4141, 1.442695
        %v4268 = vpow.pop %v4267
        %v4269 = vmul.f32 %v4142, 1.442695
        %v4270 = vpow.pop %v4269
        %4271 = vmatprep.subr.bf16.mxu0 %v3566
        %4272 = vmatpush1.bf16.xpose.msra.mxu0 %v3565
        %4273 = vmatprep.subr.bf16.mxu0 %v3570
        %4274 = vmatpush1.bf16.xpose.msra.mxu0 %v3569
        %4275 = vmatprep.subr.bf16.mxu0 %v3574
        %4276 = vmatpush1.bf16.xpose.msra.mxu0 %v3573
        %4277 = vmatprep.subr.bf16.mxu0 %v3578
        %4278 = vmatpush1.bf16.xpose.msra.mxu0 %v3577
        %4279 = vmatprep.subr.bf16.mxu0 %v3582
        %4280 = vmatpush1.bf16.xpose.msra.mxu0 %v3581
        %4281 = vmatprep.subr.bf16.mxu0 %v3586
        %4282 = vmatpush1.bf16.xpose.msra.mxu0 %v3585
        %4283 = vmatprep.subr.bf16.mxu0 %v3590
        %4284 = vmatpush1.bf16.xpose.msra.mxu0 %v3589
        %4285 = vmatprep.subr.bf16.mxu0 %v3594
        %4286 = vmatpush1.bf16.xpose.msra.mxu0 %v3593
        %4287 = vmatprep.subr.bf16.mxu0 %v3598
        %4288 = vmatpush1.bf16.xpose.msra.mxu0 %v3597
        %4289 = vmatprep.subr.bf16.mxu0 %v3602
        %4290 = vmatpush1.bf16.xpose.msra.mxu0 %v3601
        %4291 = vmatprep.subr.bf16.mxu0 %v3606
        %4292 = vmatpush1.bf16.xpose.msra.mxu0 %v3605
        %4293 = vmatprep.subr.bf16.mxu0 %v3610
        %4294 = vmatpush1.bf16.xpose.msra.mxu0 %v3609
        %4295 = vmatprep.subr.bf16.mxu0 %v3614
        %4296 = vmatpush1.bf16.xpose.msra.mxu0 %v3613
        %4297 = vmatprep.subr.bf16.mxu0 %v3618
        %4298 = vmatpush1.bf16.xpose.msra.mxu0 %v3617
        %4299 = vmatprep.subr.bf16.mxu0 %v3622
        %4300 = vmatpush1.bf16.xpose.msra.mxu0 %v3621
        %4301 = vmatprep.subr.bf16.mxu0 %v3626
        %4302 = vmatpush1.bf16.xpose.msra.mxu0 %v3625
        %4303 = vmatprep.mubr.bf16.mxu0 %v2668
        %4304 = vmatmul.mubr.bf16.gmra.mrb[0].mxu0 %v2667
        %v4305 = vpop.f32.mrb[0].mxu0
        %v4306 = vadd.f32 0.0, %v4305
        %v4307 = vpop.f32.mrb[0].mxu0
        %v4308 = vadd.f32 0.0, %v4307
        %v4309 = vpop.f32.mrb[0].mxu0
        %v4310 = vadd.f32 0.0, %v4309
        %v4311 = vpop.f32.mrb[0].mxu0
        %v4312 = vadd.f32 0.0, %v4311
        %4313 = vmatprep.mubr.bf16.mxu0 %v2672
        %4314 = vmatmul.mubr.bf16.gmra.mrb[0].mxu0 %v2671
        %v4315 = vpop.f32.mrb[0].mxu0
        %v4316 = vadd.f32 0.0, %v4315
        %v4317 = vpop.f32.mrb[0].mxu0
        %v4318 = vadd.f32 0.0, %v4317
        %v4319 = vpop.f32.mrb[0].mxu0
        %v4320 = vadd.f32 0.0, %v4319
        %v4321 = vpop.f32.mrb[0].mxu0
        %v4322 = vadd.f32 0.0, %v4321
        %4323 = vmatprep.mubr.bf16.mxu0 %v2676
        %4324 = vmatmul.mubr.bf16.gmra.mrb[0].mxu0 %v2675
        %v4325 = vpop.f32.mrb[0].mxu0
        %v4326 = vadd.f32 0.0, %v4325
        %v4327 = vpop.f32.mrb[0].mxu0
        %v4328 = vadd.f32 0.0, %v4327
        %v4329 = vpop.f32.mrb[0].mxu0
        %v4330 = vadd.f32 0.0, %v4329
        %v4331 = vpop.f32.mrb[0].mxu0
        %v4332 = vadd.f32 0.0, %v4331
        %4333 = vmatprep.mubr.bf16.mxu0 %v2680
        %4334 = vmatmul.mubr.bf16.gmra.mrb[0].mxu0 %v2679
        %v4335 = vpop.f32.mrb[0].mxu0
        %v4336 = vadd.f32 0.0, %v4335
        %v4337 = vpop.f32.mrb[0].mxu0
        %v4338 = vadd.f32 0.0, %v4337
        %v4339 = vpop.f32.mrb[0].mxu0
        %v4340 = vadd.f32 0.0, %v4339
        %v4341 = vpop.f32.mrb[0].mxu0
        %v4342 = vadd.f32 0.0, %v4341
        %4343 = vmatprep.mubr.bf16.mxu0 %v2684
        %4344 = vmatmul.mubr.bf16.gmra.mrb[0].mxu0 %v2683
        %v4345 = vpop.f32.mrb[0].mxu0
        %v4346 = vadd.f32 0.0, %v4345
        %v4347 = vpop.f32.mrb[0].mxu0
        %v4348 = vadd.f32 0.0, %v4347
        %v4349 = vpop.f32.mrb[0].mxu0
        %v4350 = vadd.f32 0.0, %v4349
        %v4351 = vpop.f32.mrb[0].mxu0
        %v4352 = vadd.f32 0.0, %v4351
        %4353 = vmatprep.mubr.bf16.mxu0 %v2688
        %4354 = vmatmul.mubr.bf16.gmra.mrb[0].mxu0 %v2687
        %v4355 = vpop.f32.mrb[0].mxu0
        %v4356 = vadd.f32 0.0, %v4355
        %v4357 = vpop.f32.mrb[0].mxu0
        %v4358 = vadd.f32 0.0, %v4357
        %v4359 = vpop.f32.mrb[0].mxu0
        %v4360 = vadd.f32 0.0, %v4359
        %v4361 = vpop.f32.mrb[0].mxu0
        %v4362 = vadd.f32 0.0, %v4361
        %4363 = vmatprep.mubr.bf16.mxu0 %v2692
        %4364 = vmatmul.mubr.bf16.gmra.mrb[0].mxu0 %v2691
        %v4365 = vpop.f32.mrb[0].mxu0
        %v4366 = vadd.f32 0.0, %v4365
        %v4367 = vpop.f32.mrb[0].mxu0
        %v4368 = vadd.f32 0.0, %v4367
        %v4369 = vpop.f32.mrb[0].mxu0
        %v4370 = vadd.f32 0.0, %v4369
        %v4371 = vpop.f32.mrb[0].mxu0
        %v4372 = vadd.f32 0.0, %v4371
        %4373 = vmatprep.mubr.bf16.mxu0 %v2696
        %4374 = vmatmul.mubr.bf16.gmra.mrb[0].mxu0 %v2695
        %v4375 = vpop.f32.mrb[0].mxu0
        %v4376 = vadd.f32 0.0, %v4375
        %v4377 = vpop.f32.mrb[0].mxu0
        %v4378 = vadd.f32 0.0, %v4377
        %v4379 = vpop.f32.mrb[0].mxu0
        %v4380 = vadd.f32 0.0, %v4379
        %v4381 = vpop.f32.mrb[0].mxu0
        %v4382 = vadd.f32 0.0, %v4381
        %4383 = vmatprep.mubr.bf16.mxu0 %v2700
        %4384 = vmatmul.mubr.bf16.gmra.mrb[0].mxu0 %v2699
        %v4385 = vpop.f32.mrb[0].mxu0
        %v4386 = vadd.f32 0.0, %v4385
        %v4387 = vpop.f32.mrb[0].mxu0
        %v4388 = vadd.f32 0.0, %v4387
        %v4389 = vpop.f32.mrb[0].mxu0
        %v4390 = vadd.f32 0.0, %v4389
        %v4391 = vpop.f32.mrb[0].mxu0
        %v4392 = vadd.f32 0.0, %v4391
        %4393 = vmatprep.mubr.bf16.mxu0 %v2704
        %4394 = vmatmul.mubr.bf16.gmra.mrb[0].mxu0 %v2703
        %v4395 = vpop.f32.mrb[0].mxu0
        %v4396 = vadd.f32 0.0, %v4395
        %v4397 = vpop.f32.mrb[0].mxu0
        %v4398 = vadd.f32 0.0, %v4397
        %v4399 = vpop.f32.mrb[0].mxu0
        %v4400 = vadd.f32 0.0, %v4399
        %v4401 = vpop.f32.mrb[0].mxu0
        %v4402 = vadd.f32 0.0, %v4401
        %4403 = vmatprep.mubr.bf16.mxu0 %v2708
        %4404 = vmatmul.mubr.bf16.gmra.mrb[0].mxu0 %v2707
        %v4405 = vpop.f32.mrb[0].mxu0
        %v4406 = vadd.f32 0.0, %v4405
        %v4407 = vpop.f32.mrb[0].mxu0
        %v4408 = vadd.f32 0.0, %v4407
        %v4409 = vpop.f32.mrb[0].mxu0
        %v4410 = vadd.f32 0.0, %v4409
        %v4411 = vpop.f32.mrb[0].mxu0
        %v4412 = vadd.f32 0.0, %v4411
        %4413 = vmatprep.mubr.bf16.mxu0 %v2712
        %4414 = vmatmul.mubr.bf16.gmra.mrb[0].mxu0 %v2711
        %v4415 = vpop.f32.mrb[0].mxu0
        %v4416 = vadd.f32 0.0, %v4415
        %v4417 = vpop.f32.mrb[0].mxu0
        %v4418 = vadd.f32 0.0, %v4417
        %v4419 = vpop.f32.mrb[0].mxu0
        %v4420 = vadd.f32 0.0, %v4419
        %v4421 = vpop.f32.mrb[0].mxu0
        %v4422 = vadd.f32 0.0, %v4421
        %4423 = vmatprep.mubr.bf16.mxu0 %v2716
        %4424 = vmatmul.mubr.bf16.gmra.mrb[0].mxu0 %v2715
        %v4425 = vpop.f32.mrb[0].mxu0
        %v4426 = vadd.f32 0.0, %v4425
        %v4427 = vpop.f32.mrb[0].mxu0
        %v4428 = vadd.f32 0.0, %v4427
        %v4429 = vpop.f32.mrb[0].mxu0
        %v4430 = vadd.f32 0.0, %v4429
        %v4431 = vpop.f32.mrb[0].mxu0
        %v4432 = vadd.f32 0.0, %v4431
        %4433 = vmatprep.mubr.bf16.mxu0 %v2720
        %4434 = vmatmul.mubr.bf16.gmra.mrb[0].mxu0 %v2719
        %v4435 = vpop.f32.mrb[0].mxu0
        %v4436 = vadd.f32 0.0, %v4435
        %v4437 = vpop.f32.mrb[0].mxu0
        %v4438 = vadd.f32 0.0, %v4437
        %v4439 = vpop.f32.mrb[0].mxu0
        %v4440 = vadd.f32 0.0, %v4439
        %v4441 = vpop.f32.mrb[0].mxu0
        %v4442 = vadd.f32 0.0, %v4441
        %4443 = vmatprep.mubr.bf16.mxu0 %v2724
        %4444 = vmatmul.mubr.bf16.gmra.mrb[0].mxu0 %v2723
        %v4445 = vpop.f32.mrb[0].mxu0
        %v4446 = vadd.f32 0.0, %v4445
        %v4447 = vpop.f32.mrb[0].mxu0
        %v4448 = vadd.f32 0.0, %v4447
        %v4449 = vpop.f32.mrb[0].mxu0
        %v4450 = vadd.f32 0.0, %v4449
        %v4451 = vpop.f32.mrb[0].mxu0
        %v4452 = vadd.f32 0.0, %v4451
        %4453 = vmatprep.mubr.bf16.mxu0 %v2728
        %4454 = vmatmul.mubr.bf16.gmra.mrb[0].mxu0 %v2727
        %v4455 = vpop.f32.mrb[0].mxu0
        %v4456 = vadd.f32 0.0, %v4455
        %v4457 = vpop.f32.mrb[0].mxu0
        %v4458 = vadd.f32 0.0, %v4457
        %v4459 = vpop.f32.mrb[0].mxu0
        %v4460 = vadd.f32 0.0, %v4459
        %v4461 = vpop.f32.mrb[0].mxu0
        %v4462 = vadd.f32 0.0, %v4461
        %4463 = vdwg.mxu0
        %4464 = vmatprep.subr.bf16.mxu0 %v3568
        %4465 = vmatpush1.bf16.xpose.msra.mxu0 %v3567
        %4466 = vmatprep.subr.bf16.mxu0 %v3572
        %4467 = vmatpush1.bf16.xpose.msra.mxu0 %v3571
        %4468 = vmatprep.subr.bf16.mxu0 %v3576
        %4469 = vmatpush1.bf16.xpose.msra.mxu0 %v3575
        %4470 = vmatprep.subr.bf16.mxu0 %v3580
        %4471 = vmatpush1.bf16.xpose.msra.mxu0 %v3579
        %4472 = vmatprep.subr.bf16.mxu0 %v3584
        %4473 = vmatpush1.bf16.xpose.msra.mxu0 %v3583
        %4474 = vmatprep.subr.bf16.mxu0 %v3588
        %4475 = vmatpush1.bf16.xpose.msra.mxu0 %v3587
        %4476 = vmatprep.subr.bf16.mxu0 %v3592
        %4477 = vmatpush1.bf16.xpose.msra.mxu0 %v3591
        %4478 = vmatprep.subr.bf16.mxu0 %v3596
        %4479 = vmatpush1.bf16.xpose.msra.mxu0 %v3595
        %4480 = vmatprep.subr.bf16.mxu0 %v3600
        %4481 = vmatpush1.bf16.xpose.msra.mxu0 %v3599
        %4482 = vmatprep.subr.bf16.mxu0 %v3604
        %4483 = vmatpush1.bf16.xpose.msra.mxu0 %v3603
        %4484 = vmatprep.subr.bf16.mxu0 %v3608
        %4485 = vmatpush1.bf16.xpose.msra.mxu0 %v3607
        %4486 = vmatprep.subr.bf16.mxu0 %v3612
        %4487 = vmatpush1.bf16.xpose.msra.mxu0 %v3611
        %4488 = vmatprep.subr.bf16.mxu0 %v3616
        %4489 = vmatpush1.bf16.xpose.msra.mxu0 %v3615
        %4490 = vmatprep.subr.bf16.mxu0 %v3620
        %4491 = vmatpush1.bf16.xpose.msra.mxu0 %v3619
        %4492 = vmatprep.subr.bf16.mxu0 %v3624
        %4493 = vmatpush1.bf16.xpose.msra.mxu0 %v3623
        %4494 = vmatprep.subr.bf16.mxu0 %v3628
        %4495 = vmatpush1.bf16.xpose.msra.mxu0 %v3627
        %4496 = vmatprep.mubr.bf16.mxu0 %v2670
        %4497 = vmatmul.mubr.bf16.gmra.mrb[0].mxu0 %v2669
        %v4498 = vpop.f32.mrb[0].mxu0
        %v4499 = vadd.f32 %v4306, %v4498
        %v4500 = vpop.f32.mrb[0].mxu0
        %v4501 = vadd.f32 %v4308, %v4500
        %v4502 = vpop.f32.mrb[0].mxu0
        %v4503 = vadd.f32 %v4310, %v4502
        %v4504 = vpop.f32.mrb[0].mxu0
        %v4505 = vadd.f32 %v4312, %v4504
        %4506 = vmatprep.mubr.bf16.mxu0 %v2674
        %4507 = vmatmul.mubr.bf16.gmra.mrb[0].mxu0 %v2673
        %v4508 = vpop.f32.mrb[0].mxu0
        %v4509 = vadd.f32 %v4316, %v4508
        %v4510 = vpop.f32.mrb[0].mxu0
        %v4511 = vadd.f32 %v4318, %v4510
        %v4512 = vpop.f32.mrb[0].mxu0
        %v4513 = vadd.f32 %v4320, %v4512
        %v4514 = vpop.f32.mrb[0].mxu0
        %v4515 = vadd.f32 %v4322, %v4514
        %4516 = vmatprep.mubr.bf16.mxu0 %v2678
        %4517 = vmatmul.mubr.bf16.gmra.mrb[0].mxu0 %v2677
        %v4518 = vpop.f32.mrb[0].mxu0
        %v4519 = vadd.f32 %v4326, %v4518
        %v4520 = vpop.f32.mrb[0].mxu0
        %v4521 = vadd.f32 %v4328, %v4520
        %v4522 = vpop.f32.mrb[0].mxu0
        %v4523 = vadd.f32 %v4330, %v4522
        %v4524 = vpop.f32.mrb[0].mxu0
        %v4525 = vadd.f32 %v4332, %v4524
        %4526 = vmatprep.mubr.bf16.mxu0 %v2682
        %4527 = vmatmul.mubr.bf16.gmra.mrb[0].mxu0 %v2681
        %v4528 = vpop.f32.mrb[0].mxu0
        %v4529 = vadd.f32 %v4336, %v4528
        %v4530 = vpop.f32.mrb[0].mxu0
        %v4531 = vadd.f32 %v4338, %v4530
        %v4532 = vpop.f32.mrb[0].mxu0
        %v4533 = vadd.f32 %v4340, %v4532
        %v4534 = vpop.f32.mrb[0].mxu0
        %v4535 = vadd.f32 %v4342, %v4534
        %4536 = vmatprep.mubr.bf16.mxu0 %v2686
        %4537 = vmatmul.mubr.bf16.gmra.mrb[0].mxu0 %v2685
        %v4538 = vpop.f32.mrb[0].mxu0
        %v4539 = vadd.f32 %v4346, %v4538
        %v4540 = vpop.f32.mrb[0].mxu0
        %v4541 = vadd.f32 %v4348, %v4540
        %v4542 = vpop.f32.mrb[0].mxu0
        %v4543 = vadd.f32 %v4350, %v4542
        %v4544 = vpop.f32.mrb[0].mxu0
        %v4545 = vadd.f32 %v4352, %v4544
        %4546 = vmatprep.mubr.bf16.mxu0 %v2690
        %4547 = vmatmul.mubr.bf16.gmra.mrb[0].mxu0 %v2689
        %v4548 = vpop.f32.mrb[0].mxu0
        %v4549 = vadd.f32 %v4356, %v4548
        %v4550 = vpop.f32.mrb[0].mxu0
        %v4551 = vadd.f32 %v4358, %v4550
        %v4552 = vpop.f32.mrb[0].mxu0
        %v4553 = vadd.f32 %v4360, %v4552
        %v4554 = vpop.f32.mrb[0].mxu0
        %v4555 = vadd.f32 %v4362, %v4554
        %4556 = vmatprep.mubr.bf16.mxu0 %v2694
        %4557 = vmatmul.mubr.bf16.gmra.mrb[0].mxu0 %v2693
        %v4558 = vpop.f32.mrb[0].mxu0
        %v4559 = vadd.f32 %v4366, %v4558
        %v4560 = vpop.f32.mrb[0].mxu0
        %v4561 = vadd.f32 %v4368, %v4560
        %v4562 = vpop.f32.mrb[0].mxu0
        %v4563 = vadd.f32 %v4370, %v4562
        %v4564 = vpop.f32.mrb[0].mxu0
        %v4565 = vadd.f32 %v4372, %v4564
        %4566 = vmatprep.mubr.bf16.mxu0 %v2698
        %4567 = vmatmul.mubr.bf16.gmra.mrb[0].mxu0 %v2697
        %v4568 = vpop.f32.mrb[0].mxu0
        %v4569 = vadd.f32 %v4376, %v4568
        %v4570 = vpop.f32.mrb[0].mxu0
        %v4571 = vadd.f32 %v4378, %v4570
        %v4572 = vpop.f32.mrb[0].mxu0
        %v4573 = vadd.f32 %v4380, %v4572
        %v4574 = vpop.f32.mrb[0].mxu0
        %v4575 = vadd.f32 %v4382, %v4574
        %4576 = vmatprep.mubr.bf16.mxu0 %v2702
        %4577 = vmatmul.mubr.bf16.gmra.mrb[0].mxu0 %v2701
        %v4578 = vpop.f32.mrb[0].mxu0
        %v4579 = vadd.f32 %v4386, %v4578
        %v4580 = vpop.f32.mrb[0].mxu0
        %v4581 = vadd.f32 %v4388, %v4580
        %v4582 = vpop.f32.mrb[0].mxu0
        %v4583 = vadd.f32 %v4390, %v4582
        %v4584 = vpop.f32.mrb[0].mxu0
        %v4585 = vadd.f32 %v4392, %v4584
        %4586 = vmatprep.mubr.bf16.mxu0 %v2706
        %4587 = vmatmul.mubr.bf16.gmra.mrb[0].mxu0 %v2705
        %v4588 = vpop.f32.mrb[0].mxu0
        %v4589 = vadd.f32 %v4396, %v4588
        %v4590 = vpop.f32.mrb[0].mxu0
        %v4591 = vadd.f32 %v4398, %v4590
        %v4592 = vpop.f32.mrb[0].mxu0
        %v4593 = vadd.f32 %v4400, %v4592
        %v4594 = vpop.f32.mrb[0].mxu0
        %v4595 = vadd.f32 %v4402, %v4594
        %4596 = vmatprep.mubr.bf16.mxu0 %v2710
        %4597 = vmatmul.mubr.bf16.gmra.mrb[0].mxu0 %v2709
        %v4598 = vpop.f32.mrb[0].mxu0
        %v4599 = vadd.f32 %v4406, %v4598
        %v4600 = vpop.f32.mrb[0].mxu0
        %v4601 = vadd.f32 %v4408, %v4600
        %v4602 = vpop.f32.mrb[0].mxu0
        %v4603 = vadd.f32 %v4410, %v4602
        %v4604 = vpop.f32.mrb[0].mxu0
        %v4605 = vadd.f32 %v4412, %v4604
        %4606 = vmatprep.mubr.bf16.mxu0 %v2714
        %4607 = vmatmul.mubr.bf16.gmra.mrb[0].mxu0 %v2713
        %v4608 = vpop.f32.mrb[0].mxu0
        %v4609 = vadd.f32 %v4416, %v4608
        %v4610 = vpop.f32.mrb[0].mxu0
        %v4611 = vadd.f32 %v4418, %v4610
        %v4612 = vpop.f32.mrb[0].mxu0
        %v4613 = vadd.f32 %v4420, %v4612
        %v4614 = vpop.f32.mrb[0].mxu0
        %v4615 = vadd.f32 %v4422, %v4614
        %4616 = vmatprep.mubr.bf16.mxu0 %v2718
        %4617 = vmatmul.mubr.bf16.gmra.mrb[0].mxu0 %v2717
        %v4618 = vpop.f32.mrb[0].mxu0
        %v4619 = vadd.f32 %v4426, %v4618
        %v4620 = vpop.f32.mrb[0].mxu0
        %v4621 = vadd.f32 %v4428, %v4620
        %v4622 = vpop.f32.mrb[0].mxu0
        %v4623 = vadd.f32 %v4430, %v4622
        %v4624 = vpop.f32.mrb[0].mxu0
        %v4625 = vadd.f32 %v4432, %v4624
        %4626 = vmatprep.mubr.bf16.mxu0 %v2722
        %4627 = vmatmul.mubr.bf16.gmra.mrb[0].mxu0 %v2721
        %v4628 = vpop.f32.mrb[0].mxu0
        %v4629 = vadd.f32 %v4436, %v4628
        %v4630 = vpop.f32.mrb[0].mxu0
        %v4631 = vadd.f32 %v4438, %v4630
        %v4632 = vpop.f32.mrb[0].mxu0
        %v4633 = vadd.f32 %v4440, %v4632
        %v4634 = vpop.f32.mrb[0].mxu0
        %v4635 = vadd.f32 %v4442, %v4634
        %4636 = vmatprep.mubr.bf16.mxu0 %v2726
        %4637 = vmatmul.mubr.bf16.gmra.mrb[0].mxu0 %v2725
        %v4638 = vpop.f32.mrb[0].mxu0
        %v4639 = vadd.f32 %v4446, %v4638
        %v4640 = vpop.f32.mrb[0].mxu0
        %v4641 = vadd.f32 %v4448, %v4640
        %v4642 = vpop.f32.mrb[0].mxu0
        %v4643 = vadd.f32 %v4450, %v4642
        %v4644 = vpop.f32.mrb[0].mxu0
        %v4645 = vadd.f32 %v4452, %v4644
        %4646 = vmatprep.mubr.bf16.mxu0 %v2730
        %4647 = vmatmul.mubr.bf16.gmra.mrb[0].mxu0 %v2729
        %v4648 = vpop.f32.mrb[0].mxu0
        %v4649 = vadd.f32 %v4456, %v4648
        %v4650 = vpop.f32.mrb[0].mxu0
        %v4651 = vadd.f32 %v4458, %v4650
        %v4652 = vpop.f32.mrb[0].mxu0
        %v4653 = vadd.f32 %v4460, %v4652
        %v4654 = vpop.f32.mrb[0].mxu0
        %v4655 = vadd.f32 %v4462, %v4654
        %4656 = vdwg.mxu0
        %v4657 = vmul.f32 %v4499, 2.0
        %v4658 = vmul.f32 %v4501, 2.0
        %v4659 = vmul.f32 %v4503, 2.0
        %v4660 = vmul.f32 %v4505, 2.0
        %v4661 = vmul.f32 %v4509, 2.0
        %v4662 = vmul.f32 %v4511, 2.0
        %v4663 = vmul.f32 %v4513, 2.0
        %v4664 = vmul.f32 %v4515, 2.0
        %v4665 = vmul.f32 %v4519, 2.0
        %v4666 = vmul.f32 %v4521, 2.0
        %v4667 = vmul.f32 %v4523, 2.0
        %v4668 = vmul.f32 %v4525, 2.0
        %v4669 = vmul.f32 %v4529, 2.0
        %v4670 = vmul.f32 %v4531, 2.0
        %v4671 = vmul.f32 %v4533, 2.0
        %v4672 = vmul.f32 %v4535, 2.0
        %v4673 = vmul.f32 %v4539, 2.0
        %v4674 = vmul.f32 %v4541, 2.0
        %v4675 = vmul.f32 %v4543, 2.0
        %v4676 = vmul.f32 %v4545, 2.0
        %v4677 = vmul.f32 %v4549, 2.0
        %v4678 = vmul.f32 %v4551, 2.0
        %v4679 = vmul.f32 %v4553, 2.0
        %v4680 = vmul.f32 %v4555, 2.0
        %v4681 = vmul.f32 %v4559, 2.0
        %v4682 = vmul.f32 %v4561, 2.0
        %v4683 = vmul.f32 %v4563, 2.0
        %v4684 = vmul.f32 %v4565, 2.0
        %v4685 = vmul.f32 %v4569, 2.0
        %v4686 = vmul.f32 %v4571, 2.0
        %v4687 = vmul.f32 %v4573, 2.0
        %v4688 = vmul.f32 %v4575, 2.0
        %v4689 = vmul.f32 %v4579, 2.0
        %v4690 = vmul.f32 %v4581, 2.0
        %v4691 = vmul.f32 %v4583, 2.0
        %v4692 = vmul.f32 %v4585, 2.0
        %v4693 = vmul.f32 %v4589, 2.0
        %v4694 = vmul.f32 %v4591, 2.0
        %v4695 = vmul.f32 %v4593, 2.0
        %v4696 = vmul.f32 %v4595, 2.0
        %v4697 = vmul.f32 %v4599, 2.0
        %v4698 = vmul.f32 %v4601, 2.0
        %v4699 = vmul.f32 %v4603, 2.0
        %v4700 = vmul.f32 %v4605, 2.0
        %v4701 = vmul.f32 %v4609, 2.0
        %v4702 = vmul.f32 %v4611, 2.0
        %v4703 = vmul.f32 %v4613, 2.0
        %v4704 = vmul.f32 %v4615, 2.0
        %v4705 = vmul.f32 %v4619, 2.0
        %v4706 = vmul.f32 %v4621, 2.0
        %v4707 = vmul.f32 %v4623, 2.0
        %v4708 = vmul.f32 %v4625, 2.0
        %v4709 = vmul.f32 %v4629, 2.0
        %v4710 = vmul.f32 %v4631, 2.0
        %v4711 = vmul.f32 %v4633, 2.0
        %v4712 = vmul.f32 %v4635, 2.0
        %v4713 = vmul.f32 %v4639, 2.0
        %v4714 = vmul.f32 %v4641, 2.0
        %v4715 = vmul.f32 %v4643, 2.0
        %v4716 = vmul.f32 %v4645, 2.0
        %v4717 = vmul.f32 %v4649, 2.0
        %v4718 = vmul.f32 %v4651, 2.0
        %v4719 = vmul.f32 %v4653, 2.0
        %v4720 = vmul.f32 %v4655, 2.0
        %v4721 = vmul.f32 %v4657, 1.442695
        %v4722 = vpow.pop %v4721
        %v4723 = vmul.f32 %v4658, 1.442695
        %v4724 = vpow.pop %v4723
        %v4725 = vmul.f32 %v4659, 1.442695
        %v4726 = vpow.pop %v4725
        %v4727 = vmul.f32 %v4660, 1.442695
        %v4728 = vpow.pop %v4727
        %v4729 = vmul.f32 %v4661, 1.442695
        %v4730 = vpow.pop %v4729
        %v4731 = vmul.f32 %v4662, 1.442695
        %v4732 = vpow.pop %v4731
        %v4733 = vmul.f32 %v4663, 1.442695
        %v4734 = vpow.pop %v4733
        %v4735 = vmul.f32 %v4664, 1.442695
        %v4736 = vpow.pop %v4735
        %v4737 = vmul.f32 %v4665, 1.442695
        %v4738 = vpow.pop %v4737
        %v4739 = vmul.f32 %v4666, 1.442695
        %v4740 = vpow.pop %v4739
        %v4741 = vmul.f32 %v4667, 1.442695
        %v4742 = vpow.pop %v4741
        %v4743 = vmul.f32 %v4668, 1.442695
        %v4744 = vpow.pop %v4743
        %v4745 = vmul.f32 %v4669, 1.442695
        %v4746 = vpow.pop %v4745
        %v4747 = vmul.f32 %v4670, 1.442695
        %v4748 = vpow.pop %v4747
        %v4749 = vmul.f32 %v4671, 1.442695
        %v4750 = vpow.pop %v4749
        %v4751 = vmul.f32 %v4672, 1.442695
        %v4752 = vpow.pop %v4751
        %v4753 = vmul.f32 %v4673, 1.442695
        %v4754 = vpow.pop %v4753
        %v4755 = vmul.f32 %v4674, 1.442695
        %v4756 = vpow.pop %v4755
        %v4757 = vmul.f32 %v4675, 1.442695
        %v4758 = vpow.pop %v4757
        %v4759 = vmul.f32 %v4676, 1.442695
        %v4760 = vpow.pop %v4759
        %v4761 = vmul.f32 %v4677, 1.442695
        %v4762 = vpow.pop %v4761
        %v4763 = vmul.f32 %v4678, 1.442695
        %v4764 = vpow.pop %v4763
        %v4765 = vmul.f32 %v4679, 1.442695
        %v4766 = vpow.pop %v4765
        %v4767 = vmul.f32 %v4680, 1.442695
        %v4768 = vpow.pop %v4767
        %v4769 = vmul.f32 %v4681, 1.442695
        %v4770 = vpow.pop %v4769
        %v4771 = vmul.f32 %v4682, 1.442695
        %v4772 = vpow.pop %v4771
        %v4773 = vmul.f32 %v4683, 1.442695
        %v4774 = vpow.pop %v4773
        %v4775 = vmul.f32 %v4684, 1.442695
        %v4776 = vpow.pop %v4775
        %v4777 = vmul.f32 %v4685, 1.442695
        %v4778 = vpow.pop %v4777
        %v4779 = vmul.f32 %v4686, 1.442695
        %v4780 = vpow.pop %v4779
        %v4781 = vmul.f32 %v4687, 1.442695
        %v4782 = vpow.pop %v4781
        %v4783 = vmul.f32 %v4688, 1.442695
        %v4784 = vpow.pop %v4783
        %v4785 = vmul.f32 %v4689, 1.442695
        %v4786 = vpow.pop %v4785
        %v4787 = vmul.f32 %v4690, 1.442695
        %v4788 = vpow.pop %v4787
        %v4789 = vmul.f32 %v4691, 1.442695
        %v4790 = vpow.pop %v4789
        %v4791 = vmul.f32 %v4692, 1.442695
        %v4792 = vpow.pop %v4791
        %v4793 = vmul.f32 %v4693, 1.442695
        %v4794 = vpow.pop %v4793
        %v4795 = vmul.f32 %v4694, 1.442695
        %v4796 = vpow.pop %v4795
        %v4797 = vmul.f32 %v4695, 1.442695
        %v4798 = vpow.pop %v4797
        %v4799 = vmul.f32 %v4696, 1.442695
        %v4800 = vpow.pop %v4799
        %v4801 = vmul.f32 %v4697, 1.442695
        %v4802 = vpow.pop %v4801
        %v4803 = vmul.f32 %v4698, 1.442695
        %v4804 = vpow.pop %v4803
        %v4805 = vmul.f32 %v4699, 1.442695
        %v4806 = vpow.pop %v4805
        %v4807 = vmul.f32 %v4700, 1.442695
        %v4808 = vpow.pop %v4807
        %v4809 = vmul.f32 %v4701, 1.442695
        %v4810 = vpow.pop %v4809
        %v4811 = vmul.f32 %v4702, 1.442695
        %v4812 = vpow.pop %v4811
        %v4813 = vmul.f32 %v4703, 1.442695
        %v4814 = vpow.pop %v4813
        %v4815 = vmul.f32 %v4704, 1.442695
        %v4816 = vpow.pop %v4815
        %v4817 = vmul.f32 %v4705, 1.442695
        %v4818 = vpow.pop %v4817
        %v4819 = vmul.f32 %v4706, 1.442695
        %v4820 = vpow.pop %v4819
        %v4821 = vmul.f32 %v4707, 1.442695
        %v4822 = vpow.pop %v4821
        %v4823 = vmul.f32 %v4708, 1.442695
        %v4824 = vpow.pop %v4823
        %v4825 = vmul.f32 %v4709, 1.442695
        %v4826 = vpow.pop %v4825
        %v4827 = vmul.f32 %v4710, 1.442695
        %v4828 = vpow.pop %v4827
        %v4829 = vmul.f32 %v4711, 1.442695
        %v4830 = vpow.pop %v4829
        %v4831 = vmul.f32 %v4712, 1.442695
        %v4832 = vpow.pop %v4831
        %v4833 = vmul.f32 %v4713, 1.442695
        %v4834 = vpow.pop %v4833
        %v4835 = vmul.f32 %v4714, 1.442695
        %v4836 = vpow.pop %v4835
        %v4837 = vmul.f32 %v4715, 1.442695
        %v4838 = vpow.pop %v4837
        %v4839 = vmul.f32 %v4716, 1.442695
        %v4840 = vpow.pop %v4839
        %v4841 = vmul.f32 %v4717, 1.442695
        %v4842 = vpow.pop %v4841
        %v4843 = vmul.f32 %v4718, 1.442695
        %v4844 = vpow.pop %v4843
        %v4845 = vmul.f32 %v4719, 1.442695
        %v4846 = vpow.pop %v4845
        %v4847 = vmul.f32 %v4720, 1.442695
        %v4848 = vpow.pop %v4847
        %v4849 = vadd.f32 %v2348, %v3246
        %v4850 = vadd.f32 %v2350, %v3248
        %v4851 = vadd.f32 %v2352, %v3250
        %v4852 = vadd.f32 %v2354, %v3252
        %v4853 = vadd.f32 %v2356, %v3254
        %v4854 = vadd.f32 %v2358, %v3256
        %v4855 = vadd.f32 %v2360, %v3258
        %v4856 = vadd.f32 %v2362, %v3260
        %v4857 = vadd.f32 %v2364, %v3262
        %v4858 = vadd.f32 %v2366, %v3264
        %v4859 = vadd.f32 %v2368, %v3266
        %v4860 = vadd.f32 %v2370, %v3268
        %v4861 = vadd.f32 %v2372, %v3270
        %v4862 = vadd.f32 %v2374, %v3272
        %v4863 = vadd.f32 %v2376, %v3274
        %v4864 = vadd.f32 %v2378, %v3276
        %v4865 = vadd.f32 %v2380, %v3278
        %v4866 = vadd.f32 %v2382, %v3280
        %v4867 = vadd.f32 %v2384, %v3282
        %v4868 = vadd.f32 %v2386, %v3284
        %v4869 = vadd.f32 %v2388, %v3286
        %v4870 = vadd.f32 %v2390, %v3288
        %v4871 = vadd.f32 %v2392, %v3290
        %v4872 = vadd.f32 %v2394, %v3292
        %v4873 = vadd.f32 %v2396, %v3294
        %v4874 = vadd.f32 %v2398, %v3296
        %v4875 = vadd.f32 %v2400, %v3298
        %v4876 = vadd.f32 %v2402, %v3300
        %v4877 = vadd.f32 %v2404, %v3302
        %v4878 = vadd.f32 %v2406, %v3304
        %v4879 = vadd.f32 %v2408, %v3306
        %v4880 = vadd.f32 %v2410, %v3308
        %v4881 = vadd.f32 %v2412, %v3310
        %v4882 = vadd.f32 %v2414, %v3312
        %v4883 = vadd.f32 %v2416, %v3314
        %v4884 = vadd.f32 %v2418, %v3316
        %v4885 = vadd.f32 %v2420, %v3318
        %v4886 = vadd.f32 %v2422, %v3320
        %v4887 = vadd.f32 %v2424, %v3322
        %v4888 = vadd.f32 %v2426, %v3324
        %v4889 = vadd.f32 %v2428, %v3326
        %v4890 = vadd.f32 %v2430, %v3328
        %v4891 = vadd.f32 %v2432, %v3330
        %v4892 = vadd.f32 %v2434, %v3332
        %v4893 = vadd.f32 %v2436, %v3334
        %v4894 = vadd.f32 %v2438, %v3336
        %v4895 = vadd.f32 %v2440, %v3338
        %v4896 = vadd.f32 %v2442, %v3340
        %v4897 = vadd.f32 %v2444, %v3342
        %v4898 = vadd.f32 %v2446, %v3344
        %v4899 = vadd.f32 %v2448, %v3346
        %v4900 = vadd.f32 %v2450, %v3348
        %v4901 = vadd.f32 %v2452, %v3350
        %v4902 = vadd.f32 %v2454, %v3352
        %v4903 = vadd.f32 %v2456, %v3354
        %v4904 = vadd.f32 %v2458, %v3356
        %v4905 = vadd.f32 %v2460, %v3358
        %v4906 = vadd.f32 %v2462, %v3360
        %v4907 = vadd.f32 %v2464, %v3362
        %v4908 = vadd.f32 %v2466, %v3364
        %v4909 = vadd.f32 %v2468, %v3366
        %v4910 = vadd.f32 %v2470, %v3368
        %v4911 = vadd.f32 %v2472, %v3370
        %v4912 = vadd.f32 %v2474, %v3372
        %v4913 = vadd.f32 %v4144, %v4722
        %v4914 = vadd.f32 %v4146, %v4724
        %v4915 = vadd.f32 %v4148, %v4726
        %v4916 = vadd.f32 %v4150, %v4728
        %v4917 = vadd.f32 %v4152, %v4730
        %v4918 = vadd.f32 %v4154, %v4732
        %v4919 = vadd.f32 %v4156, %v4734
        %v4920 = vadd.f32 %v4158, %v4736
        %v4921 = vadd.f32 %v4160, %v4738
        %v4922 = vadd.f32 %v4162, %v4740
        %v4923 = vadd.f32 %v4164, %v4742
        %v4924 = vadd.f32 %v4166, %v4744
        %v4925 = vadd.f32 %v4168, %v4746
        %v4926 = vadd.f32 %v4170, %v4748
        %v4927 = vadd.f32 %v4172, %v4750
        %v4928 = vadd.f32 %v4174, %v4752
        %v4929 = vadd.f32 %v4176, %v4754
        %v4930 = vadd.f32 %v4178, %v4756
        %v4931 = vadd.f32 %v4180, %v4758
        %v4932 = vadd.f32 %v4182, %v4760
        %v4933 = vadd.f32 %v4184, %v4762
        %v4934 = vadd.f32 %v4186, %v4764
        %v4935 = vadd.f32 %v4188, %v4766
        %v4936 = vadd.f32 %v4190, %v4768
        %v4937 = vadd.f32 %v4192, %v4770
        %v4938 = vadd.f32 %v4194, %v4772
        %v4939 = vadd.f32 %v4196, %v4774
        %v4940 = vadd.f32 %v4198, %v4776
        %v4941 = vadd.f32 %v4200, %v4778
        %v4942 = vadd.f32 %v4202, %v4780
        %v4943 = vadd.f32 %v4204, %v4782
        %v4944 = vadd.f32 %v4206, %v4784
        %v4945 = vadd.f32 %v4208, %v4786
        %v4946 = vadd.f32 %v4210, %v4788
        %v4947 = vadd.f32 %v4212, %v4790
        %v4948 = vadd.f32 %v4214, %v4792
        %v4949 = vadd.f32 %v4216, %v4794
        %v4950 = vadd.f32 %v4218, %v4796
        %v4951 = vadd.f32 %v4220, %v4798
        %v4952 = vadd.f32 %v4222, %v4800
        %v4953 = vadd.f32 %v4224, %v4802
        %v4954 = vadd.f32 %v4226, %v4804
        %v4955 = vadd.f32 %v4228, %v4806
        %v4956 = vadd.f32 %v4230, %v4808
        %v4957 = vadd.f32 %v4232, %v4810
        %v4958 = vadd.f32 %v4234, %v4812
        %v4959 = vadd.f32 %v4236, %v4814
        %v4960 = vadd.f32 %v4238, %v4816
        %v4961 = vadd.f32 %v4240, %v4818
        %v4962 = vadd.f32 %v4242, %v4820
        %v4963 = vadd.f32 %v4244, %v4822
        %v4964 = vadd.f32 %v4246, %v4824
        %v4965 = vadd.f32 %v4248, %v4826
        %v4966 = vadd.f32 %v4250, %v4828
        %v4967 = vadd.f32 %v4252, %v4830
        %v4968 = vadd.f32 %v4254, %v4832
        %v4969 = vadd.f32 %v4256, %v4834
        %v4970 = vadd.f32 %v4258, %v4836
        %v4971 = vadd.f32 %v4260, %v4838
        %v4972 = vadd.f32 %v4262, %v4840
        %v4973 = vadd.f32 %v4264, %v4842
        %v4974 = vadd.f32 %v4266, %v4844
        %v4975 = vadd.f32 %v4268, %v4846
        %v4976 = vadd.f32 %v4270, %v4848
        %p4977 = scmp.ne.s32.totalorder %s32, %s33
        // Predicated region
        $region41: #{tpu_custom_call.1} parent=27 // pred_check
          %p4978 = pneg %p4977
        $region42: #{tpu_custom_call.1} parent=27 // pred_check_branch
          %4980 = sbr.rel (%p4978) target = $region44
        $region43: #{tpu_custom_call.1} parent=27 // pred_region
          %v4981 = vld [vmem:[#allocation4] sm:$0x3]
          %v4982 = vadd.f32 %v4849, %v4851
          %v4983 = vadd.f32 %v4982, %v4853
          %v4984 = vadd.f32 %v4983, %v4855
          %v4985 = vadd.f32 %v4984, %v4857
          %v4986 = vadd.f32 %v4985, %v4859
          %v4987 = vadd.f32 %v4986, %v4861
          %v4988 = vadd.f32 %v4987, %v4863
          %v4989 = vadd.f32 %v4988, %v4865
          %v4990 = vadd.f32 %v4989, %v4867
          %v4991 = vadd.f32 %v4990, %v4869
          %v4992 = vadd.f32 %v4991, %v4871
          %v4993 = vadd.f32 %v4992, %v4873
          %v4994 = vadd.f32 %v4993, %v4875
          %v4995 = vadd.f32 %v4994, %v4877
          %v4996 = vadd.f32 %v4995, %v4879
          %v4997 = vadd.f32 %v4996, %v4881
          %v4998 = vadd.f32 %v4997, %v4883
          %v4999 = vadd.f32 %v4998, %v4885
          %v5000 = vadd.f32 %v4999, %v4887
          %v5001 = vadd.f32 %v5000, %v4889
          %v5002 = vadd.f32 %v5001, %v4891
          %v5003 = vadd.f32 %v5002, %v4893
          %v5004 = vadd.f32 %v5003, %v4895
          %v5005 = vadd.f32 %v5004, %v4897
          %v5006 = vadd.f32 %v5005, %v4899
          %v5007 = vadd.f32 %v5006, %v4901
          %v5008 = vadd.f32 %v5007, %v4903
          %v5009 = vadd.f32 %v5008, %v4905
          %v5010 = vadd.f32 %v5009, %v4907
          %v5011 = vadd.f32 %v5010, %v4909
          %v5012 = vadd.f32 %v5011, %v4911
          %v5013 = vrot.slane %v5012, 4
          %v5014 = vadd.f32 %v5012, %v5013
          %v5015 = vrot.slane %v5014, 2
          %v5016 = vadd.f32 %v5014, %v5015
          %v5017 = vrot.slane %v5016, 1
          %v5018 = vadd.f32 %v5016, %v5017
          %v5019 = vadd.f32 %v4850, %v4852
          %v5020 = vadd.f32 %v5019, %v4854
          %v5021 = vadd.f32 %v5020, %v4856
          %v5022 = vadd.f32 %v5021, %v4858
          %v5023 = vadd.f32 %v5022, %v4860
          %v5024 = vadd.f32 %v5023, %v4862
          %v5025 = vadd.f32 %v5024, %v4864
          %v5026 = vadd.f32 %v5025, %v4866
          %v5027 = vadd.f32 %v5026, %v4868
          %v5028 = vadd.f32 %v5027, %v4870
          %v5029 = vadd.f32 %v5028, %v4872
          %v5030 = vadd.f32 %v5029, %v4874
          %v5031 = vadd.f32 %v5030, %v4876
          %v5032 = vadd.f32 %v5031, %v4878
          %v5033 = vadd.f32 %v5032, %v4880
          %v5034 = vadd.f32 %v5033, %v4882
          %v5035 = vadd.f32 %v5034, %v4884
          %v5036 = vadd.f32 %v5035, %v4886
          %v5037 = vadd.f32 %v5036, %v4888
          %v5038 = vadd.f32 %v5037, %v4890
          %v5039 = vadd.f32 %v5038, %v4892
          %v5040 = vadd.f32 %v5039, %v4894
          %v5041 = vadd.f32 %v5040, %v4896
          %v5042 = vadd.f32 %v5041, %v4898
          %v5043 = vadd.f32 %v5042, %v4900
          %v5044 = vadd.f32 %v5043, %v4902
          %v5045 = vadd.f32 %v5044, %v4904
          %v5046 = vadd.f32 %v5045, %v4906
          %v5047 = vadd.f32 %v5046, %v4908
          %v5048 = vadd.f32 %v5047, %v4910
          %v5049 = vadd.f32 %v5048, %v4912
          %v5050 = vrot.slane %v5049, 4
          %v5051 = vadd.f32 %v5049, %v5050
          %v5052 = vrot.slane %v5051, 2
          %v5053 = vadd.f32 %v5051, %v5052
          %v5054 = vrot.slane %v5053, 1
          %v5055 = vadd.f32 %v5053, %v5054
          %v5058 = vcombine.low %v5018, %v5055
          %v5060 = vunpack.c.l.s4 1966171168
          %v5061 = vunpack.c.0.s8 %v5060
          %v5062 = vlaneseq
          %v5063 = vshrl.u32 %v5062, 7
          %v5064 = vsub.s32 %v5061, %v5063
          %v5065 = vrot.slane %v5058, %v5064
          %v5067 = vunpack.c.l.s4 1966171168
          %v5068 = vunpack.c.0.s8 %v5067
          %v5069 = vlaneseq
          %v5070 = vshrl.u32 %v5069, 7
          %v5071 = vsub.s32 %v5068, %v5070
          %v5072 = vrot.slane %v5065, %v5071
          %v5074 = vadd.f32 %v4981, %v5072
          %v5075 = vlaneseq
          %vm5076 = vcmp.ge.s32.totalorder %v5075, 0
          %vm5077 = vcmp.lt.s32.totalorder %v5075, 256
          %vm5078 = vmand %vm5076, %vm5077
          %5079 = vst.msk [vmem:[#allocation4] sm:$0x3] %vm5078, %v5074
          %v5080 = vld [vmem:[#allocation5] sm:$0x3]
          %v5081 = vadd.f32 %v4913, %v4915
          %v5082 = vadd.f32 %v5081, %v4917
          %v5083 = vadd.f32 %v5082, %v4919
          %v5084 = vadd.f32 %v5083, %v4921
          %v5085 = vadd.f32 %v5084, %v4923
          %v5086 = vadd.f32 %v5085, %v4925
          %v5087 = vadd.f32 %v5086, %v4927
          %v5088 = vadd.f32 %v5087, %v4929
          %v5089 = vadd.f32 %v5088, %v4931
          %v5090 = vadd.f32 %v5089, %v4933
          %v5091 = vadd.f32 %v5090, %v4935
          %v5092 = vadd.f32 %v5091, %v4937
          %v5093 = vadd.f32 %v5092, %v4939
          %v5094 = vadd.f32 %v5093, %v4941
          %v5095 = vadd.f32 %v5094, %v4943
          %v5096 = vadd.f32 %v5095, %v4945
          %v5097 = vadd.f32 %v5096, %v4947
          %v5098 = vadd.f32 %v5097, %v4949
          %v5099 = vadd.f32 %v5098, %v4951
          %v5100 = vadd.f32 %v5099, %v4953
          %v5101 = vadd.f32 %v5100, %v4955
          %v5102 = vadd.f32 %v5101, %v4957
          %v5103 = vadd.f32 %v5102, %v4959
          %v5104 = vadd.f32 %v5103, %v4961
          %v5105 = vadd.f32 %v5104, %v4963
          %v5106 = vadd.f32 %v5105, %v4965
          %v5107 = vadd.f32 %v5106, %v4967
          %v5108 = vadd.f32 %v5107, %v4969
          %v5109 = vadd.f32 %v5108, %v4971
          %v5110 = vadd.f32 %v5109, %v4973
          %v5111 = vadd.f32 %v5110, %v4975
          %v5112 = vrot.slane %v5111, 4
          %v5113 = vadd.f32 %v5111, %v5112
          %v5114 = vrot.slane %v5113, 2
          %v5115 = vadd.f32 %v5113, %v5114
          %v5116 = vrot.slane %v5115, 1
          %v5117 = vadd.f32 %v5115, %v5116
          %v5118 = vadd.f32 %v4914, %v4916
          %v5119 = vadd.f32 %v5118, %v4918
          %v5120 = vadd.f32 %v5119, %v4920
          %v5121 = vadd.f32 %v5120, %v4922
          %v5122 = vadd.f32 %v5121, %v4924
          %v5123 = vadd.f32 %v5122, %v4926
          %v5124 = vadd.f32 %v5123, %v4928
          %v5125 = vadd.f32 %v5124, %v4930
          %v5126 = vadd.f32 %v5125, %v4932
          %v5127 = vadd.f32 %v5126, %v4934
          %v5128 = vadd.f32 %v5127, %v4936
          %v5129 = vadd.f32 %v5128, %v4938
          %v5130 = vadd.f32 %v5129, %v4940
          %v5131 = vadd.f32 %v5130, %v4942
          %v5132 = vadd.f32 %v5131, %v4944
          %v5133 = vadd.f32 %v5132, %v4946
          %v5134 = vadd.f32 %v5133, %v4948
          %v5135 = vadd.f32 %v5134, %v4950
          %v5136 = vadd.f32 %v5135, %v4952
          %v5137 = vadd.f32 %v5136, %v4954
          %v5138 = vadd.f32 %v5137, %v4956
          %v5139 = vadd.f32 %v5138, %v4958
          %v5140 = vadd.f32 %v5139, %v4960
          %v5141 = vadd.f32 %v5140, %v4962
          %v5142 = vadd.f32 %v5141, %v4964
          %v5143 = vadd.f32 %v5142, %v4966
          %v5144 = vadd.f32 %v5143, %v4968
          %v5145 = vadd.f32 %v5144, %v4970
          %v5146 = vadd.f32 %v5145, %v4972
          %v5147 = vadd.f32 %v5146, %v4974
          %v5148 = vadd.f32 %v5147, %v4976
          %v5149 = vrot.slane %v5148, 4
          %v5150 = vadd.f32 %v5148, %v5149
          %v5151 = vrot.slane %v5150, 2
          %v5152 = vadd.f32 %v5150, %v5151
          %v5153 = vrot.slane %v5152, 1
          %v5154 = vadd.f32 %v5152, %v5153
          %v5157 = vcombine.low %v5117, %v5154
          %v5159 = vunpack.c.l.s4 1966171168
          %v5160 = vunpack.c.0.s8 %v5159
          %v5161 = vlaneseq
          %v5162 = vshrl.u32 %v5161, 7
          %v5163 = vsub.s32 %v5160, %v5162
          %v5164 = vrot.slane %v5157, %v5163
          %v5166 = vunpack.c.l.s4 1966171168
          %v5167 = vunpack.c.0.s8 %v5166
          %v5168 = vlaneseq
          %v5169 = vshrl.u32 %v5168, 7
          %v5170 = vsub.s32 %v5167, %v5169
          %v5171 = vrot.slane %v5164, %v5170
          %v5173 = vadd.f32 %v5080, %v5171
          %5174 = vst.msk [vmem:[#allocation5] sm:$0x3] %vm5078, %v5173
        $region44: #{tpu_custom_call.1} parent=27 // pred_fallthru
          _
        %p5175 = scmp.eq.s32.totalorder %s32, %s33
        // Predicated region
        $region45: #{tpu_custom_call.1} parent=27 // pred_check
          %p5176 = pneg %p5175
        $region46: #{tpu_custom_call.1} parent=27 // pred_check_branch
          %5178 = sbr.rel (%p5176) target = $region48
        $region47: #{tpu_custom_call.1} parent=27 // pred_region
          %v5179 = vlaneseq
          %v5180 = vshrl.u32 %v5179, 7
          %v5181 = vadd.s32 %v5180, 8
          %v5182 = vadd.s32 %v5180, 16
          %v5183 = vadd.s32 %v5180, 24
          %v5184 = vadd.s32 %v5180, 32
          %v5185 = vadd.s32 %v5180, 40
          %v5186 = vadd.s32 %v5180, 48
          %v5187 = vadd.s32 %v5180, 56
          %v5188 = vadd.s32 %v5180, 64
          %v5189 = vadd.s32 %v5180, 72
          %v5190 = vadd.s32 %v5180, 80
          %v5191 = vadd.s32 %v5180, 88
          %v5192 = vadd.s32 %v5180, 96
          %v5193 = vadd.s32 %v5180, 104
          %v5194 = vadd.s32 %v5180, 112
          %v5195 = vadd.s32 %v5180, 120
          %v5196 = vadd.s32 %v5180, 128
          %v5197 = vadd.s32 %v5180, 136
          %v5198 = vadd.s32 %v5180, 144
          %v5199 = vadd.s32 %v5180, 152
          %v5200 = vadd.s32 %v5180, 160
          %v5201 = vadd.s32 %v5180, 168
          %v5202 = vadd.s32 %v5180, 176
          %v5203 = vadd.s32 %v5180, 184
          %v5204 = vadd.s32 %v5180, 192
          %v5205 = vadd.s32 %v5180, 200
          %v5206 = vadd.s32 %v5180, 208
          %v5207 = vadd.s32 %v5180, 216
          %v5208 = vadd.s32 %v5180, 224
          %v5209 = vadd.s32 %v5180, 232
          %v5210 = vadd.s32 %v5180, 240
          %v5211 = vadd.s32 %v5180, 248
          %v5212 = vlaneseq
          %v5213 = vand.u32 %v5212, 127
          %v5214 = vadd.s32 %v5213, 128
          %vm5215 = vcmp.ne.s32.totalorder %v5180, %v5213
          %vm5216 = vcmp.ne.s32.totalorder %v5180, %v5214
          %vm5217 = vcmp.ne.s32.totalorder %v5181, %v5213
          %vm5218 = vcmp.ne.s32.totalorder %v5181, %v5214
          %vm5219 = vcmp.ne.s32.totalorder %v5182, %v5213
          %vm5220 = vcmp.ne.s32.totalorder %v5182, %v5214
          %vm5221 = vcmp.ne.s32.totalorder %v5183, %v5213
          %vm5222 = vcmp.ne.s32.totalorder %v5183, %v5214
          %vm5223 = vcmp.ne.s32.totalorder %v5184, %v5213
          %vm5224 = vcmp.ne.s32.totalorder %v5184, %v5214
          %vm5225 = vcmp.ne.s32.totalorder %v5185, %v5213
          %vm5226 = vcmp.ne.s32.totalorder %v5185, %v5214
          %vm5227 = vcmp.ne.s32.totalorder %v5186, %v5213
          %vm5228 = vcmp.ne.s32.totalorder %v5186, %v5214
          %vm5229 = vcmp.ne.s32.totalorder %v5187, %v5213
          %vm5230 = vcmp.ne.s32.totalorder %v5187, %v5214
          %vm5231 = vcmp.ne.s32.totalorder %v5188, %v5213
          %vm5232 = vcmp.ne.s32.totalorder %v5188, %v5214
          %vm5233 = vcmp.ne.s32.totalorder %v5189, %v5213
          %vm5234 = vcmp.ne.s32.totalorder %v5189, %v5214
          %vm5235 = vcmp.ne.s32.totalorder %v5190, %v5213
          %vm5236 = vcmp.ne.s32.totalorder %v5190, %v5214
          %vm5237 = vcmp.ne.s32.totalorder %v5191, %v5213
          %vm5238 = vcmp.ne.s32.totalorder %v5191, %v5214
          %vm5239 = vcmp.ne.s32.totalorder %v5192, %v5213
          %vm5240 = vcmp.ne.s32.totalorder %v5192, %v5214
          %vm5241 = vcmp.ne.s32.totalorder %v5193, %v5213
          %vm5242 = vcmp.ne.s32.totalorder %v5193, %v5214
          %vm5243 = vcmp.ne.s32.totalorder %v5194, %v5213
          %vm5244 = vcmp.ne.s32.totalorder %v5194, %v5214
          %vm5245 = vcmp.ne.s32.totalorder %v5195, %v5213
          %vm5246 = vcmp.ne.s32.totalorder %v5195, %v5214
          %vm5247 = vcmp.ne.s32.totalorder %v5196, %v5213
          %vm5248 = vcmp.ne.s32.totalorder %v5196, %v5214
          %vm5249 = vcmp.ne.s32.totalorder %v5197, %v5213
          %vm5250 = vcmp.ne.s32.totalorder %v5197, %v5214
          %vm5251 = vcmp.ne.s32.totalorder %v5198, %v5213
          %vm5252 = vcmp.ne.s32.totalorder %v5198, %v5214
          %vm5253 = vcmp.ne.s32.totalorder %v5199, %v5213
          %vm5254 = vcmp.ne.s32.totalorder %v5199, %v5214
          %vm5255 = vcmp.ne.s32.totalorder %v5200, %v5213
          %vm5256 = vcmp.ne.s32.totalorder %v5200, %v5214
          %vm5257 = vcmp.ne.s32.totalorder %v5201, %v5213
          %vm5258 = vcmp.ne.s32.totalorder %v5201, %v5214
          %vm5259 = vcmp.ne.s32.totalorder %v5202, %v5213
          %vm5260 = vcmp.ne.s32.totalorder %v5202, %v5214
          %vm5261 = vcmp.ne.s32.totalorder %v5203, %v5213
          %vm5262 = vcmp.ne.s32.totalorder %v5203, %v5214
          %vm5263 = vcmp.ne.s32.totalorder %v5204, %v5213
          %vm5264 = vcmp.ne.s32.totalorder %v5204, %v5214
          %vm5265 = vcmp.ne.s32.totalorder %v5205, %v5213
          %vm5266 = vcmp.ne.s32.totalorder %v5205, %v5214
          %vm5267 = vcmp.ne.s32.totalorder %v5206, %v5213
          %vm5268 = vcmp.ne.s32.totalorder %v5206, %v5214
          %vm5269 = vcmp.ne.s32.totalorder %v5207, %v5213
          %vm5270 = vcmp.ne.s32.totalorder %v5207, %v5214
          %vm5271 = vcmp.ne.s32.totalorder %v5208, %v5213
          %vm5272 = vcmp.ne.s32.totalorder %v5208, %v5214
          %vm5273 = vcmp.ne.s32.totalorder %v5209, %v5213
          %vm5274 = vcmp.ne.s32.totalorder %v5209, %v5214
          %vm5275 = vcmp.ne.s32.totalorder %v5210, %v5213
          %vm5276 = vcmp.ne.s32.totalorder %v5210, %v5214
          %vm5277 = vcmp.ne.s32.totalorder %v5211, %v5213
          %vm5278 = vcmp.ne.s32.totalorder %v5211, %v5214
          %v5279 = vld [vmem:[#allocation4] sm:$0x3]
          %v5280 = vsel %vm5215, %v4849, 0.0
          %v5281 = vsel %vm5216, %v4850, 0.0
          %v5282 = vsel %vm5217, %v4851, 0.0
          %v5283 = vsel %vm5218, %v4852, 0.0
          %v5284 = vsel %vm5219, %v4853, 0.0
          %v5285 = vsel %vm5220, %v4854, 0.0
          %v5286 = vsel %vm5221, %v4855, 0.0
          %v5287 = vsel %vm5222, %v4856, 0.0
          %v5288 = vsel %vm5223, %v4857, 0.0
          %v5289 = vsel %vm5224, %v4858, 0.0
          %v5290 = vsel %vm5225, %v4859, 0.0
          %v5291 = vsel %vm5226, %v4860, 0.0
          %v5292 = vsel %vm5227, %v4861, 0.0
          %v5293 = vsel %vm5228, %v4862, 0.0
          %v5294 = vsel %vm5229, %v4863, 0.0
          %v5295 = vsel %vm5230, %v4864, 0.0
          %v5296 = vsel %vm5231, %v4865, 0.0
          %v5297 = vsel %vm5232, %v4866, 0.0
          %v5298 = vsel %vm5233, %v4867, 0.0
          %v5299 = vsel %vm5234, %v4868, 0.0
          %v5300 = vsel %vm5235, %v4869, 0.0
          %v5301 = vsel %vm5236, %v4870, 0.0
          %v5302 = vsel %vm5237, %v4871, 0.0
          %v5303 = vsel %vm5238, %v4872, 0.0
          %v5304 = vsel %vm5239, %v4873, 0.0
          %v5305 = vsel %vm5240, %v4874, 0.0
          %v5306 = vsel %vm5241, %v4875, 0.0
          %v5307 = vsel %vm5242, %v4876, 0.0
          %v5308 = vsel %vm5243, %v4877, 0.0
          %v5309 = vsel %vm5244, %v4878, 0.0
          %v5310 = vsel %vm5245, %v4879, 0.0
          %v5311 = vsel %vm5246, %v4880, 0.0
          %v5312 = vsel %vm5247, %v4881, 0.0
          %v5313 = vsel %vm5248, %v4882, 0.0
          %v5314 = vsel %vm5249, %v4883, 0.0
          %v5315 = vsel %vm5250, %v4884, 0.0
          %v5316 = vsel %vm5251, %v4885, 0.0
          %v5317 = vsel %vm5252, %v4886, 0.0
          %v5318 = vsel %vm5253, %v4887, 0.0
          %v5319 = vsel %vm5254, %v4888, 0.0
          %v5320 = vsel %vm5255, %v4889, 0.0
          %v5321 = vsel %vm5256, %v4890, 0.0
          %v5322 = vsel %vm5257, %v4891, 0.0
          %v5323 = vsel %vm5258, %v4892, 0.0
          %v5324 = vsel %vm5259, %v4893, 0.0
          %v5325 = vsel %vm5260, %v4894, 0.0
          %v5326 = vsel %vm5261, %v4895, 0.0
          %v5327 = vsel %vm5262, %v4896, 0.0
          %v5328 = vsel %vm5263, %v4897, 0.0
          %v5329 = vsel %vm5264, %v4898, 0.0
          %v5330 = vsel %vm5265, %v4899, 0.0
          %v5331 = vsel %vm5266, %v4900, 0.0
          %v5332 = vsel %vm5267, %v4901, 0.0
          %v5333 = vsel %vm5268, %v4902, 0.0
          %v5334 = vsel %vm5269, %v4903, 0.0
          %v5335 = vsel %vm5270, %v4904, 0.0
          %v5336 = vsel %vm5271, %v4905, 0.0
          %v5337 = vsel %vm5272, %v4906, 0.0
          %v5338 = vsel %vm5273, %v4907, 0.0
          %v5339 = vsel %vm5274, %v4908, 0.0
          %v5340 = vsel %vm5275, %v4909, 0.0
          %v5341 = vsel %vm5276, %v4910, 0.0
          %v5342 = vsel %vm5277, %v4911, 0.0
          %v5343 = vsel %vm5278, %v4912, 0.0
          %v5344 = vadd.f32 %v5280, %v5282
          %v5345 = vadd.f32 %v5344, %v5284
          %v5346 = vadd.f32 %v5345, %v5286
          %v5347 = vadd.f32 %v5346, %v5288
          %v5348 = vadd.f32 %v5347, %v5290
          %v5349 = vadd.f32 %v5348, %v5292
          %v5350 = vadd.f32 %v5349, %v5294
          %v5351 = vadd.f32 %v5350, %v5296
          %v5352 = vadd.f32 %v5351, %v5298
          %v5353 = vadd.f32 %v5352, %v5300
          %v5354 = vadd.f32 %v5353, %v5302
          %v5355 = vadd.f32 %v5354, %v5304
          %v5356 = vadd.f32 %v5355, %v5306
          %v5357 = vadd.f32 %v5356, %v5308
          %v5358 = vadd.f32 %v5357, %v5310
          %v5359 = vadd.f32 %v5358, %v5312
          %v5360 = vadd.f32 %v5359, %v5314
          %v5361 = vadd.f32 %v5360, %v5316
          %v5362 = vadd.f32 %v5361, %v5318
          %v5363 = vadd.f32 %v5362, %v5320
          %v5364 = vadd.f32 %v5363, %v5322
          %v5365 = vadd.f32 %v5364, %v5324
          %v5366 = vadd.f32 %v5365, %v5326
          %v5367 = vadd.f32 %v5366, %v5328
          %v5368 = vadd.f32 %v5367, %v5330
          %v5369 = vadd.f32 %v5368, %v5332
          %v5370 = vadd.f32 %v5369, %v5334
          %v5371 = vadd.f32 %v5370, %v5336
          %v5372 = vadd.f32 %v5371, %v5338
          %v5373 = vadd.f32 %v5372, %v5340
          %v5374 = vadd.f32 %v5373, %v5342
          %v5375 = vrot.slane %v5374, 4
          %v5376 = vadd.f32 %v5374, %v5375
          %v5377 = vrot.slane %v5376, 2
          %v5378 = vadd.f32 %v5376, %v5377
          %v5379 = vrot.slane %v5378, 1
          %v5380 = vadd.f32 %v5378, %v5379
          %v5381 = vadd.f32 %v5281, %v5283
          %v5382 = vadd.f32 %v5381, %v5285
          %v5383 = vadd.f32 %v5382, %v5287
          %v5384 = vadd.f32 %v5383, %v5289
          %v5385 = vadd.f32 %v5384, %v5291
          %v5386 = vadd.f32 %v5385, %v5293
          %v5387 = vadd.f32 %v5386, %v5295
          %v5388 = vadd.f32 %v5387, %v5297
          %v5389 = vadd.f32 %v5388, %v5299
          %v5390 = vadd.f32 %v5389, %v5301
          %v5391 = vadd.f32 %v5390, %v5303
          %v5392 = vadd.f32 %v5391, %v5305
          %v5393 = vadd.f32 %v5392, %v5307
          %v5394 = vadd.f32 %v5393, %v5309
          %v5395 = vadd.f32 %v5394, %v5311
          %v5396 = vadd.f32 %v5395, %v5313
          %v5397 = vadd.f32 %v5396, %v5315
          %v5398 = vadd.f32 %v5397, %v5317
          %v5399 = vadd.f32 %v5398, %v5319
          %v5400 = vadd.f32 %v5399, %v5321
          %v5401 = vadd.f32 %v5400, %v5323
          %v5402 = vadd.f32 %v5401, %v5325
          %v5403 = vadd.f32 %v5402, %v5327
          %v5404 = vadd.f32 %v5403, %v5329
          %v5405 = vadd.f32 %v5404, %v5331
          %v5406 = vadd.f32 %v5405, %v5333
          %v5407 = vadd.f32 %v5406, %v5335
          %v5408 = vadd.f32 %v5407, %v5337
          %v5409 = vadd.f32 %v5408, %v5339
          %v5410 = vadd.f32 %v5409, %v5341
          %v5411 = vadd.f32 %v5410, %v5343
          %v5412 = vrot.slane %v5411, 4
          %v5413 = vadd.f32 %v5411, %v5412
          %v5414 = vrot.slane %v5413, 2
          %v5415 = vadd.f32 %v5413, %v5414
          %v5416 = vrot.slane %v5415, 1
          %v5417 = vadd.f32 %v5415, %v5416
          %v5420 = vcombine.low %v5380, %v5417
          %v5422 = vunpack.c.l.s4 1966171168
          %v5423 = vunpack.c.0.s8 %v5422
          %v5424 = vlaneseq
          %v5425 = vshrl.u32 %v5424, 7
          %v5426 = vsub.s32 %v5423, %v5425
          %v5427 = vrot.slane %v5420, %v5426
          %v5429 = vunpack.c.l.s4 1966171168
          %v5430 = vunpack.c.0.s8 %v5429
          %v5431 = vlaneseq
          %v5432 = vshrl.u32 %v5431, 7
          %v5433 = vsub.s32 %v5430, %v5432
          %v5434 = vrot.slane %v5427, %v5433
          %v5436 = vadd.f32 %v5279, %v5434
          %v5437 = vlaneseq
          %vm5438 = vcmp.ge.s32.totalorder %v5437, 0
          %vm5439 = vcmp.lt.s32.totalorder %v5437, 256
          %vm5440 = vmand %vm5438, %vm5439
          %5441 = vst.msk [vmem:[#allocation4] sm:$0x3] %vm5440, %v5436
          %v5442 = vld [vmem:[#allocation5] sm:$0x3]
          %v5443 = vsel %vm5215, %v4913, 0.0
          %v5444 = vsel %vm5216, %v4914, 0.0
          %v5445 = vsel %vm5217, %v4915, 0.0
          %v5446 = vsel %vm5218, %v4916, 0.0
          %v5447 = vsel %vm5219, %v4917, 0.0
          %v5448 = vsel %vm5220, %v4918, 0.0
          %v5449 = vsel %vm5221, %v4919, 0.0
          %v5450 = vsel %vm5222, %v4920, 0.0
          %v5451 = vsel %vm5223, %v4921, 0.0
          %v5452 = vsel %vm5224, %v4922, 0.0
          %v5453 = vsel %vm5225, %v4923, 0.0
          %v5454 = vsel %vm5226, %v4924, 0.0
          %v5455 = vsel %vm5227, %v4925, 0.0
          %v5456 = vsel %vm5228, %v4926, 0.0
          %v5457 = vsel %vm5229, %v4927, 0.0
          %v5458 = vsel %vm5230, %v4928, 0.0
          %v5459 = vsel %vm5231, %v4929, 0.0
          %v5460 = vsel %vm5232, %v4930, 0.0
          %v5461 = vsel %vm5233, %v4931, 0.0
          %v5462 = vsel %vm5234, %v4932, 0.0
          %v5463 = vsel %vm5235, %v4933, 0.0
          %v5464 = vsel %vm5236, %v4934, 0.0
          %v5465 = vsel %vm5237, %v4935, 0.0
          %v5466 = vsel %vm5238, %v4936, 0.0
          %v5467 = vsel %vm5239, %v4937, 0.0
          %v5468 = vsel %vm5240, %v4938, 0.0
          %v5469 = vsel %vm5241, %v4939, 0.0
          %v5470 = vsel %vm5242, %v4940, 0.0
          %v5471 = vsel %vm5243, %v4941, 0.0
          %v5472 = vsel %vm5244, %v4942, 0.0
          %v5473 = vsel %vm5245, %v4943, 0.0
          %v5474 = vsel %vm5246, %v4944, 0.0
          %v5475 = vsel %vm5247, %v4945, 0.0
          %v5476 = vsel %vm5248, %v4946, 0.0
          %v5477 = vsel %vm5249, %v4947, 0.0
          %v5478 = vsel %vm5250, %v4948, 0.0
          %v5479 = vsel %vm5251, %v4949, 0.0
          %v5480 = vsel %vm5252, %v4950, 0.0
          %v5481 = vsel %vm5253, %v4951, 0.0
          %v5482 = vsel %vm5254, %v4952, 0.0
          %v5483 = vsel %vm5255, %v4953, 0.0
          %v5484 = vsel %vm5256, %v4954, 0.0
          %v5485 = vsel %vm5257, %v4955, 0.0
          %v5486 = vsel %vm5258, %v4956, 0.0
          %v5487 = vsel %vm5259, %v4957, 0.0
          %v5488 = vsel %vm5260, %v4958, 0.0
          %v5489 = vsel %vm5261, %v4959, 0.0
          %v5490 = vsel %vm5262, %v4960, 0.0
          %v5491 = vsel %vm5263, %v4961, 0.0
          %v5492 = vsel %vm5264, %v4962, 0.0
          %v5493 = vsel %vm5265, %v4963, 0.0
          %v5494 = vsel %vm5266, %v4964, 0.0
          %v5495 = vsel %vm5267, %v4965, 0.0
          %v5496 = vsel %vm5268, %v4966, 0.0
          %v5497 = vsel %vm5269, %v4967, 0.0
          %v5498 = vsel %vm5270, %v4968, 0.0
          %v5499 = vsel %vm5271, %v4969, 0.0
          %v5500 = vsel %vm5272, %v4970, 0.0
          %v5501 = vsel %vm5273, %v4971, 0.0
          %v5502 = vsel %vm5274, %v4972, 0.0
          %v5503 = vsel %vm5275, %v4973, 0.0
          %v5504 = vsel %vm5276, %v4974, 0.0
          %v5505 = vsel %vm5277, %v4975, 0.0
          %v5506 = vsel %vm5278, %v4976, 0.0
          %v5507 = vadd.f32 %v5443, %v5445
          %v5508 = vadd.f32 %v5507, %v5447
          %v5509 = vadd.f32 %v5508, %v5449
          %v5510 = vadd.f32 %v5509, %v5451
          %v5511 = vadd.f32 %v5510, %v5453
          %v5512 = vadd.f32 %v5511, %v5455
          %v5513 = vadd.f32 %v5512, %v5457
          %v5514 = vadd.f32 %v5513, %v5459
          %v5515 = vadd.f32 %v5514, %v5461
          %v5516 = vadd.f32 %v5515, %v5463
          %v5517 = vadd.f32 %v5516, %v5465
          %v5518 = vadd.f32 %v5517, %v5467
          %v5519 = vadd.f32 %v5518, %v5469
          %v5520 = vadd.f32 %v5519, %v5471
          %v5521 = vadd.f32 %v5520, %v5473
          %v5522 = vadd.f32 %v5521, %v5475
          %v5523 = vadd.f32 %v5522, %v5477
          %v5524 = vadd.f32 %v5523, %v5479
          %v5525 = vadd.f32 %v5524, %v5481
          %v5526 = vadd.f32 %v5525, %v5483
          %v5527 = vadd.f32 %v5526, %v5485
          %v5528 = vadd.f32 %v5527, %v5487
          %v5529 = vadd.f32 %v5528, %v5489
          %v5530 = vadd.f32 %v5529, %v5491
          %v5531 = vadd.f32 %v5530, %v5493
          %v5532 = vadd.f32 %v5531, %v5495
          %v5533 = vadd.f32 %v5532, %v5497
          %v5534 = vadd.f32 %v5533, %v5499
          %v5535 = vadd.f32 %v5534, %v5501
          %v5536 = vadd.f32 %v5535, %v5503
          %v5537 = vadd.f32 %v5536, %v5505
          %v5538 = vrot.slane %v5537, 4
          %v5539 = vadd.f32 %v5537, %v5538
          %v5540 = vrot.slane %v5539, 2
          %v5541 = vadd.f32 %v5539, %v5540
          %v5542 = vrot.slane %v5541, 1
          %v5543 = vadd.f32 %v5541, %v5542
          %v5544 = vadd.f32 %v5444, %v5446
          %v5545 = vadd.f32 %v5544, %v5448
          %v5546 = vadd.f32 %v5545, %v5450
          %v5547 = vadd.f32 %v5546, %v5452
          %v5548 = vadd.f32 %v5547, %v5454
          %v5549 = vadd.f32 %v5548, %v5456
          %v5550 = vadd.f32 %v5549, %v5458
          %v5551 = vadd.f32 %v5550, %v5460
          %v5552 = vadd.f32 %v5551, %v5462
          %v5553 = vadd.f32 %v5552, %v5464
          %v5554 = vadd.f32 %v5553, %v5466
          %v5555 = vadd.f32 %v5554, %v5468
          %v5556 = vadd.f32 %v5555, %v5470
          %v5557 = vadd.f32 %v5556, %v5472
          %v5558 = vadd.f32 %v5557, %v5474
          %v5559 = vadd.f32 %v5558, %v5476
          %v5560 = vadd.f32 %v5559, %v5478
          %v5561 = vadd.f32 %v5560, %v5480
          %v5562 = vadd.f32 %v5561, %v5482
          %v5563 = vadd.f32 %v5562, %v5484
          %v5564 = vadd.f32 %v5563, %v5486
          %v5565 = vadd.f32 %v5564, %v5488
          %v5566 = vadd.f32 %v5565, %v5490
          %v5567 = vadd.f32 %v5566, %v5492
          %v5568 = vadd.f32 %v5567, %v5494
          %v5569 = vadd.f32 %v5568, %v5496
          %v5570 = vadd.f32 %v5569, %v5498
          %v5571 = vadd.f32 %v5570, %v5500
          %v5572 = vadd.f32 %v5571, %v5502
          %v5573 = vadd.f32 %v5572, %v5504
          %v5574 = vadd.f32 %v5573, %v5506
          %v5575 = vrot.slane %v5574, 4
          %v5576 = vadd.f32 %v5574, %v5575
          %v5577 = vrot.slane %v5576, 2
          %v5578 = vadd.f32 %v5576, %v5577
          %v5579 = vrot.slane %v5578, 1
          %v5580 = vadd.f32 %v5578, %v5579
          %v5583 = vcombine.low %v5543, %v5580
          %v5585 = vunpack.c.l.s4 1966171168
          %v5586 = vunpack.c.0.s8 %v5585
          %v5587 = vlaneseq
          %v5588 = vshrl.u32 %v5587, 7
          %v5589 = vsub.s32 %v5586, %v5588
          %v5590 = vrot.slane %v5583, %v5589
          %v5592 = vunpack.c.l.s4 1966171168
          %v5593 = vunpack.c.0.s8 %v5592
          %v5594 = vlaneseq
          %v5595 = vshrl.u32 %v5594, 7
          %v5596 = vsub.s32 %v5593, %v5595
          %v5597 = vrot.slane %v5590, %v5596
          %v5599 = vadd.f32 %v5442, %v5597
          %5600 = vst.msk [vmem:[#allocation5] sm:$0x3] %vm5440, %v5599
        $region48: #{tpu_custom_call.1} parent=27 // pred_fallthru
          _
        %p5601 = scmp.eq.s32.totalorder %s33, 1
        // Predicated region
        $region49: #{tpu_custom_call.1} parent=27 // pred_check
          %p5602 = pneg %p5601
        $region50: #{tpu_custom_call.1} parent=27 // pred_check_branch
          %5604 = sbr.rel (%p5602) target = $region52
        $region51: #{tpu_custom_call.1} parent=27 // pred_region
          %v5605 = vld [vmem:[#allocation2] sm:$0x3]
          %v5606 = vld [vmem:[#allocation3] sm:$0x3]
          %v5607 = vld [vmem:[#allocation4] sm:$0x3]
          %v5608 = vld [vmem:[#allocation5] sm:$0x3]
          %v5609 = vadd.f32 %v5605, %v5607
          %v5610 = vlog2.pop %v5609
          %v5611 = vmul.f32 %v5610, 0.6931472
          %v5612 = vsub.f32 %v5606, %v5611
          %v5613 = vadd.f32 %v5605, %v5608
          %v5614 = vlog2.pop %v5613
          %v5615 = vmul.f32 %v5614, 0.6931472
          %v5616 = vsub.f32 %v5606, %v5615
          %v5618 = vlaneseq
          %v5619 = vshrl.u32 %v5618, 7
          %v5620 = vsub.s32 0, %v5619
          %v5621 = vrot.slane %v5605, %v5620
          %v5622 = vlaneseq
          %v5623 = vshrl.u32 %v5622, 7
          %v5624 = vsub.s32 1, %v5623
          %v5625 = vrot.slane %v5605, %v5624
          %vm5628 = vcmask 1040384
          %v5631 = vcombine.low %v5621, %v5625
          %v5633 = vunpack.c.l.s4 1983009808
          %v5634 = vunpack.c.0.s8 %v5633
          %v5635 = vlaneseq
          %v5636 = vshrl.u32 %v5635, 7
          %v5637 = vsub.s32 %v5634, %v5636
          %v5638 = vrot.slane %v5631, %v5637
          %5640 = vst [vmem:[%s273] sm:$0xf] %v5638
          %v5642 = vlaneseq
          %v5643 = vshrl.u32 %v5642, 7
          %v5644 = vsub.s32 0, %v5643
          %v5645 = vrot.slane %v5607, %v5644
          %v5646 = vlaneseq
          %v5647 = vshrl.u32 %v5646, 7
          %v5648 = vsub.s32 1, %v5647
          %v5649 = vrot.slane %v5607, %v5648
          %v5653 = vlaneseq
          %v5654 = vshrl.u32 %v5653, 7
          %v5655 = vsub.s32 0, %v5654
          %v5656 = vrot.slane %v5608, %v5655
          %v5657 = vlaneseq
          %v5658 = vshrl.u32 %v5657, 7
          %v5659 = vsub.s32 1, %v5658
          %v5660 = vrot.slane %v5608, %v5659
          %v5663 = vsel %vm5628, %v5645, %v5656
          %v5664 = vsel %vm5628, %v5649, %v5660
          %v5667 = vcombine.low %v5663, %v5664
          %v5669 = vunpack.c.l.s4 1983009808
          %v5670 = vunpack.c.0.s8 %v5669
          %v5671 = vlaneseq
          %v5672 = vshrl.u32 %v5671, 7
          %v5673 = vsub.s32 %v5670, %v5672
          %v5674 = vrot.slane %v5667, %v5673
          %5676 = vst [vmem:[%s280] sm:$0xf] %v5674
          %v5678 = vlaneseq
          %v5679 = vshrl.u32 %v5678, 7
          %v5680 = vsub.s32 0, %v5679
          %v5681 = vrot.slane %v5612, %v5680
          %v5682 = vlaneseq
          %v5683 = vshrl.u32 %v5682, 7
          %v5684 = vsub.s32 1, %v5683
          %v5685 = vrot.slane %v5612, %v5684
          %v5689 = vlaneseq
          %v5690 = vshrl.u32 %v5689, 7
          %v5691 = vsub.s32 0, %v5690
          %v5692 = vrot.slane %v5616, %v5691
          %v5693 = vlaneseq
          %v5694 = vshrl.u32 %v5693, 7
          %v5695 = vsub.s32 1, %v5694
          %v5696 = vrot.slane %v5616, %v5695
          %v5699 = vsel %vm5628, %v5681, %v5692
          %v5700 = vsel %vm5628, %v5685, %v5696
          %v5703 = vcombine.low %v5699, %v5700
          %v5705 = vunpack.c.l.s4 1983009808
          %v5706 = vunpack.c.0.s8 %v5705
          %v5707 = vlaneseq
          %v5708 = vshrl.u32 %v5707, 7
          %v5709 = vsub.s32 %v5706, %v5708
          %v5710 = vrot.slane %v5703, %v5709
          %5712 = vst [vmem:[%s287] sm:$0xf] %v5710
        $region52: #{tpu_custom_call.1} parent=27 // pred_fallthru
          _
        %s5713 = sand.u32 %s100, 1
        %s5714 = scalar_lea.sflag [#allocation8], %s5713
        %s5715 = sand.u32 %s100, 1
        %s5716 = smul.addr %s5715, 4
        %s5717 = scalar_lea.vmem [#allocation11], %s5716
        %s5718 = sand.u32 %s28, 1
        %s5719 = scalar_lea.sflag [#allocation13], %s5718
        %s5720 = sand.u32 %s126, 1
        %s5721 = smul.addr %s5720, 4
        %s5722 = scalar_lea.vmem [#allocation12], %s5721
        %s5723 = sand.u32 %s28, 1
        %s5724 = scalar_lea.sflag [#allocation13], %s5723
        %s5725 = sand.u32 %s152, 1
        %s5726 = smul.addr %s5725, 4
        %s5727 = scalar_lea.vmem [#allocation14], %s5726
        // Predicated region
        $region53: #{tpu_custom_call.1} parent=27 // pred_check
          %p5728 = pneg %p110
        $region54: #{tpu_custom_call.1} parent=27 // pred_check_branch
          %5730 = sbr.rel (%p5728) target = $region56
        $region55: #{tpu_custom_call.1} parent=27 // pred_region
          %s5731 = smul.u32 2, %s32
          %s5733 = ssub.s32 64, 64
          %5734 = vsyncadd %s5714, %s5733
          %s5735 = smul.addr %s5731, 32
          %s5736 = scalar_lea.hbm %s2, %s5735
          %s5738 = sshll.u32 %s5717, 4
          %s5739 = int_to_ptr.vmem [resolvable:$true] %s5738
          %5741 = dma.vmem_to_hbm [thread:$0]  %s5739, 64, %s5736, %s5714
        $region56: #{tpu_custom_call.1} parent=27 // pred_fallthru
          _
        // Predicated region
        $region57: #{tpu_custom_call.1} parent=27 // pred_check
          %p5742 = pneg %p136
        $region58: #{tpu_custom_call.1} parent=27 // pred_check_branch
          %5744 = sbr.rel (%p5742) target = $region60
        $region59: #{tpu_custom_call.1} parent=27 // pred_region
          %s5745 = smul.u32 2, %s32
          %s5747 = ssub.s32 64, 64
          %5748 = vsyncadd %s5719, %s5747
          %s5749 = smul.addr %s5745, 32
          %s5750 = scalar_lea.hbm %s3, %s5749
          %s5752 = sshll.u32 %s5722, 4
          %s5753 = int_to_ptr.vmem [resolvable:$true] %s5752
          %5755 = dma.vmem_to_hbm [thread:$0]  %s5753, 64, %s5750, %s5719
        $region60: #{tpu_custom_call.1} parent=27 // pred_fallthru
          _
        // Predicated region
        $region61: #{tpu_custom_call.1} parent=27 // pred_check
          %p5756 = pneg %p162
        $region62: #{tpu_custom_call.1} parent=27 // pred_check_branch
          %5758 = sbr.rel (%p5756) target = $region64
        $region63: #{tpu_custom_call.1} parent=27 // pred_region
          %s5759 = smul.u32 2, %s32
          %s5761 = ssub.s32 64, 64
          %5762 = vsyncadd %s5724, %s5761
          %s5763 = smul.addr %s5759, 32
          %s5764 = scalar_lea.hbm %s4, %s5763
          %s5766 = sshll.u32 %s5727, 4
          %s5767 = int_to_ptr.vmem [resolvable:$true] %s5766
          %5769 = dma.vmem_to_hbm [thread:$0]  %s5767, 64, %s5764, %s5724
        $region64: #{tpu_custom_call.1} parent=27 // pred_fallthru
          _
      $region28: #{tpu_custom_call.1} parent=5 // pred_fallthru
        _
      %p5770 = scmp.le.s32.totalorder 2, %s23
      // Predicated region
      $region65: #{tpu_custom_call.1} parent=5 // pred_check
        %p5771 = pneg %p5770
      $region66: #{tpu_custom_call.1} parent=5 // pred_check_branch
        %5773 = sbr.rel (%p5771) target = $region68
      $region67: #{tpu_custom_call.1} parent=5 // pred_region
        %s5774 = ssub.s32 %s23, 2
        // Predicated region
        $region69: #{tpu_custom_call.1} parent=67 // pred_check
          %p5775 = pneg %p116
        $region70: #{tpu_custom_call.1} parent=67 // pred_check_branch
          %5777 = sbr.rel (%p5775) target = $region72
        $region71: #{tpu_custom_call.1} parent=67 // pred_region
          %s5778 = sand.u32 %s101, 1
          %s5779 = scalar_lea.sflag [#allocation8], %s5778
          %s5780 = sand.u32 %s101, 1
          %s5781 = smul.addr %s5780, 4
          %s5782 = scalar_lea.vmem [#allocation11], %s5781
          %5783 = dma.done %s5779, 64
        $region72: #{tpu_custom_call.1} parent=67 // pred_fallthru
          _
        // Predicated region
        $region73: #{tpu_custom_call.1} parent=67 // pred_check
          %p5784 = pneg %p142
        $region74: #{tpu_custom_call.1} parent=67 // pred_check_branch
          %5786 = sbr.rel (%p5784) target = $region76
        $region75: #{tpu_custom_call.1} parent=67 // pred_region
          %s5787 = sand.u32 %s29, 1
          %s5788 = scalar_lea.sflag [#allocation13], %s5787
          %s5789 = sand.u32 %s127, 1
          %s5790 = smul.addr %s5789, 4
          %s5791 = scalar_lea.vmem [#allocation12], %s5790
          %5792 = dma.done %s5788, 64
        $region76: #{tpu_custom_call.1} parent=67 // pred_fallthru
          _
        // Predicated region
        $region77: #{tpu_custom_call.1} parent=67 // pred_check
          %p5793 = pneg %p168
        $region78: #{tpu_custom_call.1} parent=67 // pred_check_branch
          %5795 = sbr.rel (%p5793) target = $region80
        $region79: #{tpu_custom_call.1} parent=67 // pred_region
          %s5796 = sand.u32 %s29, 1
          %s5797 = scalar_lea.sflag [#allocation13], %s5796
          %s5798 = sand.u32 %s153, 1
          %s5799 = smul.addr %s5798, 4
          %s5800 = scalar_lea.vmem [#allocation14], %s5799
          %5801 = dma.done %s5797, 64
        $region80: #{tpu_custom_call.1} parent=67 // pred_fallthru
          _
      $region68: #{tpu_custom_call.1} parent=5 // pred_fallthru
        _
    $region6: #{tpu_custom_call.1} parent=1 // loop_footer
      %s27 = sadd.s32 1, %s23
    $region7: #{tpu_custom_call.1} parent=1 // loop_footer_branch
      %22 = sbr.rel target = $region3
    $region8: #{tpu_custom_call.1} parent=1 // loop_exit
      _
    %5802 = vsyncpa [#allocation7], 1
    %s5803 = scalar_lea.sflag [#allocation7], 1
    %5804 = vsyncpa %s5803, 1
    %5805 = vsyncpa [#allocation10], 1
    %s5806 = scalar_lea.sflag [#allocation10], 1
    %5807 = vsyncpa %s5806, 1
    %5808 = vsyncpa [#allocation8], 1
    %s5809 = scalar_lea.sflag [#allocation8], 1
    %5810 = vsyncpa %s5809, 1
    %5811 = vsyncpa [#allocation13], 1
    %s5812 = scalar_lea.sflag [#allocation13], 1
    %5813 = vsyncpa %s5812, 1

</llo_original>
